<compile_context>
chip_gen: v7x
topology: tpu7x:2x2x1
jax: 0.10.0
libtpu: 0.0.40
codegen_flags: <defaults>
</compile_context>

<pallas_src>
import functools

import jax
import jax.numpy as jnp
from jax.experimental import pallas as pl
from jax.experimental.pallas import tpu as pltpu

IN_DIM = 28 * 28        # 784
H1 = 512
H2 = 256
LATENT = 32

IN_PAD = 896            # 7 * 128  (lane-dense padding of 784)
LATENT_PAD = 128        # lane-dense padding of 32


def _round_up(n, m):
    return (n + m - 1) // m * m


def _layer(h, w_ref, b_ref, relu):
    # MXU matmul: bf16 inputs, f32 accumulation; elementwise work stays f32.
    y = jnp.dot(h.astype(jnp.bfloat16), w_ref[...],
                preferred_element_type=jnp.float32)
    y = y + b_ref[...]
    if relu:
        y = jnp.maximum(y, 0.0)
    return y


def ae_kernel(x_ref,
              w1_ref, b1_ref, w2_ref, b2_ref, w3_ref, b3_ref,
              w4_ref, b4_ref, w5_ref, b5_ref, w6_ref, b6_ref,
              enc_ref, dec_ref):
    x = x_ref[...]                                    # [TB, IN_PAD] f32

    # encoder
    h = _layer(x, w1_ref, b1_ref, relu=True)          # [TB, 512]
    h = _layer(h, w2_ref, b2_ref, relu=True)          # [TB, 256]
    enc = _layer(h, w3_ref, b3_ref, relu=False)       # [TB, 128] (cols >=32 are exactly 0)
    enc_ref[...] = enc.astype(enc_ref.dtype)

    # decoder
    d = _layer(enc, w4_ref, b4_ref, relu=True)        # [TB, 256]
    d = _layer(d, w5_ref, b5_ref, relu=True)          # [TB, 512]
    dec = _layer(d, w6_ref, b6_ref, relu=False)       # [TB, IN_PAD]
    dec_ref[...] = dec.astype(dec_ref.dtype)


@functools.partial(jax.jit, static_argnames=("tb",))
def ae_forward(x, params, tb=256):
    """x: [B, 784] float32.  params: list of 6 (W[in,out] f32, b[1,out] f32) pairs.

    Returns (encoded [B, 32], decoded [B, 784]).
    """
    B = x.shape[0]
    TB = min(tb, _round_up(max(B, 1), 8))     # batch tile (>=8 sublanes)
    B_pad = _round_up(B, TB)

    # Pad batch rows and input features (zero padding is exact: padded weight
    # rows/cols and padded biases are zero).
    x_p = jnp.zeros((B_pad, IN_PAD), jnp.float32).at[:B, :IN_DIM].set(x)

    (w1, b1), (w2, b2), (w3, b3), (w4, b4), (w5, b5), (w6, b6) = params

    def padw(w, rows, cols):
        out = jnp.zeros((rows, cols), jnp.bfloat16)
        return out.at[:w.shape[0], :w.shape[1]].set(w.astype(jnp.bfloat16))

    def padb(b, cols):
        return jnp.zeros((1, cols), jnp.float32).at[:, :b.shape[1]].set(b)

    w1p, b1p = padw(w1, IN_PAD, H1), b1
    w2p, b2p = w2.astype(jnp.bfloat16), b2
    w3p, b3p = padw(w3, H2, LATENT_PAD), padb(b3, LATENT_PAD)
    w4p, b4p = padw(w4, LATENT_PAD, H2), b4
    w5p, b5p = w5.astype(jnp.bfloat16), b5
    w6p, b6p = padw(w6, H1, IN_PAD), padb(b6, IN_PAD)

    flat = [w1p, b1p, w2p, b2p, w3p, b3p, w4p, b4p, w5p, b5p, w6p, b6p]

    def resident(arr):
        # Full-array block + constant index_map: DMA'd once, resident in VMEM.
        return pl.BlockSpec(arr.shape, lambda i: (0, 0))

    grid = (B_pad // TB,)

    flops = 2 * B_pad * (IN_PAD * H1 + H1 * H2 + H2 * LATENT_PAD
                         + LATENT_PAD * H2 + H2 * H1 + H1 * IN_PAD)
    bytes_accessed = (sum(a.size * a.dtype.itemsize for a in flat)
                      + x_p.size * 4
                      + B_pad * LATENT_PAD * 4
                      + B_pad * IN_PAD * 4)

    enc_p, dec_p = pl.pallas_call(
        ae_kernel,
        out_shape=(
            jax.ShapeDtypeStruct((B_pad, LATENT_PAD), jnp.float32),
            jax.ShapeDtypeStruct((B_pad, IN_PAD), jnp.float32),
        ),
        grid=grid,
        in_specs=[pl.BlockSpec((TB, IN_PAD), lambda i: (i, 0))]
                 + [resident(a) for a in flat],
        out_specs=(
            pl.BlockSpec((TB, LATENT_PAD), lambda i: (i, 0)),
            pl.BlockSpec((TB, IN_PAD), lambda i: (i, 0)),
        ),
        compiler_params=pltpu.CompilerParams(
            dimension_semantics=("parallel",),
            vmem_limit_bytes=32 << 20,
        ),
        cost_estimate=pl.CostEstimate(
            flops=flops, transcendentals=0, bytes_accessed=bytes_accessed),
    )(x_p, *flat)

    return enc_p[:B, :LATENT], dec_p[:B, :IN_DIM]


def init_params(key):
    """Deterministic PyTorch-nn.Linear-style init (uniform +/- 1/sqrt(fan_in))."""
    dims = [(IN_DIM, H1), (H1, H2), (H2, LATENT),
            (LATENT, H2), (H2, H1), (H1, IN_DIM)]
    params = []
    for (fan_in, fan_out) in dims:
        key, kw, kb = jax.random.split(key, 3)
        bound = 1.0 / jnp.sqrt(fan_in)
        w = jax.random.uniform(kw, (fan_in, fan_out), jnp.float32, -bound, bound)
        b = jax.random.uniform(kb, (1, fan_out), jnp.float32, -bound, bound)
        params.append((w, b))
    return params


def ae_reference(x, params):
    h = x
    for i, (w, b) in enumerate(params[:3]):
        h = h @ w + b
        if i < 2:
            h = jnp.maximum(h, 0.0)
    enc = h
    d = enc
    for i, (w, b) in enumerate(params[3:]):
        d = d @ w + b
        if i < 2:
            d = jnp.maximum(d, 0.0)
    return enc, d


if __name__ == "__main__":
    key = jax.random.PRNGKey(0)
    kx, kp = jax.random.split(key)
    B = 8
    x = jax.random.normal(kx, (B, IN_DIM), jnp.float32)
    params = init_params(kp)

    enc, dec = jax.block_until_ready(ae_forward(x, params))

    enc_ref, dec_ref = ae_reference(x, params)
    assert enc.shape == (B, LATENT) and dec.shape == (B, IN_DIM)
    # bf16 weights with f32 accumulation -> loosened tolerance vs f32 reference.
    assert jnp.allclose(enc, enc_ref, atol=5e-2, rtol=5e-2)
    assert jnp.allclose(dec, dec_ref, atol=5e-2, rtol=5e-2)

    print("KERNEL_OK")
</pallas_src>

<mosaic_0001>
module attributes {stable_mosaic.version = 11 : i64} {
  func.func @ae_kernel(%arg0: i32, %arg1: memref<8x896xf32, #tpu.memory_space<vmem>>, %arg2: memref<896x512xbf16, #tpu.memory_space<vmem>>, %arg3: memref<1x512xf32, #tpu.memory_space<vmem>>, %arg4: memref<512x256xbf16, #tpu.memory_space<vmem>>, %arg5: memref<1x256xf32, #tpu.memory_space<vmem>>, %arg6: memref<256x128xbf16, #tpu.memory_space<vmem>>, %arg7: memref<1x128xf32, #tpu.memory_space<vmem>>, %arg8: memref<128x256xbf16, #tpu.memory_space<vmem>>, %arg9: memref<1x256xf32, #tpu.memory_space<vmem>>, %arg10: memref<256x512xbf16, #tpu.memory_space<vmem>>, %arg11: memref<1x512xf32, #tpu.memory_space<vmem>>, %arg12: memref<512x896xbf16, #tpu.memory_space<vmem>>, %arg13: memref<1x896xf32, #tpu.memory_space<vmem>>, %arg14: memref<8x128xf32, #tpu.memory_space<vmem>>, %arg15: memref<8x896xf32, #tpu.memory_space<vmem>>) attributes {dimension_semantics = [#tpu.dimension_semantics<parallel>], iteration_bounds = array<i64: 1>, scalar_prefetch = 0 : i64, scratch_operands = 0 : i64, tpu.core_type = #tpu.core_type<tc>, window_params = [{transform_indices = @transform_0, window_bounds = array<i64: 8, 896>}, {pipeline_mode = #tpu.pipeline_mode<synchronous>, transform_indices = @transform_1, window_bounds = array<i64: 896, 512>}, {pipeline_mode = #tpu.pipeline_mode<synchronous>, transform_indices = @transform_2, window_bounds = array<i64: 1, 512>}, {pipeline_mode = #tpu.pipeline_mode<synchronous>, transform_indices = @transform_3, window_bounds = array<i64: 512, 256>}, {pipeline_mode = #tpu.pipeline_mode<synchronous>, transform_indices = @transform_4, window_bounds = array<i64: 1, 256>}, {pipeline_mode = #tpu.pipeline_mode<synchronous>, transform_indices = @transform_5, window_bounds = array<i64: 256, 128>}, {pipeline_mode = #tpu.pipeline_mode<synchronous>, transform_indices = @transform_6, window_bounds = array<i64: 1, 128>}, {pipeline_mode = #tpu.pipeline_mode<synchronous>, transform_indices = @transform_7, window_bounds = array<i64: 128, 256>}, {pipeline_mode = #tpu.pipeline_mode<synchronous>, transform_indices = @transform_8, window_bounds = array<i64: 1, 256>}, {pipeline_mode = #tpu.pipeline_mode<synchronous>, transform_indices = @transform_9, window_bounds = array<i64: 256, 512>}, {pipeline_mode = #tpu.pipeline_mode<synchronous>, transform_indices = @transform_10, window_bounds = array<i64: 1, 512>}, {pipeline_mode = #tpu.pipeline_mode<synchronous>, transform_indices = @transform_11, window_bounds = array<i64: 512, 896>}, {pipeline_mode = #tpu.pipeline_mode<synchronous>, transform_indices = @transform_12, window_bounds = array<i64: 1, 896>}, {transform_indices = @transform_13, window_bounds = array<i64: 8, 128>}, {transform_indices = @transform_14, window_bounds = array<i64: 8, 896>}]} {
    %c0 = arith.constant 0 : index
    %c0_0 = arith.constant 0 : index
    %0 = vector.load %arg1[%c0, %c0_0] : memref<8x896xf32, #tpu.memory_space<vmem>>, vector<8x896xf32>
    %1 = arith.truncf %0 : vector<8x896xf32> to vector<8x896xbf16>
    %c0_1 = arith.constant 0 : index
    %c0_2 = arith.constant 0 : index
    %2 = vector.load %arg2[%c0_1, %c0_2] : memref<896x512xbf16, #tpu.memory_space<vmem>>, vector<896x512xbf16>
    %cst = arith.constant dense<0.000000e+00> : vector<8x512xf32>
    %3 = tpu.matmul %1, %2, %cst {dimension_numbers = #tpu.dot_dimension_numbers<[1], [0], [0], [1], [0, 0, 1, 1], [], []>} : vector<8x896xbf16>, vector<896x512xbf16>, vector<8x512xf32> -> vector<8x512xf32>
    %c0_3 = arith.constant 0 : index
    %c0_4 = arith.constant 0 : index
    %4 = vector.load %arg3[%c0_3, %c0_4] : memref<1x512xf32, #tpu.memory_space<vmem>>, vector<1x512xf32>
    %5 = vector.broadcast %4 : vector<1x512xf32> to vector<8x512xf32>
    %6 = arith.addf %3, %5 : vector<8x512xf32>
    %cst_5 = arith.constant 0.000000e+00 : f32
    %7 = vector.broadcast %cst_5 : f32 to vector<8x512xf32>
    %8 = arith.maximumf %6, %7 : vector<8x512xf32>
    %9 = arith.truncf %8 : vector<8x512xf32> to vector<8x512xbf16>
    %c0_6 = arith.constant 0 : index
    %c0_7 = arith.constant 0 : index
    %10 = vector.load %arg4[%c0_6, %c0_7] : memref<512x256xbf16, #tpu.memory_space<vmem>>, vector<512x256xbf16>
    %cst_8 = arith.constant dense<0.000000e+00> : vector<8x256xf32>
    %11 = tpu.matmul %9, %10, %cst_8 {dimension_numbers = #tpu.dot_dimension_numbers<[1], [0], [0], [1], [0, 0, 1, 1], [], []>} : vector<8x512xbf16>, vector<512x256xbf16>, vector<8x256xf32> -> vector<8x256xf32>
    %c0_9 = arith.constant 0 : index
    %c0_10 = arith.constant 0 : index
    %12 = vector.load %arg5[%c0_9, %c0_10] : memref<1x256xf32, #tpu.memory_space<vmem>>, vector<1x256xf32>
    %13 = vector.broadcast %12 : vector<1x256xf32> to vector<8x256xf32>
    %14 = arith.addf %11, %13 : vector<8x256xf32>
    %cst_11 = arith.constant 0.000000e+00 : f32
    %15 = vector.broadcast %cst_11 : f32 to vector<8x256xf32>
    %16 = arith.maximumf %14, %15 : vector<8x256xf32>
    %17 = arith.truncf %16 : vector<8x256xf32> to vector<8x256xbf16>
    %c0_12 = arith.constant 0 : index
    %c0_13 = arith.constant 0 : index
    %18 = vector.load %arg6[%c0_12, %c0_13] : memref<256x128xbf16, #tpu.memory_space<vmem>>, vector<256x128xbf16>
    %cst_14 = arith.constant dense<0.000000e+00> : vector<8x128xf32>
    %19 = tpu.matmul %17, %18, %cst_14 {dimension_numbers = #tpu.dot_dimension_numbers<[1], [0], [0], [1], [0, 0, 1, 1], [], []>} : vector<8x256xbf16>, vector<256x128xbf16>, vector<8x128xf32> -> vector<8x128xf32>
    %c0_15 = arith.constant 0 : index
    %c0_16 = arith.constant 0 : index
    %20 = vector.load %arg7[%c0_15, %c0_16] : memref<1x128xf32, #tpu.memory_space<vmem>>, vector<1x128xf32>
    %21 = vector.broadcast %20 : vector<1x128xf32> to vector<8x128xf32>
    %22 = arith.addf %19, %21 : vector<8x128xf32>
    %c0_17 = arith.constant 0 : index
    %c0_18 = arith.constant 0 : index
    %23 = vector.load %arg14[%c0_17, %c0_18] : memref<8x128xf32, #tpu.memory_space<vmem>>, vector<8x128xf32>
    tpu.vector_store %arg14[%c0_17, %c0_18], %22 {strides = array<i32>} : memref<8x128xf32, #tpu.memory_space<vmem>>, vector<8x128xf32>,
    %24 = arith.truncf %22 : vector<8x128xf32> to vector<8x128xbf16>
    %c0_19 = arith.constant 0 : index
    %c0_20 = arith.constant 0 : index
    %25 = vector.load %arg8[%c0_19, %c0_20] : memref<128x256xbf16, #tpu.memory_space<vmem>>, vector<128x256xbf16>
    %cst_21 = arith.constant dense<0.000000e+00> : vector<8x256xf32>
    %26 = tpu.matmul %24, %25, %cst_21 {dimension_numbers = #tpu.dot_dimension_numbers<[1], [0], [0], [1], [0, 0, 1, 1], [], []>} : vector<8x128xbf16>, vector<128x256xbf16>, vector<8x256xf32> -> vector<8x256xf32>
    %c0_22 = arith.constant 0 : index
    %c0_23 = arith.constant 0 : index
    %27 = vector.load %arg9[%c0_22, %c0_23] : memref<1x256xf32, #tpu.memory_space<vmem>>, vector<1x256xf32>
    %28 = vector.broadcast %27 : vector<1x256xf32> to vector<8x256xf32>
    %29 = arith.addf %26, %28 : vector<8x256xf32>
    %cst_24 = arith.constant 0.000000e+00 : f32
    %30 = vector.broadcast %cst_24 : f32 to vector<8x256xf32>
    %31 = arith.maximumf %29, %30 : vector<8x256xf32>
    %32 = arith.truncf %31 : vector<8x256xf32> to vector<8x256xbf16>
    %c0_25 = arith.constant 0 : index
    %c0_26 = arith.constant 0 : index
    %33 = vector.load %arg10[%c0_25, %c0_26] : memref<256x512xbf16, #tpu.memory_space<vmem>>, vector<256x512xbf16>
    %cst_27 = arith.constant dense<0.000000e+00> : vector<8x512xf32>
    %34 = tpu.matmul %32, %33, %cst_27 {dimension_numbers = #tpu.dot_dimension_numbers<[1], [0], [0], [1], [0, 0, 1, 1], [], []>} : vector<8x256xbf16>, vector<256x512xbf16>, vector<8x512xf32> -> vector<8x512xf32>
    %c0_28 = arith.constant 0 : index
    %c0_29 = arith.constant 0 : index
    %35 = vector.load %arg11[%c0_28, %c0_29] : memref<1x512xf32, #tpu.memory_space<vmem>>, vector<1x512xf32>
    %36 = vector.broadcast %35 : vector<1x512xf32> to vector<8x512xf32>
    %37 = arith.addf %34, %36 : vector<8x512xf32>
    %cst_30 = arith.constant 0.000000e+00 : f32
    %38 = vector.broadcast %cst_30 : f32 to vector<8x512xf32>
    %39 = arith.maximumf %37, %38 : vector<8x512xf32>
    %40 = arith.truncf %39 : vector<8x512xf32> to vector<8x512xbf16>
    %c0_31 = arith.constant 0 : index
    %c0_32 = arith.constant 0 : index
    %41 = vector.load %arg12[%c0_31, %c0_32] : memref<512x896xbf16, #tpu.memory_space<vmem>>, vector<512x896xbf16>
    %cst_33 = arith.constant dense<0.000000e+00> : vector<8x896xf32>
    %42 = tpu.matmul %40, %41, %cst_33 {dimension_numbers = #tpu.dot_dimension_numbers<[1], [0], [0], [1], [0, 0, 1, 1], [], []>} : vector<8x512xbf16>, vector<512x896xbf16>, vector<8x896xf32> -> vector<8x896xf32>
    %c0_34 = arith.constant 0 : index
    %c0_35 = arith.constant 0 : index
    %43 = vector.load %arg13[%c0_34, %c0_35] : memref<1x896xf32, #tpu.memory_space<vmem>>, vector<1x896xf32>
    %44 = vector.broadcast %43 : vector<1x896xf32> to vector<8x896xf32>
    %45 = arith.addf %42, %44 : vector<8x896xf32>
    %c0_36 = arith.constant 0 : index
    %c0_37 = arith.constant 0 : index
    %46 = vector.load %arg15[%c0_36, %c0_37] : memref<8x896xf32, #tpu.memory_space<vmem>>, vector<8x896xf32>
    tpu.vector_store %arg15[%c0_36, %c0_37], %45 {strides = array<i32>} : memref<8x896xf32, #tpu.memory_space<vmem>>, vector<8x896xf32>,
    return
  }
  func.func @transform_0(%arg0: i32) -> (i32, i32) {
    %c0_i32 = arith.constant 0 : i32
    %c0_i32_0 = arith.constant 0 : i32
    return %arg0, %c0_i32 : i32, i32
  }
  func.func @transform_1(%arg0: i32) -> (i32, i32) {
    %c0_i32 = arith.constant 0 : i32
    %c0_i32_0 = arith.constant 0 : i32
    %c0_i32_1 = arith.constant 0 : i32
    return %c0_i32, %c0_i32_0 : i32, i32
  }
  func.func @transform_2(%arg0: i32) -> (i32, i32) {
    %c0_i32 = arith.constant 0 : i32
    %c0_i32_0 = arith.constant 0 : i32
    %c0_i32_1 = arith.constant 0 : i32
    return %c0_i32, %c0_i32_0 : i32, i32
  }
  func.func @transform_3(%arg0: i32) -> (i32, i32) {
    %c0_i32 = arith.constant 0 : i32
    %c0_i32_0 = arith.constant 0 : i32
    %c0_i32_1 = arith.constant 0 : i32
    return %c0_i32, %c0_i32_0 : i32, i32
  }
  func.func @transform_4(%arg0: i32) -> (i32, i32) {
    %c0_i32 = arith.constant 0 : i32
    %c0_i32_0 = arith.constant 0 : i32
    %c0_i32_1 = arith.constant 0 : i32
    return %c0_i32, %c0_i32_0 : i32, i32
  }
  func.func @transform_5(%arg0: i32) -> (i32, i32) {
    %c0_i32 = arith.constant 0 : i32
    %c0_i32_0 = arith.constant 0 : i32
    %c0_i32_1 = arith.constant 0 : i32
    return %c0_i32, %c0_i32_0 : i32, i32
  }
  func.func @transform_6(%arg0: i32) -> (i32, i32) {
    %c0_i32 = arith.constant 0 : i32
    %c0_i32_0 = arith.constant 0 : i32
    %c0_i32_1 = arith.constant 0 : i32
    return %c0_i32, %c0_i32_0 : i32, i32
  }
  func.func @transform_7(%arg0: i32) -> (i32, i32) {
    %c0_i32 = arith.constant 0 : i32
    %c0_i32_0 = arith.constant 0 : i32
    %c0_i32_1 = arith.constant 0 : i32
    return %c0_i32, %c0_i32_0 : i32, i32
  }
  func.func @transform_8(%arg0: i32) -> (i32, i32) {
    %c0_i32 = arith.constant 0 : i32
    %c0_i32_0 = arith.constant 0 : i32
    %c0_i32_1 = arith.constant 0 : i32
    return %c0_i32, %c0_i32_0 : i32, i32
  }
  func.func @transform_9(%arg0: i32) -> (i32, i32) {
    %c0_i32 = arith.constant 0 : i32
    %c0_i32_0 = arith.constant 0 : i32
    %c0_i32_1 = arith.constant 0 : i32
    return %c0_i32, %c0_i32_0 : i32, i32
  }
  func.func @transform_10(%arg0: i32) -> (i32, i32) {
    %c0_i32 = arith.constant 0 : i32
    %c0_i32_0 = arith.constant 0 : i32
    %c0_i32_1 = arith.constant 0 : i32
    return %c0_i32, %c0_i32_0 : i32, i32
  }
  func.func @transform_11(%arg0: i32) -> (i32, i32) {
    %c0_i32 = arith.constant 0 : i32
    %c0_i32_0 = arith.constant 0 : i32
    %c0_i32_1 = arith.constant 0 : i32
    return %c0_i32, %c0_i32_0 : i32, i32
  }
  func.func @transform_12(%arg0: i32) -> (i32, i32) {
    %c0_i32 = arith.constant 0 : i32
    %c0_i32_0 = arith.constant 0 : i32
    %c0_i32_1 = arith.constant 0 : i32
    return %c0_i32, %c0_i32_0 : i32, i32
  }
  func.func @transform_13(%arg0: i32) -> (i32, i32) {
    %c0_i32 = arith.constant 0 : i32
    %c0_i32_0 = arith.constant 0 : i32
    return %arg0, %c0_i32 : i32, i32
  }
  func.func @transform_14(%arg0: i32) -> (i32, i32) {
    %c0_i32 = arith.constant 0 : i32
    %c0_i32_0 = arith.constant 0 : i32
    return %arg0, %c0_i32 : i32, i32
  }
}

</mosaic_0001>

<llo_original>
// kernel: ae_forward.1
$region0: #{ae_forward.1}
  #allocation0 [shape = 'u32[]', space=smem, size = 0x4, offset = 0x4, fixed_abs, tag = 'smem constant byte address 0x4 - core index']
  #allocation1 [shape = 'u32[144,128]{1,0:T(1,128)}', space=vmem, size = 0x12000, scoped, tag = 'internal scratch']
  %s0 = inlined_call_operand.vmem [shape: f32[8,896], index: 0, kind: input, shape index: {}]
  %s1 = inlined_call_operand.vmem [shape: bf16[896,512], index: 1, kind: input, shape index: {}]
  %s2 = inlined_call_operand.vmem [shape: f32[1,512], index: 2, kind: input, shape index: {}]
  %s3 = inlined_call_operand.vmem [shape: bf16[512,256], index: 3, kind: input, shape index: {}]
  %s4 = inlined_call_operand.vmem [shape: f32[1,256], index: 4, kind: input, shape index: {}]
  %s5 = inlined_call_operand.vmem [shape: bf16[256,128], index: 5, kind: input, shape index: {}]
  %s6 = inlined_call_operand.vmem [shape: f32[1,128], index: 6, kind: input, shape index: {}]
  %s7 = inlined_call_operand.vmem [shape: bf16[128,256], index: 7, kind: input, shape index: {}]
  %s8 = inlined_call_operand.vmem [shape: f32[1,256], index: 8, kind: input, shape index: {}]
  %s9 = inlined_call_operand.vmem [shape: bf16[256,512], index: 9, kind: input, shape index: {}]
  %s10 = inlined_call_operand.vmem [shape: f32[1,512], index: 10, kind: input, shape index: {}]
  %s11 = inlined_call_operand.vmem [shape: bf16[512,896], index: 11, kind: input, shape index: {}]
  %s12 = inlined_call_operand.vmem [shape: f32[1,896], index: 12, kind: input, shape index: {}]
  %s13 = inlined_call_operand.hbm [shape: f32[8,128], index: 13, kind: output, shape index: {0}]
  %s14 = inlined_call_operand.hbm [shape: f32[8,896], index: 14, kind: output, shape index: {1}]
  %15 = xla_tuple %s13, %s14
  %s16 = sld [smem:[#allocation0]]
  $region70: #{ae_forward.1} parent=0
    _
  %s18 = ssub.s32 1, %s16
  %s19 = scalar_select 0, %s18, %s16
  $region1: #{ae_forward.1} parent=0
    #allocation2 [shape = 'u8[4096]{0}', space=vmem, size = 0x1000, scoped, tag = 'output window, operand 0, single buffered']
    #allocation3 [shape = 's32[1]{0}', space=sflag, size = 0x4, scoped, tag = 'scoped memory for ae_forward.1']
    #allocation4 [shape = 'u8[28672]{0}', space=vmem, size = 0x7000, scoped, tag = 'output window, operand 1, single buffered']
    #allocation5 [shape = 's32[1]{0}', space=sflag, size = 0x4, scoped, tag = 'scoped memory for ae_forward.1']
    %20 = vsyncpa [#allocation3], 0
    %21 = vsyncpa [#allocation5], 0
    // Predicated region
    $region2: #{ae_forward.1} parent=1 // pred_check
      _
    $region3: #{ae_forward.1} parent=1 // pred_check_branch
      %23 = sbr.rel (0) target = $region5
    $region4: #{ae_forward.1} parent=1 // pred_region
      _
    $region5: #{ae_forward.1} parent=1 // pred_fallthru
      _
    // Predicated region
    $region6: #{ae_forward.1} parent=1 // pred_check
      _
    $region7: #{ae_forward.1} parent=1 // pred_check_branch
      %25 = sbr.rel (0) target = $region9
    $region8: #{ae_forward.1} parent=1 // pred_region
      _
    $region9: #{ae_forward.1} parent=1 // pred_fallthru
      _
    // Predicated region
    $region10: #{ae_forward.1} parent=1 // pred_check
      _
    $region11: #{ae_forward.1} parent=1 // pred_check_branch
      %27 = sbr.rel (0) target = $region13
    $region12: #{ae_forward.1} parent=1 // pred_region
      _
    $region13: #{ae_forward.1} parent=1 // pred_fallthru
      _
    // Predicated region
    $region14: #{ae_forward.1} parent=1 // pred_check
      _
    $region15: #{ae_forward.1} parent=1 // pred_check_branch
      %29 = sbr.rel (0) target = $region17
    $region16: #{ae_forward.1} parent=1 // pred_region
      _
    $region17: #{ae_forward.1} parent=1 // pred_fallthru
      _
    // Predicated region
    $region18: #{ae_forward.1} parent=1 // pred_check
      _
    $region19: #{ae_forward.1} parent=1 // pred_check_branch
      %31 = sbr.rel (0) target = $region21
    $region20: #{ae_forward.1} parent=1 // pred_region
      _
    $region21: #{ae_forward.1} parent=1 // pred_fallthru
      _
    // Predicated region
    $region22: #{ae_forward.1} parent=1 // pred_check
      _
    $region23: #{ae_forward.1} parent=1 // pred_check_branch
      %33 = sbr.rel (0) target = $region25
    $region24: #{ae_forward.1} parent=1 // pred_region
      _
    $region25: #{ae_forward.1} parent=1 // pred_fallthru
      _
    // Predicated region
    $region26: #{ae_forward.1} parent=1 // pred_check
      _
    $region27: #{ae_forward.1} parent=1 // pred_check_branch
      %35 = sbr.rel (0) target = $region29
    $region28: #{ae_forward.1} parent=1 // pred_region
      _
    $region29: #{ae_forward.1} parent=1 // pred_fallthru
      _
    // Predicated region
    $region30: #{ae_forward.1} parent=1 // pred_check
      _
    $region31: #{ae_forward.1} parent=1 // pred_check_branch
      %37 = sbr.rel (0) target = $region33
    $region32: #{ae_forward.1} parent=1 // pred_region
      _
    $region33: #{ae_forward.1} parent=1 // pred_fallthru
      _
    // Predicated region
    $region34: #{ae_forward.1} parent=1 // pred_check
      _
    $region35: #{ae_forward.1} parent=1 // pred_check_branch
      %39 = sbr.rel (0) target = $region37
    $region36: #{ae_forward.1} parent=1 // pred_region
      _
    $region37: #{ae_forward.1} parent=1 // pred_fallthru
      _
    // Predicated region
    $region38: #{ae_forward.1} parent=1 // pred_check
      _
    $region39: #{ae_forward.1} parent=1 // pred_check_branch
      %41 = sbr.rel (0) target = $region41
    $region40: #{ae_forward.1} parent=1 // pred_region
      _
    $region41: #{ae_forward.1} parent=1 // pred_fallthru
      _
    // Predicated region
    $region42: #{ae_forward.1} parent=1 // pred_check
      _
    $region43: #{ae_forward.1} parent=1 // pred_check_branch
      %43 = sbr.rel (0) target = $region45
    $region44: #{ae_forward.1} parent=1 // pred_region
      _
    $region45: #{ae_forward.1} parent=1 // pred_fallthru
      _
    // Predicated region
    $region46: #{ae_forward.1} parent=1 // pred_check
      _
    $region47: #{ae_forward.1} parent=1 // pred_check_branch
      %45 = sbr.rel (0) target = $region49
    $region48: #{ae_forward.1} parent=1 // pred_region
      _
    $region49: #{ae_forward.1} parent=1 // pred_fallthru
      _
    // Predicated region
    $region50: #{ae_forward.1} parent=1 // pred_check
      _
    $region51: #{ae_forward.1} parent=1 // pred_check_branch
      %47 = sbr.rel (0) target = $region53
    $region52: #{ae_forward.1} parent=1 // pred_region
      _
    $region53: #{ae_forward.1} parent=1 // pred_fallthru
      _
    %v49 = vld [vmem:[%s0] sm:$0xff]
    %v50 = vld [vmem:[%s0 + $0x8] sm:$0xff]
    %v51 = vld [vmem:[%s0 + $0x10] sm:$0xff]
    %v52 = vld [vmem:[%s0 + $0x18] sm:$0xff]
    %v53 = vld [vmem:[%s0 + $0x20] sm:$0xff]
    %v54 = vld [vmem:[%s0 + $0x28] sm:$0xff]
    %v55 = vld [vmem:[%s0 + $0x30] sm:$0xff]
    %v56 = vpack.c.bf16 %v49, %v49
    %v57 = vpack.c.bf16 %v50, %v50
    %v58 = vpack.c.bf16 %v51, %v51
    %v59 = vpack.c.bf16 %v52, %v52
    %v60 = vpack.c.bf16 %v53, %v53
    %v61 = vpack.c.bf16 %v54, %v54
    %v62 = vpack.c.bf16 %v55, %v55
    %v63 = vld [vmem:[%s1] sm:$0xff]
    %v64 = vld [vmem:[%s1 + $0x8] sm:$0xff]
    %v65 = vld [vmem:[%s1 + $0x10] sm:$0xff]
    %v66 = vld [vmem:[%s1 + $0x18] sm:$0xff]
    %v67 = vld [vmem:[%s1 + $0x20] sm:$0xff]
    %v68 = vld [vmem:[%s1 + $0x28] sm:$0xff]
    %v69 = vld [vmem:[%s1 + $0x30] sm:$0xff]
    %v70 = vld [vmem:[%s1 + $0x38] sm:$0xff]
    %v71 = vld [vmem:[%s1 + $0x40] sm:$0xff]
    %v72 = vld [vmem:[%s1 + $0x48] sm:$0xff]
    %v73 = vld [vmem:[%s1 + $0x50] sm:$0xff]
    %v74 = vld [vmem:[%s1 + $0x58] sm:$0xff]
    %v75 = vld [vmem:[%s1 + $0x60] sm:$0xff]
    %v76 = vld [vmem:[%s1 + $0x68] sm:$0xff]
    %v77 = vld [vmem:[%s1 + $0x70] sm:$0xff]
    %v78 = vld [vmem:[%s1 + $0x78] sm:$0xff]
    %v79 = vld [vmem:[%s1 + $0x80] sm:$0xff]
    %v80 = vld [vmem:[%s1 + $0x88] sm:$0xff]
    %v81 = vld [vmem:[%s1 + $0x90] sm:$0xff]
    %v82 = vld [vmem:[%s1 + $0x98] sm:$0xff]
    %v83 = vld [vmem:[%s1 + $0xa0] sm:$0xff]
    %v84 = vld [vmem:[%s1 + $0xa8] sm:$0xff]
    %v85 = vld [vmem:[%s1 + $0xb0] sm:$0xff]
    %v86 = vld [vmem:[%s1 + $0xb8] sm:$0xff]
    %v87 = vld [vmem:[%s1 + $0xc0] sm:$0xff]
    %v88 = vld [vmem:[%s1 + $0xc8] sm:$0xff]
    %v89 = vld [vmem:[%s1 + $0xd0] sm:$0xff]
    %v90 = vld [vmem:[%s1 + $0xd8] sm:$0xff]
    %v91 = vld [vmem:[%s1 + $0xe0] sm:$0xff]
    %v92 = vld [vmem:[%s1 + $0xe8] sm:$0xff]
    %v93 = vld [vmem:[%s1 + $0xf0] sm:$0xff]
    %v94 = vld [vmem:[%s1 + $0xf8] sm:$0xff]
    %v95 = vld [vmem:[%s1 + $0x100] sm:$0xff]
    %v96 = vld [vmem:[%s1 + $0x108] sm:$0xff]
    %v97 = vld [vmem:[%s1 + $0x110] sm:$0xff]
    %v98 = vld [vmem:[%s1 + $0x118] sm:$0xff]
    %v99 = vld [vmem:[%s1 + $0x120] sm:$0xff]
    %v100 = vld [vmem:[%s1 + $0x128] sm:$0xff]
    %v101 = vld [vmem:[%s1 + $0x130] sm:$0xff]
    %v102 = vld [vmem:[%s1 + $0x138] sm:$0xff]
    %v103 = vld [vmem:[%s1 + $0x140] sm:$0xff]
    %v104 = vld [vmem:[%s1 + $0x148] sm:$0xff]
    %v105 = vld [vmem:[%s1 + $0x150] sm:$0xff]
    %v106 = vld [vmem:[%s1 + $0x158] sm:$0xff]
    %v107 = vld [vmem:[%s1 + $0x160] sm:$0xff]
    %v108 = vld [vmem:[%s1 + $0x168] sm:$0xff]
    %v109 = vld [vmem:[%s1 + $0x170] sm:$0xff]
    %v110 = vld [vmem:[%s1 + $0x178] sm:$0xff]
    %v111 = vld [vmem:[%s1 + $0x180] sm:$0xff]
    %v112 = vld [vmem:[%s1 + $0x188] sm:$0xff]
    %v113 = vld [vmem:[%s1 + $0x190] sm:$0xff]
    %v114 = vld [vmem:[%s1 + $0x198] sm:$0xff]
    %v115 = vld [vmem:[%s1 + $0x1a0] sm:$0xff]
    %v116 = vld [vmem:[%s1 + $0x1a8] sm:$0xff]
    %v117 = vld [vmem:[%s1 + $0x1b0] sm:$0xff]
    %v118 = vld [vmem:[%s1 + $0x1b8] sm:$0xff]
    %v119 = vld [vmem:[%s1 + $0x1c0] sm:$0xff]
    %v120 = vld [vmem:[%s1 + $0x1c8] sm:$0xff]
    %v121 = vld [vmem:[%s1 + $0x1d0] sm:$0xff]
    %v122 = vld [vmem:[%s1 + $0x1d8] sm:$0xff]
    %v123 = vld [vmem:[%s1 + $0x1e0] sm:$0xff]
    %v124 = vld [vmem:[%s1 + $0x1e8] sm:$0xff]
    %v125 = vld [vmem:[%s1 + $0x1f0] sm:$0xff]
    %v126 = vld [vmem:[%s1 + $0x1f8] sm:$0xff]
    %v127 = vld [vmem:[%s1 + $0x200] sm:$0xff]
    %v128 = vld [vmem:[%s1 + $0x208] sm:$0xff]
    %v129 = vld [vmem:[%s1 + $0x210] sm:$0xff]
    %v130 = vld [vmem:[%s1 + $0x218] sm:$0xff]
    %v131 = vld [vmem:[%s1 + $0x220] sm:$0xff]
    %v132 = vld [vmem:[%s1 + $0x228] sm:$0xff]
    %v133 = vld [vmem:[%s1 + $0x230] sm:$0xff]
    %v134 = vld [vmem:[%s1 + $0x238] sm:$0xff]
    %v135 = vld [vmem:[%s1 + $0x240] sm:$0xff]
    %v136 = vld [vmem:[%s1 + $0x248] sm:$0xff]
    %v137 = vld [vmem:[%s1 + $0x250] sm:$0xff]
    %v138 = vld [vmem:[%s1 + $0x258] sm:$0xff]
    %v139 = vld [vmem:[%s1 + $0x260] sm:$0xff]
    %v140 = vld [vmem:[%s1 + $0x268] sm:$0xff]
    %v141 = vld [vmem:[%s1 + $0x270] sm:$0xff]
    %v142 = vld [vmem:[%s1 + $0x278] sm:$0xff]
    %v143 = vld [vmem:[%s1 + $0x280] sm:$0xff]
    %v144 = vld [vmem:[%s1 + $0x288] sm:$0xff]
    %v145 = vld [vmem:[%s1 + $0x290] sm:$0xff]
    %v146 = vld [vmem:[%s1 + $0x298] sm:$0xff]
    %v147 = vld [vmem:[%s1 + $0x2a0] sm:$0xff]
    %v148 = vld [vmem:[%s1 + $0x2a8] sm:$0xff]
    %v149 = vld [vmem:[%s1 + $0x2b0] sm:$0xff]
    %v150 = vld [vmem:[%s1 + $0x2b8] sm:$0xff]
    %v151 = vld [vmem:[%s1 + $0x2c0] sm:$0xff]
    %v152 = vld [vmem:[%s1 + $0x2c8] sm:$0xff]
    %v153 = vld [vmem:[%s1 + $0x2d0] sm:$0xff]
    %v154 = vld [vmem:[%s1 + $0x2d8] sm:$0xff]
    %v155 = vld [vmem:[%s1 + $0x2e0] sm:$0xff]
    %v156 = vld [vmem:[%s1 + $0x2e8] sm:$0xff]
    %v157 = vld [vmem:[%s1 + $0x2f0] sm:$0xff]
    %v158 = vld [vmem:[%s1 + $0x2f8] sm:$0xff]
    %v159 = vld [vmem:[%s1 + $0x300] sm:$0xff]
    %v160 = vld [vmem:[%s1 + $0x308] sm:$0xff]
    %v161 = vld [vmem:[%s1 + $0x310] sm:$0xff]
    %v162 = vld [vmem:[%s1 + $0x318] sm:$0xff]
    %v163 = vld [vmem:[%s1 + $0x320] sm:$0xff]
    %v164 = vld [vmem:[%s1 + $0x328] sm:$0xff]
    %v165 = vld [vmem:[%s1 + $0x330] sm:$0xff]
    %v166 = vld [vmem:[%s1 + $0x338] sm:$0xff]
    %v167 = vld [vmem:[%s1 + $0x340] sm:$0xff]
    %v168 = vld [vmem:[%s1 + $0x348] sm:$0xff]
    %v169 = vld [vmem:[%s1 + $0x350] sm:$0xff]
    %v170 = vld [vmem:[%s1 + $0x358] sm:$0xff]
    %v171 = vld [vmem:[%s1 + $0x360] sm:$0xff]
    %v172 = vld [vmem:[%s1 + $0x368] sm:$0xff]
    %v173 = vld [vmem:[%s1 + $0x370] sm:$0xff]
    %v174 = vld [vmem:[%s1 + $0x378] sm:$0xff]
    %v175 = vld [vmem:[%s1 + $0x380] sm:$0xff]
    %v176 = vld [vmem:[%s1 + $0x388] sm:$0xff]
    %v177 = vld [vmem:[%s1 + $0x390] sm:$0xff]
    %v178 = vld [vmem:[%s1 + $0x398] sm:$0xff]
    %v179 = vld [vmem:[%s1 + $0x3a0] sm:$0xff]
    %v180 = vld [vmem:[%s1 + $0x3a8] sm:$0xff]
    %v181 = vld [vmem:[%s1 + $0x3b0] sm:$0xff]
    %v182 = vld [vmem:[%s1 + $0x3b8] sm:$0xff]
    %v183 = vld [vmem:[%s1 + $0x3c0] sm:$0xff]
    %v184 = vld [vmem:[%s1 + $0x3c8] sm:$0xff]
    %v185 = vld [vmem:[%s1 + $0x3d0] sm:$0xff]
    %v186 = vld [vmem:[%s1 + $0x3d8] sm:$0xff]
    %v187 = vld [vmem:[%s1 + $0x3e0] sm:$0xff]
    %v188 = vld [vmem:[%s1 + $0x3e8] sm:$0xff]
    %v189 = vld [vmem:[%s1 + $0x3f0] sm:$0xff]
    %v190 = vld [vmem:[%s1 + $0x3f8] sm:$0xff]
    %v191 = vld [vmem:[%s1 + $0x400] sm:$0xff]
    %v192 = vld [vmem:[%s1 + $0x408] sm:$0xff]
    %v193 = vld [vmem:[%s1 + $0x410] sm:$0xff]
    %v194 = vld [vmem:[%s1 + $0x418] sm:$0xff]
    %v195 = vld [vmem:[%s1 + $0x420] sm:$0xff]
    %v196 = vld [vmem:[%s1 + $0x428] sm:$0xff]
    %v197 = vld [vmem:[%s1 + $0x430] sm:$0xff]
    %v198 = vld [vmem:[%s1 + $0x438] sm:$0xff]
    %v199 = vld [vmem:[%s1 + $0x440] sm:$0xff]
    %v200 = vld [vmem:[%s1 + $0x448] sm:$0xff]
    %v201 = vld [vmem:[%s1 + $0x450] sm:$0xff]
    %v202 = vld [vmem:[%s1 + $0x458] sm:$0xff]
    %v203 = vld [vmem:[%s1 + $0x460] sm:$0xff]
    %v204 = vld [vmem:[%s1 + $0x468] sm:$0xff]
    %v205 = vld [vmem:[%s1 + $0x470] sm:$0xff]
    %v206 = vld [vmem:[%s1 + $0x478] sm:$0xff]
    %v207 = vld [vmem:[%s1 + $0x480] sm:$0xff]
    %v208 = vld [vmem:[%s1 + $0x488] sm:$0xff]
    %v209 = vld [vmem:[%s1 + $0x490] sm:$0xff]
    %v210 = vld [vmem:[%s1 + $0x498] sm:$0xff]
    %v211 = vld [vmem:[%s1 + $0x4a0] sm:$0xff]
    %v212 = vld [vmem:[%s1 + $0x4a8] sm:$0xff]
    %v213 = vld [vmem:[%s1 + $0x4b0] sm:$0xff]
    %v214 = vld [vmem:[%s1 + $0x4b8] sm:$0xff]
    %v215 = vld [vmem:[%s1 + $0x4c0] sm:$0xff]
    %v216 = vld [vmem:[%s1 + $0x4c8] sm:$0xff]
    %v217 = vld [vmem:[%s1 + $0x4d0] sm:$0xff]
    %v218 = vld [vmem:[%s1 + $0x4d8] sm:$0xff]
    %v219 = vld [vmem:[%s1 + $0x4e0] sm:$0xff]
    %v220 = vld [vmem:[%s1 + $0x4e8] sm:$0xff]
    %v221 = vld [vmem:[%s1 + $0x4f0] sm:$0xff]
    %v222 = vld [vmem:[%s1 + $0x4f8] sm:$0xff]
    %v223 = vld [vmem:[%s1 + $0x500] sm:$0xff]
    %v224 = vld [vmem:[%s1 + $0x508] sm:$0xff]
    %v225 = vld [vmem:[%s1 + $0x510] sm:$0xff]
    %v226 = vld [vmem:[%s1 + $0x518] sm:$0xff]
    %v227 = vld [vmem:[%s1 + $0x520] sm:$0xff]
    %v228 = vld [vmem:[%s1 + $0x528] sm:$0xff]
    %v229 = vld [vmem:[%s1 + $0x530] sm:$0xff]
    %v230 = vld [vmem:[%s1 + $0x538] sm:$0xff]
    %v231 = vld [vmem:[%s1 + $0x540] sm:$0xff]
    %v232 = vld [vmem:[%s1 + $0x548] sm:$0xff]
    %v233 = vld [vmem:[%s1 + $0x550] sm:$0xff]
    %v234 = vld [vmem:[%s1 + $0x558] sm:$0xff]
    %v235 = vld [vmem:[%s1 + $0x560] sm:$0xff]
    %v236 = vld [vmem:[%s1 + $0x568] sm:$0xff]
    %v237 = vld [vmem:[%s1 + $0x570] sm:$0xff]
    %v238 = vld [vmem:[%s1 + $0x578] sm:$0xff]
    %v239 = vld [vmem:[%s1 + $0x580] sm:$0xff]
    %v240 = vld [vmem:[%s1 + $0x588] sm:$0xff]
    %v241 = vld [vmem:[%s1 + $0x590] sm:$0xff]
    %v242 = vld [vmem:[%s1 + $0x598] sm:$0xff]
    %v243 = vld [vmem:[%s1 + $0x5a0] sm:$0xff]
    %v244 = vld [vmem:[%s1 + $0x5a8] sm:$0xff]
    %v245 = vld [vmem:[%s1 + $0x5b0] sm:$0xff]
    %v246 = vld [vmem:[%s1 + $0x5b8] sm:$0xff]
    %v247 = vld [vmem:[%s1 + $0x5c0] sm:$0xff]
    %v248 = vld [vmem:[%s1 + $0x5c8] sm:$0xff]
    %v249 = vld [vmem:[%s1 + $0x5d0] sm:$0xff]
    %v250 = vld [vmem:[%s1 + $0x5d8] sm:$0xff]
    %v251 = vld [vmem:[%s1 + $0x5e0] sm:$0xff]
    %v252 = vld [vmem:[%s1 + $0x5e8] sm:$0xff]
    %v253 = vld [vmem:[%s1 + $0x5f0] sm:$0xff]
    %v254 = vld [vmem:[%s1 + $0x5f8] sm:$0xff]
    %v255 = vld [vmem:[%s1 + $0x600] sm:$0xff]
    %v256 = vld [vmem:[%s1 + $0x608] sm:$0xff]
    %v257 = vld [vmem:[%s1 + $0x610] sm:$0xff]
    %v258 = vld [vmem:[%s1 + $0x618] sm:$0xff]
    %v259 = vld [vmem:[%s1 + $0x620] sm:$0xff]
    %v260 = vld [vmem:[%s1 + $0x628] sm:$0xff]
    %v261 = vld [vmem:[%s1 + $0x630] sm:$0xff]
    %v262 = vld [vmem:[%s1 + $0x638] sm:$0xff]
    %v263 = vld [vmem:[%s1 + $0x640] sm:$0xff]
    %v264 = vld [vmem:[%s1 + $0x648] sm:$0xff]
    %v265 = vld [vmem:[%s1 + $0x650] sm:$0xff]
    %v266 = vld [vmem:[%s1 + $0x658] sm:$0xff]
    %v267 = vld [vmem:[%s1 + $0x660] sm:$0xff]
    %v268 = vld [vmem:[%s1 + $0x668] sm:$0xff]
    %v269 = vld [vmem:[%s1 + $0x670] sm:$0xff]
    %v270 = vld [vmem:[%s1 + $0x678] sm:$0xff]
    %v271 = vld [vmem:[%s1 + $0x680] sm:$0xff]
    %v272 = vld [vmem:[%s1 + $0x688] sm:$0xff]
    %v273 = vld [vmem:[%s1 + $0x690] sm:$0xff]
    %v274 = vld [vmem:[%s1 + $0x698] sm:$0xff]
    %v275 = vld [vmem:[%s1 + $0x6a0] sm:$0xff]
    %v276 = vld [vmem:[%s1 + $0x6a8] sm:$0xff]
    %v277 = vld [vmem:[%s1 + $0x6b0] sm:$0xff]
    %v278 = vld [vmem:[%s1 + $0x6b8] sm:$0xff]
    %v279 = vld [vmem:[%s1 + $0x6c0] sm:$0xff]
    %v280 = vld [vmem:[%s1 + $0x6c8] sm:$0xff]
    %v281 = vld [vmem:[%s1 + $0x6d0] sm:$0xff]
    %v282 = vld [vmem:[%s1 + $0x6d8] sm:$0xff]
    %v283 = vld [vmem:[%s1 + $0x6e0] sm:$0xff]
    %v284 = vld [vmem:[%s1 + $0x6e8] sm:$0xff]
    %v285 = vld [vmem:[%s1 + $0x6f0] sm:$0xff]
    %v286 = vld [vmem:[%s1 + $0x6f8] sm:$0xff]
    %v287 = vld [vmem:[%s2] sm:$0xf]
    %v289 = vlaneseq
    %v290 = vshrl.u32 %v289, 7
    %v291 = vsub.s32 0, %v290
    %v292 = vrot.slane %v287, %v291
    %v293 = vlaneseq
    %v294 = vshrl.u32 %v293, 7
    %v295 = vsub.s32 1, %v294
    %v296 = vrot.slane %v287, %v295
    %v297 = vlaneseq
    %v298 = vshrl.u32 %v297, 7
    %v299 = vsub.s32 2, %v298
    %v300 = vrot.slane %v287, %v299
    %v301 = vlaneseq
    %v302 = vshrl.u32 %v301, 7
    %v303 = vsub.s32 3, %v302
    %v304 = vrot.slane %v287, %v303
    %v533 = vunpack.c.l.b16 %v63
    %v534 = vunpack.c.h.b16 %v63
    %v535 = vunpack.c.l.b16 %v64
    %v536 = vunpack.c.h.b16 %v64
    %v537 = vunpack.c.l.b16 %v65
    %v538 = vunpack.c.h.b16 %v65
    %v539 = vunpack.c.l.b16 %v66
    %v540 = vunpack.c.h.b16 %v66
    %v541 = vunpack.c.l.b16 %v67
    %v542 = vunpack.c.h.b16 %v67
    %v543 = vunpack.c.l.b16 %v68
    %v544 = vunpack.c.h.b16 %v68
    %v545 = vunpack.c.l.b16 %v69
    %v546 = vunpack.c.h.b16 %v69
    %v547 = vunpack.c.l.b16 %v70
    %v548 = vunpack.c.h.b16 %v70
    %v549 = vunpack.c.l.b16 %v71
    %v550 = vunpack.c.h.b16 %v71
    %v551 = vunpack.c.l.b16 %v72
    %v552 = vunpack.c.h.b16 %v72
    %v553 = vunpack.c.l.b16 %v73
    %v554 = vunpack.c.h.b16 %v73
    %v555 = vunpack.c.l.b16 %v74
    %v556 = vunpack.c.h.b16 %v74
    %v557 = vunpack.c.l.b16 %v75
    %v558 = vunpack.c.h.b16 %v75
    %v559 = vunpack.c.l.b16 %v76
    %v560 = vunpack.c.h.b16 %v76
    %v561 = vunpack.c.l.b16 %v77
    %v562 = vunpack.c.h.b16 %v77
    %v563 = vunpack.c.l.b16 %v78
    %v564 = vunpack.c.h.b16 %v78
    %v565 = vunpack.c.l.b16 %v79
    %v566 = vunpack.c.h.b16 %v79
    %v567 = vunpack.c.l.b16 %v80
    %v568 = vunpack.c.h.b16 %v80
    %v569 = vunpack.c.l.b16 %v81
    %v570 = vunpack.c.h.b16 %v81
    %v571 = vunpack.c.l.b16 %v82
    %v572 = vunpack.c.h.b16 %v82
    %v573 = vunpack.c.l.b16 %v83
    %v574 = vunpack.c.h.b16 %v83
    %v575 = vunpack.c.l.b16 %v84
    %v576 = vunpack.c.h.b16 %v84
    %v577 = vunpack.c.l.b16 %v85
    %v578 = vunpack.c.h.b16 %v85
    %v579 = vunpack.c.l.b16 %v86
    %v580 = vunpack.c.h.b16 %v86
    %v581 = vunpack.c.l.b16 %v87
    %v582 = vunpack.c.h.b16 %v87
    %v583 = vunpack.c.l.b16 %v88
    %v584 = vunpack.c.h.b16 %v88
    %v585 = vunpack.c.l.b16 %v89
    %v586 = vunpack.c.h.b16 %v89
    %v587 = vunpack.c.l.b16 %v90
    %v588 = vunpack.c.h.b16 %v90
    %v589 = vunpack.c.l.b16 %v91
    %v590 = vunpack.c.h.b16 %v91
    %v591 = vunpack.c.l.b16 %v92
    %v592 = vunpack.c.h.b16 %v92
    %v593 = vunpack.c.l.b16 %v93
    %v594 = vunpack.c.h.b16 %v93
    %v595 = vunpack.c.l.b16 %v94
    %v596 = vunpack.c.h.b16 %v94
    %v597 = vunpack.c.l.b16 %v95
    %v598 = vunpack.c.h.b16 %v95
    %v599 = vunpack.c.l.b16 %v96
    %v600 = vunpack.c.h.b16 %v96
    %v601 = vunpack.c.l.b16 %v97
    %v602 = vunpack.c.h.b16 %v97
    %v603 = vunpack.c.l.b16 %v98
    %v604 = vunpack.c.h.b16 %v98
    %v605 = vunpack.c.l.b16 %v99
    %v606 = vunpack.c.h.b16 %v99
    %v607 = vunpack.c.l.b16 %v100
    %v608 = vunpack.c.h.b16 %v100
    %v609 = vunpack.c.l.b16 %v101
    %v610 = vunpack.c.h.b16 %v101
    %v611 = vunpack.c.l.b16 %v102
    %v612 = vunpack.c.h.b16 %v102
    %v613 = vunpack.c.l.b16 %v103
    %v614 = vunpack.c.h.b16 %v103
    %v615 = vunpack.c.l.b16 %v104
    %v616 = vunpack.c.h.b16 %v104
    %v617 = vunpack.c.l.b16 %v105
    %v618 = vunpack.c.h.b16 %v105
    %v619 = vunpack.c.l.b16 %v106
    %v620 = vunpack.c.h.b16 %v106
    %v621 = vunpack.c.l.b16 %v107
    %v622 = vunpack.c.h.b16 %v107
    %v623 = vunpack.c.l.b16 %v108
    %v624 = vunpack.c.h.b16 %v108
    %v625 = vunpack.c.l.b16 %v109
    %v626 = vunpack.c.h.b16 %v109
    %v627 = vunpack.c.l.b16 %v110
    %v628 = vunpack.c.h.b16 %v110
    %v629 = vunpack.c.l.b16 %v111
    %v630 = vunpack.c.h.b16 %v111
    %v631 = vunpack.c.l.b16 %v112
    %v632 = vunpack.c.h.b16 %v112
    %v633 = vunpack.c.l.b16 %v113
    %v634 = vunpack.c.h.b16 %v113
    %v635 = vunpack.c.l.b16 %v114
    %v636 = vunpack.c.h.b16 %v114
    %v637 = vunpack.c.l.b16 %v115
    %v638 = vunpack.c.h.b16 %v115
    %v639 = vunpack.c.l.b16 %v116
    %v640 = vunpack.c.h.b16 %v116
    %v641 = vunpack.c.l.b16 %v117
    %v642 = vunpack.c.h.b16 %v117
    %v643 = vunpack.c.l.b16 %v118
    %v644 = vunpack.c.h.b16 %v118
    %v645 = vunpack.c.l.b16 %v119
    %v646 = vunpack.c.h.b16 %v119
    %v647 = vunpack.c.l.b16 %v120
    %v648 = vunpack.c.h.b16 %v120
    %v649 = vunpack.c.l.b16 %v121
    %v650 = vunpack.c.h.b16 %v121
    %v651 = vunpack.c.l.b16 %v122
    %v652 = vunpack.c.h.b16 %v122
    %v653 = vunpack.c.l.b16 %v123
    %v654 = vunpack.c.h.b16 %v123
    %v655 = vunpack.c.l.b16 %v124
    %v656 = vunpack.c.h.b16 %v124
    %v657 = vunpack.c.l.b16 %v125
    %v658 = vunpack.c.h.b16 %v125
    %v659 = vunpack.c.l.b16 %v126
    %v660 = vunpack.c.h.b16 %v126
    %v661 = vunpack.c.l.b16 %v127
    %v662 = vunpack.c.h.b16 %v127
    %v663 = vunpack.c.l.b16 %v128
    %v664 = vunpack.c.h.b16 %v128
    %v665 = vunpack.c.l.b16 %v129
    %v666 = vunpack.c.h.b16 %v129
    %v667 = vunpack.c.l.b16 %v130
    %v668 = vunpack.c.h.b16 %v130
    %v669 = vunpack.c.l.b16 %v131
    %v670 = vunpack.c.h.b16 %v131
    %v671 = vunpack.c.l.b16 %v132
    %v672 = vunpack.c.h.b16 %v132
    %v673 = vunpack.c.l.b16 %v133
    %v674 = vunpack.c.h.b16 %v133
    %v675 = vunpack.c.l.b16 %v134
    %v676 = vunpack.c.h.b16 %v134
    %v677 = vunpack.c.l.b16 %v135
    %v678 = vunpack.c.h.b16 %v135
    %v679 = vunpack.c.l.b16 %v136
    %v680 = vunpack.c.h.b16 %v136
    %v681 = vunpack.c.l.b16 %v137
    %v682 = vunpack.c.h.b16 %v137
    %v683 = vunpack.c.l.b16 %v138
    %v684 = vunpack.c.h.b16 %v138
    %v685 = vunpack.c.l.b16 %v139
    %v686 = vunpack.c.h.b16 %v139
    %v687 = vunpack.c.l.b16 %v140
    %v688 = vunpack.c.h.b16 %v140
    %v689 = vunpack.c.l.b16 %v141
    %v690 = vunpack.c.h.b16 %v141
    %v691 = vunpack.c.l.b16 %v142
    %v692 = vunpack.c.h.b16 %v142
    %v693 = vunpack.c.l.b16 %v143
    %v694 = vunpack.c.h.b16 %v143
    %v695 = vunpack.c.l.b16 %v144
    %v696 = vunpack.c.h.b16 %v144
    %v697 = vunpack.c.l.b16 %v145
    %v698 = vunpack.c.h.b16 %v145
    %v699 = vunpack.c.l.b16 %v146
    %v700 = vunpack.c.h.b16 %v146
    %v701 = vunpack.c.l.b16 %v147
    %v702 = vunpack.c.h.b16 %v147
    %v703 = vunpack.c.l.b16 %v148
    %v704 = vunpack.c.h.b16 %v148
    %v705 = vunpack.c.l.b16 %v149
    %v706 = vunpack.c.h.b16 %v149
    %v707 = vunpack.c.l.b16 %v150
    %v708 = vunpack.c.h.b16 %v150
    %v709 = vunpack.c.l.b16 %v151
    %v710 = vunpack.c.h.b16 %v151
    %v711 = vunpack.c.l.b16 %v152
    %v712 = vunpack.c.h.b16 %v152
    %v713 = vunpack.c.l.b16 %v153
    %v714 = vunpack.c.h.b16 %v153
    %v715 = vunpack.c.l.b16 %v154
    %v716 = vunpack.c.h.b16 %v154
    %v717 = vunpack.c.l.b16 %v155
    %v718 = vunpack.c.h.b16 %v155
    %v719 = vunpack.c.l.b16 %v156
    %v720 = vunpack.c.h.b16 %v156
    %v721 = vunpack.c.l.b16 %v157
    %v722 = vunpack.c.h.b16 %v157
    %v723 = vunpack.c.l.b16 %v158
    %v724 = vunpack.c.h.b16 %v158
    %v725 = vunpack.c.l.b16 %v159
    %v726 = vunpack.c.h.b16 %v159
    %v727 = vunpack.c.l.b16 %v160
    %v728 = vunpack.c.h.b16 %v160
    %v729 = vunpack.c.l.b16 %v161
    %v730 = vunpack.c.h.b16 %v161
    %v731 = vunpack.c.l.b16 %v162
    %v732 = vunpack.c.h.b16 %v162
    %v733 = vunpack.c.l.b16 %v163
    %v734 = vunpack.c.h.b16 %v163
    %v735 = vunpack.c.l.b16 %v164
    %v736 = vunpack.c.h.b16 %v164
    %v737 = vunpack.c.l.b16 %v165
    %v738 = vunpack.c.h.b16 %v165
    %v739 = vunpack.c.l.b16 %v166
    %v740 = vunpack.c.h.b16 %v166
    %v741 = vunpack.c.l.b16 %v167
    %v742 = vunpack.c.h.b16 %v167
    %v743 = vunpack.c.l.b16 %v168
    %v744 = vunpack.c.h.b16 %v168
    %v745 = vunpack.c.l.b16 %v169
    %v746 = vunpack.c.h.b16 %v169
    %v747 = vunpack.c.l.b16 %v170
    %v748 = vunpack.c.h.b16 %v170
    %v749 = vunpack.c.l.b16 %v171
    %v750 = vunpack.c.h.b16 %v171
    %v751 = vunpack.c.l.b16 %v172
    %v752 = vunpack.c.h.b16 %v172
    %v753 = vunpack.c.l.b16 %v173
    %v754 = vunpack.c.h.b16 %v173
    %v755 = vunpack.c.l.b16 %v174
    %v756 = vunpack.c.h.b16 %v174
    %v757 = vunpack.c.l.b16 %v175
    %v758 = vunpack.c.h.b16 %v175
    %v759 = vunpack.c.l.b16 %v176
    %v760 = vunpack.c.h.b16 %v176
    %v761 = vunpack.c.l.b16 %v177
    %v762 = vunpack.c.h.b16 %v177
    %v763 = vunpack.c.l.b16 %v178
    %v764 = vunpack.c.h.b16 %v178
    %v765 = vunpack.c.l.b16 %v179
    %v766 = vunpack.c.h.b16 %v179
    %v767 = vunpack.c.l.b16 %v180
    %v768 = vunpack.c.h.b16 %v180
    %v769 = vunpack.c.l.b16 %v181
    %v770 = vunpack.c.h.b16 %v181
    %v771 = vunpack.c.l.b16 %v182
    %v772 = vunpack.c.h.b16 %v182
    %v773 = vunpack.c.l.b16 %v183
    %v774 = vunpack.c.h.b16 %v183
    %v775 = vunpack.c.l.b16 %v184
    %v776 = vunpack.c.h.b16 %v184
    %v777 = vunpack.c.l.b16 %v185
    %v778 = vunpack.c.h.b16 %v185
    %v779 = vunpack.c.l.b16 %v186
    %v780 = vunpack.c.h.b16 %v186
    %v781 = vunpack.c.l.b16 %v187
    %v782 = vunpack.c.h.b16 %v187
    %v783 = vunpack.c.l.b16 %v188
    %v784 = vunpack.c.h.b16 %v188
    %v785 = vunpack.c.l.b16 %v189
    %v786 = vunpack.c.h.b16 %v189
    %v787 = vunpack.c.l.b16 %v190
    %v788 = vunpack.c.h.b16 %v190
    %v789 = vunpack.c.l.b16 %v191
    %v790 = vunpack.c.h.b16 %v191
    %v791 = vunpack.c.l.b16 %v192
    %v792 = vunpack.c.h.b16 %v192
    %v793 = vunpack.c.l.b16 %v193
    %v794 = vunpack.c.h.b16 %v193
    %v795 = vunpack.c.l.b16 %v194
    %v796 = vunpack.c.h.b16 %v194
    %v797 = vunpack.c.l.b16 %v195
    %v798 = vunpack.c.h.b16 %v195
    %v799 = vunpack.c.l.b16 %v196
    %v800 = vunpack.c.h.b16 %v196
    %v801 = vunpack.c.l.b16 %v197
    %v802 = vunpack.c.h.b16 %v197
    %v803 = vunpack.c.l.b16 %v198
    %v804 = vunpack.c.h.b16 %v198
    %v805 = vunpack.c.l.b16 %v199
    %v806 = vunpack.c.h.b16 %v199
    %v807 = vunpack.c.l.b16 %v200
    %v808 = vunpack.c.h.b16 %v200
    %v809 = vunpack.c.l.b16 %v201
    %v810 = vunpack.c.h.b16 %v201
    %v811 = vunpack.c.l.b16 %v202
    %v812 = vunpack.c.h.b16 %v202
    %v813 = vunpack.c.l.b16 %v203
    %v814 = vunpack.c.h.b16 %v203
    %v815 = vunpack.c.l.b16 %v204
    %v816 = vunpack.c.h.b16 %v204
    %v817 = vunpack.c.l.b16 %v205
    %v818 = vunpack.c.h.b16 %v205
    %v819 = vunpack.c.l.b16 %v206
    %v820 = vunpack.c.h.b16 %v206
    %v821 = vunpack.c.l.b16 %v207
    %v822 = vunpack.c.h.b16 %v207
    %v823 = vunpack.c.l.b16 %v208
    %v824 = vunpack.c.h.b16 %v208
    %v825 = vunpack.c.l.b16 %v209
    %v826 = vunpack.c.h.b16 %v209
    %v827 = vunpack.c.l.b16 %v210
    %v828 = vunpack.c.h.b16 %v210
    %v829 = vunpack.c.l.b16 %v211
    %v830 = vunpack.c.h.b16 %v211
    %v831 = vunpack.c.l.b16 %v212
    %v832 = vunpack.c.h.b16 %v212
    %v833 = vunpack.c.l.b16 %v213
    %v834 = vunpack.c.h.b16 %v213
    %v835 = vunpack.c.l.b16 %v214
    %v836 = vunpack.c.h.b16 %v214
    %v837 = vunpack.c.l.b16 %v215
    %v838 = vunpack.c.h.b16 %v215
    %v839 = vunpack.c.l.b16 %v216
    %v840 = vunpack.c.h.b16 %v216
    %v841 = vunpack.c.l.b16 %v217
    %v842 = vunpack.c.h.b16 %v217
    %v843 = vunpack.c.l.b16 %v218
    %v844 = vunpack.c.h.b16 %v218
    %v845 = vunpack.c.l.b16 %v219
    %v846 = vunpack.c.h.b16 %v219
    %v847 = vunpack.c.l.b16 %v220
    %v848 = vunpack.c.h.b16 %v220
    %v849 = vunpack.c.l.b16 %v221
    %v850 = vunpack.c.h.b16 %v221
    %v851 = vunpack.c.l.b16 %v222
    %v852 = vunpack.c.h.b16 %v222
    %v853 = vunpack.c.l.b16 %v223
    %v854 = vunpack.c.h.b16 %v223
    %v855 = vunpack.c.l.b16 %v224
    %v856 = vunpack.c.h.b16 %v224
    %v857 = vunpack.c.l.b16 %v225
    %v858 = vunpack.c.h.b16 %v225
    %v859 = vunpack.c.l.b16 %v226
    %v860 = vunpack.c.h.b16 %v226
    %v861 = vunpack.c.l.b16 %v227
    %v862 = vunpack.c.h.b16 %v227
    %v863 = vunpack.c.l.b16 %v228
    %v864 = vunpack.c.h.b16 %v228
    %v865 = vunpack.c.l.b16 %v229
    %v866 = vunpack.c.h.b16 %v229
    %v867 = vunpack.c.l.b16 %v230
    %v868 = vunpack.c.h.b16 %v230
    %v869 = vunpack.c.l.b16 %v231
    %v870 = vunpack.c.h.b16 %v231
    %v871 = vunpack.c.l.b16 %v232
    %v872 = vunpack.c.h.b16 %v232
    %v873 = vunpack.c.l.b16 %v233
    %v874 = vunpack.c.h.b16 %v233
    %v875 = vunpack.c.l.b16 %v234
    %v876 = vunpack.c.h.b16 %v234
    %v877 = vunpack.c.l.b16 %v235
    %v878 = vunpack.c.h.b16 %v235
    %v879 = vunpack.c.l.b16 %v236
    %v880 = vunpack.c.h.b16 %v236
    %v881 = vunpack.c.l.b16 %v237
    %v882 = vunpack.c.h.b16 %v237
    %v883 = vunpack.c.l.b16 %v238
    %v884 = vunpack.c.h.b16 %v238
    %v885 = vunpack.c.l.b16 %v239
    %v886 = vunpack.c.h.b16 %v239
    %v887 = vunpack.c.l.b16 %v240
    %v888 = vunpack.c.h.b16 %v240
    %v889 = vunpack.c.l.b16 %v241
    %v890 = vunpack.c.h.b16 %v241
    %v891 = vunpack.c.l.b16 %v242
    %v892 = vunpack.c.h.b16 %v242
    %v893 = vunpack.c.l.b16 %v243
    %v894 = vunpack.c.h.b16 %v243
    %v895 = vunpack.c.l.b16 %v244
    %v896 = vunpack.c.h.b16 %v244
    %v897 = vunpack.c.l.b16 %v245
    %v898 = vunpack.c.h.b16 %v245
    %v899 = vunpack.c.l.b16 %v246
    %v900 = vunpack.c.h.b16 %v246
    %v901 = vunpack.c.l.b16 %v247
    %v902 = vunpack.c.h.b16 %v247
    %v903 = vunpack.c.l.b16 %v248
    %v904 = vunpack.c.h.b16 %v248
    %v905 = vunpack.c.l.b16 %v249
    %v906 = vunpack.c.h.b16 %v249
    %v907 = vunpack.c.l.b16 %v250
    %v908 = vunpack.c.h.b16 %v250
    %v909 = vunpack.c.l.b16 %v251
    %v910 = vunpack.c.h.b16 %v251
    %v911 = vunpack.c.l.b16 %v252
    %v912 = vunpack.c.h.b16 %v252
    %v913 = vunpack.c.l.b16 %v253
    %v914 = vunpack.c.h.b16 %v253
    %v915 = vunpack.c.l.b16 %v254
    %v916 = vunpack.c.h.b16 %v254
    %v917 = vunpack.c.l.b16 %v255
    %v918 = vunpack.c.h.b16 %v255
    %v919 = vunpack.c.l.b16 %v256
    %v920 = vunpack.c.h.b16 %v256
    %v921 = vunpack.c.l.b16 %v257
    %v922 = vunpack.c.h.b16 %v257
    %v923 = vunpack.c.l.b16 %v258
    %v924 = vunpack.c.h.b16 %v258
    %v925 = vunpack.c.l.b16 %v259
    %v926 = vunpack.c.h.b16 %v259
    %v927 = vunpack.c.l.b16 %v260
    %v928 = vunpack.c.h.b16 %v260
    %v929 = vunpack.c.l.b16 %v261
    %v930 = vunpack.c.h.b16 %v261
    %v931 = vunpack.c.l.b16 %v262
    %v932 = vunpack.c.h.b16 %v262
    %v933 = vunpack.c.l.b16 %v263
    %v934 = vunpack.c.h.b16 %v263
    %v935 = vunpack.c.l.b16 %v264
    %v936 = vunpack.c.h.b16 %v264
    %v937 = vunpack.c.l.b16 %v265
    %v938 = vunpack.c.h.b16 %v265
    %v939 = vunpack.c.l.b16 %v266
    %v940 = vunpack.c.h.b16 %v266
    %v941 = vunpack.c.l.b16 %v267
    %v942 = vunpack.c.h.b16 %v267
    %v943 = vunpack.c.l.b16 %v268
    %v944 = vunpack.c.h.b16 %v268
    %v945 = vunpack.c.l.b16 %v269
    %v946 = vunpack.c.h.b16 %v269
    %v947 = vunpack.c.l.b16 %v270
    %v948 = vunpack.c.h.b16 %v270
    %v949 = vunpack.c.l.b16 %v271
    %v950 = vunpack.c.h.b16 %v271
    %v951 = vunpack.c.l.b16 %v272
    %v952 = vunpack.c.h.b16 %v272
    %v953 = vunpack.c.l.b16 %v273
    %v954 = vunpack.c.h.b16 %v273
    %v955 = vunpack.c.l.b16 %v274
    %v956 = vunpack.c.h.b16 %v274
    %v957 = vunpack.c.l.b16 %v275
    %v958 = vunpack.c.h.b16 %v275
    %v959 = vunpack.c.l.b16 %v276
    %v960 = vunpack.c.h.b16 %v276
    %v961 = vunpack.c.l.b16 %v277
    %v962 = vunpack.c.h.b16 %v277
    %v963 = vunpack.c.l.b16 %v278
    %v964 = vunpack.c.h.b16 %v278
    %v965 = vunpack.c.l.b16 %v279
    %v966 = vunpack.c.h.b16 %v279
    %v967 = vunpack.c.l.b16 %v280
    %v968 = vunpack.c.h.b16 %v280
    %v969 = vunpack.c.l.b16 %v281
    %v970 = vunpack.c.h.b16 %v281
    %v971 = vunpack.c.l.b16 %v282
    %v972 = vunpack.c.h.b16 %v282
    %v973 = vunpack.c.l.b16 %v283
    %v974 = vunpack.c.h.b16 %v283
    %v975 = vunpack.c.l.b16 %v284
    %v976 = vunpack.c.h.b16 %v284
    %v977 = vunpack.c.l.b16 %v285
    %v978 = vunpack.c.h.b16 %v285
    %v979 = vunpack.c.l.b16 %v286
    %v980 = vunpack.c.h.b16 %v286
    %v981 = vpack.c.b16 %v537, %v533
    %v982 = vpack.c.b16 %v538, %v534
    %v983 = vpack.c.b16 %v539, %v535
    %v984 = vpack.c.b16 %v540, %v536
    %v985 = vpack.c.b16 %v545, %v541
    %v986 = vpack.c.b16 %v546, %v542
    %v987 = vpack.c.b16 %v547, %v543
    %v988 = vpack.c.b16 %v548, %v544
    %v989 = vpack.c.b16 %v553, %v549
    %v990 = vpack.c.b16 %v554, %v550
    %v991 = vpack.c.b16 %v555, %v551
    %v992 = vpack.c.b16 %v556, %v552
    %v993 = vpack.c.b16 %v561, %v557
    %v994 = vpack.c.b16 %v562, %v558
    %v995 = vpack.c.b16 %v563, %v559
    %v996 = vpack.c.b16 %v564, %v560
    %v997 = vpack.c.b16 %v569, %v565
    %v998 = vpack.c.b16 %v570, %v566
    %v999 = vpack.c.b16 %v571, %v567
    %v1000 = vpack.c.b16 %v572, %v568
    %v1001 = vpack.c.b16 %v577, %v573
    %v1002 = vpack.c.b16 %v578, %v574
    %v1003 = vpack.c.b16 %v579, %v575
    %v1004 = vpack.c.b16 %v580, %v576
    %v1005 = vpack.c.b16 %v585, %v581
    %v1006 = vpack.c.b16 %v586, %v582
    %v1007 = vpack.c.b16 %v587, %v583
    %v1008 = vpack.c.b16 %v588, %v584
    %v1009 = vpack.c.b16 %v593, %v589
    %v1010 = vpack.c.b16 %v594, %v590
    %v1011 = vpack.c.b16 %v595, %v591
    %v1012 = vpack.c.b16 %v596, %v592
    %v1013 = vpack.c.b16 %v601, %v597
    %v1014 = vpack.c.b16 %v602, %v598
    %v1015 = vpack.c.b16 %v603, %v599
    %v1016 = vpack.c.b16 %v604, %v600
    %v1017 = vpack.c.b16 %v609, %v605
    %v1018 = vpack.c.b16 %v610, %v606
    %v1019 = vpack.c.b16 %v611, %v607
    %v1020 = vpack.c.b16 %v612, %v608
    %v1021 = vpack.c.b16 %v617, %v613
    %v1022 = vpack.c.b16 %v618, %v614
    %v1023 = vpack.c.b16 %v619, %v615
    %v1024 = vpack.c.b16 %v620, %v616
    %v1025 = vpack.c.b16 %v625, %v621
    %v1026 = vpack.c.b16 %v626, %v622
    %v1027 = vpack.c.b16 %v627, %v623
    %v1028 = vpack.c.b16 %v628, %v624
    %v1029 = vpack.c.b16 %v633, %v629
    %v1030 = vpack.c.b16 %v634, %v630
    %v1031 = vpack.c.b16 %v635, %v631
    %v1032 = vpack.c.b16 %v636, %v632
    %v1033 = vpack.c.b16 %v641, %v637
    %v1034 = vpack.c.b16 %v642, %v638
    %v1035 = vpack.c.b16 %v643, %v639
    %v1036 = vpack.c.b16 %v644, %v640
    %v1037 = vpack.c.b16 %v649, %v645
    %v1038 = vpack.c.b16 %v650, %v646
    %v1039 = vpack.c.b16 %v651, %v647
    %v1040 = vpack.c.b16 %v652, %v648
    %v1041 = vpack.c.b16 %v657, %v653
    %v1042 = vpack.c.b16 %v658, %v654
    %v1043 = vpack.c.b16 %v659, %v655
    %v1044 = vpack.c.b16 %v660, %v656
    %v1045 = vpack.c.b16 %v665, %v661
    %v1046 = vpack.c.b16 %v666, %v662
    %v1047 = vpack.c.b16 %v667, %v663
    %v1048 = vpack.c.b16 %v668, %v664
    %v1049 = vpack.c.b16 %v673, %v669
    %v1050 = vpack.c.b16 %v674, %v670
    %v1051 = vpack.c.b16 %v675, %v671
    %v1052 = vpack.c.b16 %v676, %v672
    %v1053 = vpack.c.b16 %v681, %v677
    %v1054 = vpack.c.b16 %v682, %v678
    %v1055 = vpack.c.b16 %v683, %v679
    %v1056 = vpack.c.b16 %v684, %v680
    %v1057 = vpack.c.b16 %v689, %v685
    %v1058 = vpack.c.b16 %v690, %v686
    %v1059 = vpack.c.b16 %v691, %v687
    %v1060 = vpack.c.b16 %v692, %v688
    %v1061 = vpack.c.b16 %v697, %v693
    %v1062 = vpack.c.b16 %v698, %v694
    %v1063 = vpack.c.b16 %v699, %v695
    %v1064 = vpack.c.b16 %v700, %v696
    %v1065 = vpack.c.b16 %v705, %v701
    %v1066 = vpack.c.b16 %v706, %v702
    %v1067 = vpack.c.b16 %v707, %v703
    %v1068 = vpack.c.b16 %v708, %v704
    %v1069 = vpack.c.b16 %v713, %v709
    %v1070 = vpack.c.b16 %v714, %v710
    %v1071 = vpack.c.b16 %v715, %v711
    %v1072 = vpack.c.b16 %v716, %v712
    %v1073 = vpack.c.b16 %v721, %v717
    %v1074 = vpack.c.b16 %v722, %v718
    %v1075 = vpack.c.b16 %v723, %v719
    %v1076 = vpack.c.b16 %v724, %v720
    %v1077 = vpack.c.b16 %v729, %v725
    %v1078 = vpack.c.b16 %v730, %v726
    %v1079 = vpack.c.b16 %v731, %v727
    %v1080 = vpack.c.b16 %v732, %v728
    %v1081 = vpack.c.b16 %v737, %v733
    %v1082 = vpack.c.b16 %v738, %v734
    %v1083 = vpack.c.b16 %v739, %v735
    %v1084 = vpack.c.b16 %v740, %v736
    %v1085 = vpack.c.b16 %v745, %v741
    %v1086 = vpack.c.b16 %v746, %v742
    %v1087 = vpack.c.b16 %v747, %v743
    %v1088 = vpack.c.b16 %v748, %v744
    %v1089 = vpack.c.b16 %v753, %v749
    %v1090 = vpack.c.b16 %v754, %v750
    %v1091 = vpack.c.b16 %v755, %v751
    %v1092 = vpack.c.b16 %v756, %v752
    %v1093 = vpack.c.b16 %v761, %v757
    %v1094 = vpack.c.b16 %v762, %v758
    %v1095 = vpack.c.b16 %v763, %v759
    %v1096 = vpack.c.b16 %v764, %v760
    %v1097 = vpack.c.b16 %v769, %v765
    %v1098 = vpack.c.b16 %v770, %v766
    %v1099 = vpack.c.b16 %v771, %v767
    %v1100 = vpack.c.b16 %v772, %v768
    %v1101 = vpack.c.b16 %v777, %v773
    %v1102 = vpack.c.b16 %v778, %v774
    %v1103 = vpack.c.b16 %v779, %v775
    %v1104 = vpack.c.b16 %v780, %v776
    %v1105 = vpack.c.b16 %v785, %v781
    %v1106 = vpack.c.b16 %v786, %v782
    %v1107 = vpack.c.b16 %v787, %v783
    %v1108 = vpack.c.b16 %v788, %v784
    %v1109 = vpack.c.b16 %v793, %v789
    %v1110 = vpack.c.b16 %v794, %v790
    %v1111 = vpack.c.b16 %v795, %v791
    %v1112 = vpack.c.b16 %v796, %v792
    %v1113 = vpack.c.b16 %v801, %v797
    %v1114 = vpack.c.b16 %v802, %v798
    %v1115 = vpack.c.b16 %v803, %v799
    %v1116 = vpack.c.b16 %v804, %v800
    %v1117 = vpack.c.b16 %v809, %v805
    %v1118 = vpack.c.b16 %v810, %v806
    %v1119 = vpack.c.b16 %v811, %v807
    %v1120 = vpack.c.b16 %v812, %v808
    %v1121 = vpack.c.b16 %v817, %v813
    %v1122 = vpack.c.b16 %v818, %v814
    %v1123 = vpack.c.b16 %v819, %v815
    %v1124 = vpack.c.b16 %v820, %v816
    %v1125 = vpack.c.b16 %v825, %v821
    %v1126 = vpack.c.b16 %v826, %v822
    %v1127 = vpack.c.b16 %v827, %v823
    %v1128 = vpack.c.b16 %v828, %v824
    %v1129 = vpack.c.b16 %v833, %v829
    %v1130 = vpack.c.b16 %v834, %v830
    %v1131 = vpack.c.b16 %v835, %v831
    %v1132 = vpack.c.b16 %v836, %v832
    %v1133 = vpack.c.b16 %v841, %v837
    %v1134 = vpack.c.b16 %v842, %v838
    %v1135 = vpack.c.b16 %v843, %v839
    %v1136 = vpack.c.b16 %v844, %v840
    %v1137 = vpack.c.b16 %v849, %v845
    %v1138 = vpack.c.b16 %v850, %v846
    %v1139 = vpack.c.b16 %v851, %v847
    %v1140 = vpack.c.b16 %v852, %v848
    %v1141 = vpack.c.b16 %v857, %v853
    %v1142 = vpack.c.b16 %v858, %v854
    %v1143 = vpack.c.b16 %v859, %v855
    %v1144 = vpack.c.b16 %v860, %v856
    %v1145 = vpack.c.b16 %v865, %v861
    %v1146 = vpack.c.b16 %v866, %v862
    %v1147 = vpack.c.b16 %v867, %v863
    %v1148 = vpack.c.b16 %v868, %v864
    %v1149 = vpack.c.b16 %v873, %v869
    %v1150 = vpack.c.b16 %v874, %v870
    %v1151 = vpack.c.b16 %v875, %v871
    %v1152 = vpack.c.b16 %v876, %v872
    %v1153 = vpack.c.b16 %v881, %v877
    %v1154 = vpack.c.b16 %v882, %v878
    %v1155 = vpack.c.b16 %v883, %v879
    %v1156 = vpack.c.b16 %v884, %v880
    %v1157 = vpack.c.b16 %v889, %v885
    %v1158 = vpack.c.b16 %v890, %v886
    %v1159 = vpack.c.b16 %v891, %v887
    %v1160 = vpack.c.b16 %v892, %v888
    %v1161 = vpack.c.b16 %v897, %v893
    %v1162 = vpack.c.b16 %v898, %v894
    %v1163 = vpack.c.b16 %v899, %v895
    %v1164 = vpack.c.b16 %v900, %v896
    %v1165 = vpack.c.b16 %v905, %v901
    %v1166 = vpack.c.b16 %v906, %v902
    %v1167 = vpack.c.b16 %v907, %v903
    %v1168 = vpack.c.b16 %v908, %v904
    %v1169 = vpack.c.b16 %v913, %v909
    %v1170 = vpack.c.b16 %v914, %v910
    %v1171 = vpack.c.b16 %v915, %v911
    %v1172 = vpack.c.b16 %v916, %v912
    %v1173 = vpack.c.b16 %v921, %v917
    %v1174 = vpack.c.b16 %v922, %v918
    %v1175 = vpack.c.b16 %v923, %v919
    %v1176 = vpack.c.b16 %v924, %v920
    %v1177 = vpack.c.b16 %v929, %v925
    %v1178 = vpack.c.b16 %v930, %v926
    %v1179 = vpack.c.b16 %v931, %v927
    %v1180 = vpack.c.b16 %v932, %v928
    %v1181 = vpack.c.b16 %v937, %v933
    %v1182 = vpack.c.b16 %v938, %v934
    %v1183 = vpack.c.b16 %v939, %v935
    %v1184 = vpack.c.b16 %v940, %v936
    %v1185 = vpack.c.b16 %v945, %v941
    %v1186 = vpack.c.b16 %v946, %v942
    %v1187 = vpack.c.b16 %v947, %v943
    %v1188 = vpack.c.b16 %v948, %v944
    %v1189 = vpack.c.b16 %v953, %v949
    %v1190 = vpack.c.b16 %v954, %v950
    %v1191 = vpack.c.b16 %v955, %v951
    %v1192 = vpack.c.b16 %v956, %v952
    %v1193 = vpack.c.b16 %v961, %v957
    %v1194 = vpack.c.b16 %v962, %v958
    %v1195 = vpack.c.b16 %v963, %v959
    %v1196 = vpack.c.b16 %v964, %v960
    %v1197 = vpack.c.b16 %v969, %v965
    %v1198 = vpack.c.b16 %v970, %v966
    %v1199 = vpack.c.b16 %v971, %v967
    %v1200 = vpack.c.b16 %v972, %v968
    %v1201 = vpack.c.b16 %v977, %v973
    %v1202 = vpack.c.b16 %v978, %v974
    %v1203 = vpack.c.b16 %v979, %v975
    %v1204 = vpack.c.b16 %v980, %v976
    %1429 = vmatprep.subr.bf16.mxu0 %v982
    %1430 = vmatpush1.bf16.msra.mxu0 %v981
    %1431 = vmatprep.subr.bf16.mxu0 %v986
    %1432 = vmatpush1.bf16.msra.mxu0 %v985
    %1433 = vmatprep.subr.bf16.mxu0 %v990
    %1434 = vmatpush1.bf16.msra.mxu0 %v989
    %1435 = vmatprep.subr.bf16.mxu0 %v994
    %1436 = vmatpush1.bf16.msra.mxu0 %v993
    %1437 = vmatprep.subr.bf16.mxu0 %v998
    %1438 = vmatpush1.bf16.msra.mxu0 %v997
    %1439 = vmatprep.subr.bf16.mxu0 %v1002
    %1440 = vmatpush1.bf16.msra.mxu0 %v1001
    %1441 = vmatprep.subr.bf16.mxu0 %v1006
    %1442 = vmatpush1.bf16.msra.mxu0 %v1005
    %1443 = vmatprep.subr.bf16.mxu0 %v1010
    %1444 = vmatpush1.bf16.msra.mxu0 %v1009
    %1445 = vmatprep.subr.bf16.mxu0 %v1014
    %1446 = vmatpush1.bf16.msra.mxu0 %v1013
    %1447 = vmatprep.subr.bf16.mxu0 %v1018
    %1448 = vmatpush1.bf16.msra.mxu0 %v1017
    %1449 = vmatprep.subr.bf16.mxu0 %v1022
    %1450 = vmatpush1.bf16.msra.mxu0 %v1021
    %1451 = vmatprep.subr.bf16.mxu0 %v1026
    %1452 = vmatpush1.bf16.msra.mxu0 %v1025
    %1453 = vmatprep.subr.bf16.mxu0 %v1030
    %1454 = vmatpush1.bf16.msra.mxu0 %v1029
    %1455 = vmatprep.subr.bf16.mxu0 %v1034
    %1456 = vmatpush1.bf16.msra.mxu0 %v1033
    %1457 = vmatprep.subr.bf16.mxu0 %v1038
    %1458 = vmatpush1.bf16.msra.mxu0 %v1037
    %1459 = vmatprep.subr.bf16.mxu0 %v1042
    %1460 = vmatpush1.bf16.msra.mxu0 %v1041
    %1461 = vmatprep.mubr.bf16.mxu0 %v57
    %1462 = vmatmul.mubr.bf16.gmra.mrb[0].mxu0 %v56
    %v1463 = vpop.f32.mrb[0].mxu0
    %v1464 = vadd.f32 %v292, %v1463
    %v1465 = vpop.f32.mrb[0].mxu0
    %v1466 = vadd.f32 %v296, %v1465
    %v1467 = vpop.f32.mrb[0].mxu0
    %v1468 = vpop.f32.mrb[0].mxu0
    %1469 = vdwg.mxu0
    %1470 = vmatprep.subr.bf16.mxu0 %v1046
    %1471 = vmatpush1.bf16.msra.mxu0 %v1045
    %1472 = vmatprep.subr.bf16.mxu0 %v1050
    %1473 = vmatpush1.bf16.msra.mxu0 %v1049
    %1474 = vmatprep.subr.bf16.mxu0 %v1054
    %1475 = vmatpush1.bf16.msra.mxu0 %v1053
    %1476 = vmatprep.subr.bf16.mxu0 %v1058
    %1477 = vmatpush1.bf16.msra.mxu0 %v1057
    %1478 = vmatprep.subr.bf16.mxu0 %v1062
    %1479 = vmatpush1.bf16.msra.mxu0 %v1061
    %1480 = vmatprep.subr.bf16.mxu0 %v1066
    %1481 = vmatpush1.bf16.msra.mxu0 %v1065
    %1482 = vmatprep.subr.bf16.mxu0 %v1070
    %1483 = vmatpush1.bf16.msra.mxu0 %v1069
    %1484 = vmatprep.subr.bf16.mxu0 %v1074
    %1485 = vmatpush1.bf16.msra.mxu0 %v1073
    %1486 = vmatprep.subr.bf16.mxu0 %v1078
    %1487 = vmatpush1.bf16.msra.mxu0 %v1077
    %1488 = vmatprep.subr.bf16.mxu0 %v1082
    %1489 = vmatpush1.bf16.msra.mxu0 %v1081
    %1490 = vmatprep.subr.bf16.mxu0 %v1086
    %1491 = vmatpush1.bf16.msra.mxu0 %v1085
    %1492 = vmatprep.subr.bf16.mxu0 %v1090
    %1493 = vmatpush1.bf16.msra.mxu0 %v1089
    %1494 = vmatprep.subr.bf16.mxu0 %v1094
    %1495 = vmatpush1.bf16.msra.mxu0 %v1093
    %1496 = vmatprep.subr.bf16.mxu0 %v1098
    %1497 = vmatpush1.bf16.msra.mxu0 %v1097
    %1498 = vmatprep.subr.bf16.mxu0 %v1102
    %1499 = vmatpush1.bf16.msra.mxu0 %v1101
    %1500 = vmatprep.subr.bf16.mxu0 %v1106
    %1501 = vmatpush1.bf16.msra.mxu0 %v1105
    %1502 = vmatprep.mubr.bf16.mxu0 %v59
    %1503 = vmatmul.mubr.bf16.gmra.mrb[0].mxu0 %v58
    %v1504 = vpop.f32.mrb[0].mxu0
    %v1505 = vadd.f32 %v1464, %v1504
    %v1506 = vpop.f32.mrb[0].mxu0
    %v1507 = vadd.f32 %v1466, %v1506
    %v1508 = vpop.f32.mrb[0].mxu0
    %v1509 = vpop.f32.mrb[0].mxu0
    %1510 = vdwg.mxu0
    %1511 = vmatprep.subr.bf16.mxu0 %v1110
    %1512 = vmatpush1.bf16.msra.mxu0 %v1109
    %1513 = vmatprep.subr.bf16.mxu0 %v1114
    %1514 = vmatpush1.bf16.msra.mxu0 %v1113
    %1515 = vmatprep.subr.bf16.mxu0 %v1118
    %1516 = vmatpush1.bf16.msra.mxu0 %v1117
    %1517 = vmatprep.subr.bf16.mxu0 %v1122
    %1518 = vmatpush1.bf16.msra.mxu0 %v1121
    %1519 = vmatprep.subr.bf16.mxu0 %v1126
    %1520 = vmatpush1.bf16.msra.mxu0 %v1125
    %1521 = vmatprep.subr.bf16.mxu0 %v1130
    %1522 = vmatpush1.bf16.msra.mxu0 %v1129
    %1523 = vmatprep.subr.bf16.mxu0 %v1134
    %1524 = vmatpush1.bf16.msra.mxu0 %v1133
    %1525 = vmatprep.subr.bf16.mxu0 %v1138
    %1526 = vmatpush1.bf16.msra.mxu0 %v1137
    %1527 = vmatprep.subr.bf16.mxu0 %v1142
    %1528 = vmatpush1.bf16.msra.mxu0 %v1141
    %1529 = vmatprep.subr.bf16.mxu0 %v1146
    %1530 = vmatpush1.bf16.msra.mxu0 %v1145
    %1531 = vmatprep.subr.bf16.mxu0 %v1150
    %1532 = vmatpush1.bf16.msra.mxu0 %v1149
    %1533 = vmatprep.subr.bf16.mxu0 %v1154
    %1534 = vmatpush1.bf16.msra.mxu0 %v1153
    %1535 = vmatprep.subr.bf16.mxu0 %v1158
    %1536 = vmatpush1.bf16.msra.mxu0 %v1157
    %1537 = vmatprep.subr.bf16.mxu0 %v1162
    %1538 = vmatpush1.bf16.msra.mxu0 %v1161
    %1539 = vmatprep.subr.bf16.mxu0 %v1166
    %1540 = vmatpush1.bf16.msra.mxu0 %v1165
    %1541 = vmatprep.subr.bf16.mxu0 %v1170
    %1542 = vmatpush1.bf16.msra.mxu0 %v1169
    %1543 = vmatprep.mubr.bf16.mxu0 %v61
    %1544 = vmatmul.mubr.bf16.gmra.mrb[0].mxu0 %v60
    %v1545 = vpop.f32.mrb[0].mxu0
    %v1546 = vadd.f32 %v1505, %v1545
    %v1547 = vpop.f32.mrb[0].mxu0
    %v1548 = vadd.f32 %v1507, %v1547
    %v1549 = vpop.f32.mrb[0].mxu0
    %v1550 = vpop.f32.mrb[0].mxu0
    %1551 = vdwg.mxu0
    %1552 = vmatprep.subr.bf16.mxu0 %v1174
    %1553 = vmatpush1.bf16.msra.mxu0 %v1173
    %1554 = vmatprep.subr.bf16.mxu0 %v1178
    %1555 = vmatpush1.bf16.msra.mxu0 %v1177
    %1556 = vmatprep.subr.bf16.mxu0 %v1182
    %1557 = vmatpush1.bf16.msra.mxu0 %v1181
    %1558 = vmatprep.subr.bf16.mxu0 %v1186
    %1559 = vmatpush1.bf16.msra.mxu0 %v1185
    %1560 = vmatprep.subr.bf16.mxu0 %v1190
    %1561 = vmatpush1.bf16.msra.mxu0 %v1189
    %1562 = vmatprep.subr.bf16.mxu0 %v1194
    %1563 = vmatpush1.bf16.msra.mxu0 %v1193
    %1564 = vmatprep.subr.bf16.mxu0 %v1198
    %1565 = vmatpush1.bf16.msra.mxu0 %v1197
    %1566 = vmatprep.subr.bf16.mxu0 %v1202
    %1567 = vmatpush1.bf16.msra.mxu0 %v1201
    %1568 = vmatprep.subr.bf16.mxu0 0
    %1569 = vmatpush1.bf16.msra.mxu0 0
    %1570 = vmatprep.subr.bf16.mxu0 0
    %1571 = vmatpush1.bf16.msra.mxu0 0
    %1572 = vmatprep.subr.bf16.mxu0 0
    %1573 = vmatpush1.bf16.msra.mxu0 0
    %1574 = vmatprep.subr.bf16.mxu0 0
    %1575 = vmatpush1.bf16.msra.mxu0 0
    %1576 = vmatprep.subr.bf16.mxu0 0
    %1577 = vmatpush1.bf16.msra.mxu0 0
    %1578 = vmatprep.subr.bf16.mxu0 0
    %1579 = vmatpush1.bf16.msra.mxu0 0
    %1580 = vmatprep.subr.bf16.mxu0 0
    %1581 = vmatpush1.bf16.msra.mxu0 0
    %1582 = vmatprep.subr.bf16.mxu0 0
    %1583 = vmatpush1.bf16.msra.mxu0 0
    %1584 = vmatprep.mubr.bf16.mxu0 0
    %1585 = vmatmul.mubr.bf16.gmra.mrb[0].mxu0 %v62
    %v1586 = vpop.f32.mrb[0].mxu0
    %v1587 = vadd.f32 %v1546, %v1586
    %v1588 = vpop.f32.mrb[0].mxu0
    %v1589 = vadd.f32 %v1548, %v1588
    %v1590 = vpop.f32.mrb[0].mxu0
    %v1591 = vpop.f32.mrb[0].mxu0
    %1592 = vdwg.mxu0
    %1593 = vmatprep.subr.bf16.mxu0 %v984
    %1594 = vmatpush1.bf16.msra.mxu0 %v983
    %1595 = vmatprep.subr.bf16.mxu0 %v988
    %1596 = vmatpush1.bf16.msra.mxu0 %v987
    %1597 = vmatprep.subr.bf16.mxu0 %v992
    %1598 = vmatpush1.bf16.msra.mxu0 %v991
    %1599 = vmatprep.subr.bf16.mxu0 %v996
    %1600 = vmatpush1.bf16.msra.mxu0 %v995
    %1601 = vmatprep.subr.bf16.mxu0 %v1000
    %1602 = vmatpush1.bf16.msra.mxu0 %v999
    %1603 = vmatprep.subr.bf16.mxu0 %v1004
    %1604 = vmatpush1.bf16.msra.mxu0 %v1003
    %1605 = vmatprep.subr.bf16.mxu0 %v1008
    %1606 = vmatpush1.bf16.msra.mxu0 %v1007
    %1607 = vmatprep.subr.bf16.mxu0 %v1012
    %1608 = vmatpush1.bf16.msra.mxu0 %v1011
    %1609 = vmatprep.subr.bf16.mxu0 %v1016
    %1610 = vmatpush1.bf16.msra.mxu0 %v1015
    %1611 = vmatprep.subr.bf16.mxu0 %v1020
    %1612 = vmatpush1.bf16.msra.mxu0 %v1019
    %1613 = vmatprep.subr.bf16.mxu0 %v1024
    %1614 = vmatpush1.bf16.msra.mxu0 %v1023
    %1615 = vmatprep.subr.bf16.mxu0 %v1028
    %1616 = vmatpush1.bf16.msra.mxu0 %v1027
    %1617 = vmatprep.subr.bf16.mxu0 %v1032
    %1618 = vmatpush1.bf16.msra.mxu0 %v1031
    %1619 = vmatprep.subr.bf16.mxu0 %v1036
    %1620 = vmatpush1.bf16.msra.mxu0 %v1035
    %1621 = vmatprep.subr.bf16.mxu0 %v1040
    %1622 = vmatpush1.bf16.msra.mxu0 %v1039
    %1623 = vmatprep.subr.bf16.mxu0 %v1044
    %1624 = vmatpush1.bf16.msra.mxu0 %v1043
    %1625 = vmatprep.mubr.bf16.mxu0 %v57
    %1626 = vmatmul.mubr.bf16.gmra.mrb[0].mxu0 %v56
    %v1627 = vpop.f32.mrb[0].mxu0
    %v1628 = vadd.f32 %v300, %v1627
    %v1629 = vpop.f32.mrb[0].mxu0
    %v1630 = vadd.f32 %v304, %v1629
    %v1631 = vpop.f32.mrb[0].mxu0
    %v1632 = vpop.f32.mrb[0].mxu0
    %1633 = vdwg.mxu0
    %1634 = vmatprep.subr.bf16.mxu0 %v1048
    %1635 = vmatpush1.bf16.msra.mxu0 %v1047
    %1636 = vmatprep.subr.bf16.mxu0 %v1052
    %1637 = vmatpush1.bf16.msra.mxu0 %v1051
    %1638 = vmatprep.subr.bf16.mxu0 %v1056
    %1639 = vmatpush1.bf16.msra.mxu0 %v1055
    %1640 = vmatprep.subr.bf16.mxu0 %v1060
    %1641 = vmatpush1.bf16.msra.mxu0 %v1059
    %1642 = vmatprep.subr.bf16.mxu0 %v1064
    %1643 = vmatpush1.bf16.msra.mxu0 %v1063
    %1644 = vmatprep.subr.bf16.mxu0 %v1068
    %1645 = vmatpush1.bf16.msra.mxu0 %v1067
    %1646 = vmatprep.subr.bf16.mxu0 %v1072
    %1647 = vmatpush1.bf16.msra.mxu0 %v1071
    %1648 = vmatprep.subr.bf16.mxu0 %v1076
    %1649 = vmatpush1.bf16.msra.mxu0 %v1075
    %1650 = vmatprep.subr.bf16.mxu0 %v1080
    %1651 = vmatpush1.bf16.msra.mxu0 %v1079
    %1652 = vmatprep.subr.bf16.mxu0 %v1084
    %1653 = vmatpush1.bf16.msra.mxu0 %v1083
    %1654 = vmatprep.subr.bf16.mxu0 %v1088
    %1655 = vmatpush1.bf16.msra.mxu0 %v1087
    %1656 = vmatprep.subr.bf16.mxu0 %v1092
    %1657 = vmatpush1.bf16.msra.mxu0 %v1091
    %1658 = vmatprep.subr.bf16.mxu0 %v1096
    %1659 = vmatpush1.bf16.msra.mxu0 %v1095
    %1660 = vmatprep.subr.bf16.mxu0 %v1100
    %1661 = vmatpush1.bf16.msra.mxu0 %v1099
    %1662 = vmatprep.subr.bf16.mxu0 %v1104
    %1663 = vmatpush1.bf16.msra.mxu0 %v1103
    %1664 = vmatprep.subr.bf16.mxu0 %v1108
    %1665 = vmatpush1.bf16.msra.mxu0 %v1107
    %1666 = vmatprep.mubr.bf16.mxu0 %v59
    %1667 = vmatmul.mubr.bf16.gmra.mrb[0].mxu0 %v58
    %v1668 = vpop.f32.mrb[0].mxu0
    %v1669 = vadd.f32 %v1628, %v1668
    %v1670 = vpop.f32.mrb[0].mxu0
    %v1671 = vadd.f32 %v1630, %v1670
    %v1672 = vpop.f32.mrb[0].mxu0
    %v1673 = vpop.f32.mrb[0].mxu0
    %1674 = vdwg.mxu0
    %1675 = vmatprep.subr.bf16.mxu0 %v1112
    %1676 = vmatpush1.bf16.msra.mxu0 %v1111
    %1677 = vmatprep.subr.bf16.mxu0 %v1116
    %1678 = vmatpush1.bf16.msra.mxu0 %v1115
    %1679 = vmatprep.subr.bf16.mxu0 %v1120
    %1680 = vmatpush1.bf16.msra.mxu0 %v1119
    %1681 = vmatprep.subr.bf16.mxu0 %v1124
    %1682 = vmatpush1.bf16.msra.mxu0 %v1123
    %1683 = vmatprep.subr.bf16.mxu0 %v1128
    %1684 = vmatpush1.bf16.msra.mxu0 %v1127
    %1685 = vmatprep.subr.bf16.mxu0 %v1132
    %1686 = vmatpush1.bf16.msra.mxu0 %v1131
    %1687 = vmatprep.subr.bf16.mxu0 %v1136
    %1688 = vmatpush1.bf16.msra.mxu0 %v1135
    %1689 = vmatprep.subr.bf16.mxu0 %v1140
    %1690 = vmatpush1.bf16.msra.mxu0 %v1139
    %1691 = vmatprep.subr.bf16.mxu0 %v1144
    %1692 = vmatpush1.bf16.msra.mxu0 %v1143
    %1693 = vmatprep.subr.bf16.mxu0 %v1148
    %1694 = vmatpush1.bf16.msra.mxu0 %v1147
    %1695 = vmatprep.subr.bf16.mxu0 %v1152
    %1696 = vmatpush1.bf16.msra.mxu0 %v1151
    %1697 = vmatprep.subr.bf16.mxu0 %v1156
    %1698 = vmatpush1.bf16.msra.mxu0 %v1155
    %1699 = vmatprep.subr.bf16.mxu0 %v1160
    %1700 = vmatpush1.bf16.msra.mxu0 %v1159
    %1701 = vmatprep.subr.bf16.mxu0 %v1164
    %1702 = vmatpush1.bf16.msra.mxu0 %v1163
    %1703 = vmatprep.subr.bf16.mxu0 %v1168
    %1704 = vmatpush1.bf16.msra.mxu0 %v1167
    %1705 = vmatprep.subr.bf16.mxu0 %v1172
    %1706 = vmatpush1.bf16.msra.mxu0 %v1171
    %1707 = vmatprep.mubr.bf16.mxu0 %v61
    %1708 = vmatmul.mubr.bf16.gmra.mrb[0].mxu0 %v60
    %v1709 = vpop.f32.mrb[0].mxu0
    %v1710 = vadd.f32 %v1669, %v1709
    %v1711 = vpop.f32.mrb[0].mxu0
    %v1712 = vadd.f32 %v1671, %v1711
    %v1713 = vpop.f32.mrb[0].mxu0
    %v1714 = vpop.f32.mrb[0].mxu0
    %1715 = vdwg.mxu0
    %1716 = vmatprep.subr.bf16.mxu0 %v1176
    %1717 = vmatpush1.bf16.msra.mxu0 %v1175
    %1718 = vmatprep.subr.bf16.mxu0 %v1180
    %1719 = vmatpush1.bf16.msra.mxu0 %v1179
    %1720 = vmatprep.subr.bf16.mxu0 %v1184
    %1721 = vmatpush1.bf16.msra.mxu0 %v1183
    %1722 = vmatprep.subr.bf16.mxu0 %v1188
    %1723 = vmatpush1.bf16.msra.mxu0 %v1187
    %1724 = vmatprep.subr.bf16.mxu0 %v1192
    %1725 = vmatpush1.bf16.msra.mxu0 %v1191
    %1726 = vmatprep.subr.bf16.mxu0 %v1196
    %1727 = vmatpush1.bf16.msra.mxu0 %v1195
    %1728 = vmatprep.subr.bf16.mxu0 %v1200
    %1729 = vmatpush1.bf16.msra.mxu0 %v1199
    %1730 = vmatprep.subr.bf16.mxu0 %v1204
    %1731 = vmatpush1.bf16.msra.mxu0 %v1203
    %1732 = vmatprep.subr.bf16.mxu0 0
    %1733 = vmatpush1.bf16.msra.mxu0 0
    %1734 = vmatprep.subr.bf16.mxu0 0
    %1735 = vmatpush1.bf16.msra.mxu0 0
    %1736 = vmatprep.subr.bf16.mxu0 0
    %1737 = vmatpush1.bf16.msra.mxu0 0
    %1738 = vmatprep.subr.bf16.mxu0 0
    %1739 = vmatpush1.bf16.msra.mxu0 0
    %1740 = vmatprep.subr.bf16.mxu0 0
    %1741 = vmatpush1.bf16.msra.mxu0 0
    %1742 = vmatprep.subr.bf16.mxu0 0
    %1743 = vmatpush1.bf16.msra.mxu0 0
    %1744 = vmatprep.subr.bf16.mxu0 0
    %1745 = vmatpush1.bf16.msra.mxu0 0
    %1746 = vmatprep.subr.bf16.mxu0 0
    %1747 = vmatpush1.bf16.msra.mxu0 0
    %1748 = vmatprep.mubr.bf16.mxu0 0
    %1749 = vmatmul.mubr.bf16.gmra.mrb[0].mxu0 %v62
    %v1750 = vpop.f32.mrb[0].mxu0
    %v1751 = vadd.f32 %v1710, %v1750
    %v1752 = vpop.f32.mrb[0].mxu0
    %v1753 = vadd.f32 %v1712, %v1752
    %v1754 = vpop.f32.mrb[0].mxu0
    %v1755 = vpop.f32.mrb[0].mxu0
    %1756 = vdwg.mxu0
    %v1757 = vmax.f32 %v1587, 0.0
    %v1758 = vmax.f32 %v1589, 0.0
    %v1759 = vmax.f32 %v1751, 0.0
    %v1760 = vmax.f32 %v1753, 0.0
    %v1761 = vpack.c.bf16 %v1757, %v1757
    %v1762 = vpack.c.bf16 %v1758, %v1758
    %v1763 = vpack.c.bf16 %v1759, %v1759
    %v1764 = vpack.c.bf16 %v1760, %v1760
    %v1765 = vld [vmem:[%s3] sm:$0xff]
    %v1766 = vld [vmem:[%s3 + $0x8] sm:$0xff]
    %v1767 = vld [vmem:[%s3 + $0x10] sm:$0xff]
    %v1768 = vld [vmem:[%s3 + $0x18] sm:$0xff]
    %v1769 = vld [vmem:[%s3 + $0x20] sm:$0xff]
    %v1770 = vld [vmem:[%s3 + $0x28] sm:$0xff]
    %v1771 = vld [vmem:[%s3 + $0x30] sm:$0xff]
    %v1772 = vld [vmem:[%s3 + $0x38] sm:$0xff]
    %v1773 = vld [vmem:[%s3 + $0x40] sm:$0xff]
    %v1774 = vld [vmem:[%s3 + $0x48] sm:$0xff]
    %v1775 = vld [vmem:[%s3 + $0x50] sm:$0xff]
    %v1776 = vld [vmem:[%s3 + $0x58] sm:$0xff]
    %v1777 = vld [vmem:[%s3 + $0x60] sm:$0xff]
    %v1778 = vld [vmem:[%s3 + $0x68] sm:$0xff]
    %v1779 = vld [vmem:[%s3 + $0x70] sm:$0xff]
    %v1780 = vld [vmem:[%s3 + $0x78] sm:$0xff]
    %v1781 = vld [vmem:[%s3 + $0x80] sm:$0xff]
    %v1782 = vld [vmem:[%s3 + $0x88] sm:$0xff]
    %v1783 = vld [vmem:[%s3 + $0x90] sm:$0xff]
    %v1784 = vld [vmem:[%s3 + $0x98] sm:$0xff]
    %v1785 = vld [vmem:[%s3 + $0xa0] sm:$0xff]
    %v1786 = vld [vmem:[%s3 + $0xa8] sm:$0xff]
    %v1787 = vld [vmem:[%s3 + $0xb0] sm:$0xff]
    %v1788 = vld [vmem:[%s3 + $0xb8] sm:$0xff]
    %v1789 = vld [vmem:[%s3 + $0xc0] sm:$0xff]
    %v1790 = vld [vmem:[%s3 + $0xc8] sm:$0xff]
    %v1791 = vld [vmem:[%s3 + $0xd0] sm:$0xff]
    %v1792 = vld [vmem:[%s3 + $0xd8] sm:$0xff]
    %v1793 = vld [vmem:[%s3 + $0xe0] sm:$0xff]
    %v1794 = vld [vmem:[%s3 + $0xe8] sm:$0xff]
    %v1795 = vld [vmem:[%s3 + $0xf0] sm:$0xff]
    %v1796 = vld [vmem:[%s3 + $0xf8] sm:$0xff]
    %v1797 = vld [vmem:[%s3 + $0x100] sm:$0xff]
    %v1798 = vld [vmem:[%s3 + $0x108] sm:$0xff]
    %v1799 = vld [vmem:[%s3 + $0x110] sm:$0xff]
    %v1800 = vld [vmem:[%s3 + $0x118] sm:$0xff]
    %v1801 = vld [vmem:[%s3 + $0x120] sm:$0xff]
    %v1802 = vld [vmem:[%s3 + $0x128] sm:$0xff]
    %v1803 = vld [vmem:[%s3 + $0x130] sm:$0xff]
    %v1804 = vld [vmem:[%s3 + $0x138] sm:$0xff]
    %v1805 = vld [vmem:[%s3 + $0x140] sm:$0xff]
    %v1806 = vld [vmem:[%s3 + $0x148] sm:$0xff]
    %v1807 = vld [vmem:[%s3 + $0x150] sm:$0xff]
    %v1808 = vld [vmem:[%s3 + $0x158] sm:$0xff]
    %v1809 = vld [vmem:[%s3 + $0x160] sm:$0xff]
    %v1810 = vld [vmem:[%s3 + $0x168] sm:$0xff]
    %v1811 = vld [vmem:[%s3 + $0x170] sm:$0xff]
    %v1812 = vld [vmem:[%s3 + $0x178] sm:$0xff]
    %v1813 = vld [vmem:[%s3 + $0x180] sm:$0xff]
    %v1814 = vld [vmem:[%s3 + $0x188] sm:$0xff]
    %v1815 = vld [vmem:[%s3 + $0x190] sm:$0xff]
    %v1816 = vld [vmem:[%s3 + $0x198] sm:$0xff]
    %v1817 = vld [vmem:[%s3 + $0x1a0] sm:$0xff]
    %v1818 = vld [vmem:[%s3 + $0x1a8] sm:$0xff]
    %v1819 = vld [vmem:[%s3 + $0x1b0] sm:$0xff]
    %v1820 = vld [vmem:[%s3 + $0x1b8] sm:$0xff]
    %v1821 = vld [vmem:[%s3 + $0x1c0] sm:$0xff]
    %v1822 = vld [vmem:[%s3 + $0x1c8] sm:$0xff]
    %v1823 = vld [vmem:[%s3 + $0x1d0] sm:$0xff]
    %v1824 = vld [vmem:[%s3 + $0x1d8] sm:$0xff]
    %v1825 = vld [vmem:[%s3 + $0x1e0] sm:$0xff]
    %v1826 = vld [vmem:[%s3 + $0x1e8] sm:$0xff]
    %v1827 = vld [vmem:[%s3 + $0x1f0] sm:$0xff]
    %v1828 = vld [vmem:[%s3 + $0x1f8] sm:$0xff]
    %v1829 = vld [vmem:[%s4] sm:$0x3]
    %v1831 = vlaneseq
    %v1832 = vshrl.u32 %v1831, 7
    %v1833 = vsub.s32 0, %v1832
    %v1834 = vrot.slane %v1829, %v1833
    %v1835 = vlaneseq
    %v1836 = vshrl.u32 %v1835, 7
    %v1837 = vsub.s32 1, %v1836
    %v1838 = vrot.slane %v1829, %v1837
    %v1905 = vunpack.c.l.b16 %v1765
    %v1906 = vunpack.c.h.b16 %v1765
    %v1907 = vunpack.c.l.b16 %v1766
    %v1908 = vunpack.c.h.b16 %v1766
    %v1909 = vunpack.c.l.b16 %v1767
    %v1910 = vunpack.c.h.b16 %v1767
    %v1911 = vunpack.c.l.b16 %v1768
    %v1912 = vunpack.c.h.b16 %v1768
    %v1913 = vunpack.c.l.b16 %v1769
    %v1914 = vunpack.c.h.b16 %v1769
    %v1915 = vunpack.c.l.b16 %v1770
    %v1916 = vunpack.c.h.b16 %v1770
    %v1917 = vunpack.c.l.b16 %v1771
    %v1918 = vunpack.c.h.b16 %v1771
    %v1919 = vunpack.c.l.b16 %v1772
    %v1920 = vunpack.c.h.b16 %v1772
    %v1921 = vunpack.c.l.b16 %v1773
    %v1922 = vunpack.c.h.b16 %v1773
    %v1923 = vunpack.c.l.b16 %v1774
    %v1924 = vunpack.c.h.b16 %v1774
    %v1925 = vunpack.c.l.b16 %v1775
    %v1926 = vunpack.c.h.b16 %v1775
    %v1927 = vunpack.c.l.b16 %v1776
    %v1928 = vunpack.c.h.b16 %v1776
    %v1929 = vunpack.c.l.b16 %v1777
    %v1930 = vunpack.c.h.b16 %v1777
    %v1931 = vunpack.c.l.b16 %v1778
    %v1932 = vunpack.c.h.b16 %v1778
    %v1933 = vunpack.c.l.b16 %v1779
    %v1934 = vunpack.c.h.b16 %v1779
    %v1935 = vunpack.c.l.b16 %v1780
    %v1936 = vunpack.c.h.b16 %v1780
    %v1937 = vunpack.c.l.b16 %v1781
    %v1938 = vunpack.c.h.b16 %v1781
    %v1939 = vunpack.c.l.b16 %v1782
    %v1940 = vunpack.c.h.b16 %v1782
    %v1941 = vunpack.c.l.b16 %v1783
    %v1942 = vunpack.c.h.b16 %v1783
    %v1943 = vunpack.c.l.b16 %v1784
    %v1944 = vunpack.c.h.b16 %v1784
    %v1945 = vunpack.c.l.b16 %v1785
    %v1946 = vunpack.c.h.b16 %v1785
    %v1947 = vunpack.c.l.b16 %v1786
    %v1948 = vunpack.c.h.b16 %v1786
    %v1949 = vunpack.c.l.b16 %v1787
    %v1950 = vunpack.c.h.b16 %v1787
    %v1951 = vunpack.c.l.b16 %v1788
    %v1952 = vunpack.c.h.b16 %v1788
    %v1953 = vunpack.c.l.b16 %v1789
    %v1954 = vunpack.c.h.b16 %v1789
    %v1955 = vunpack.c.l.b16 %v1790
    %v1956 = vunpack.c.h.b16 %v1790
    %v1957 = vunpack.c.l.b16 %v1791
    %v1958 = vunpack.c.h.b16 %v1791
    %v1959 = vunpack.c.l.b16 %v1792
    %v1960 = vunpack.c.h.b16 %v1792
    %v1961 = vunpack.c.l.b16 %v1793
    %v1962 = vunpack.c.h.b16 %v1793
    %v1963 = vunpack.c.l.b16 %v1794
    %v1964 = vunpack.c.h.b16 %v1794
    %v1965 = vunpack.c.l.b16 %v1795
    %v1966 = vunpack.c.h.b16 %v1795
    %v1967 = vunpack.c.l.b16 %v1796
    %v1968 = vunpack.c.h.b16 %v1796
    %v1969 = vunpack.c.l.b16 %v1797
    %v1970 = vunpack.c.h.b16 %v1797
    %v1971 = vunpack.c.l.b16 %v1798
    %v1972 = vunpack.c.h.b16 %v1798
    %v1973 = vunpack.c.l.b16 %v1799
    %v1974 = vunpack.c.h.b16 %v1799
    %v1975 = vunpack.c.l.b16 %v1800
    %v1976 = vunpack.c.h.b16 %v1800
    %v1977 = vunpack.c.l.b16 %v1801
    %v1978 = vunpack.c.h.b16 %v1801
    %v1979 = vunpack.c.l.b16 %v1802
    %v1980 = vunpack.c.h.b16 %v1802
    %v1981 = vunpack.c.l.b16 %v1803
    %v1982 = vunpack.c.h.b16 %v1803
    %v1983 = vunpack.c.l.b16 %v1804
    %v1984 = vunpack.c.h.b16 %v1804
    %v1985 = vunpack.c.l.b16 %v1805
    %v1986 = vunpack.c.h.b16 %v1805
    %v1987 = vunpack.c.l.b16 %v1806
    %v1988 = vunpack.c.h.b16 %v1806
    %v1989 = vunpack.c.l.b16 %v1807
    %v1990 = vunpack.c.h.b16 %v1807
    %v1991 = vunpack.c.l.b16 %v1808
    %v1992 = vunpack.c.h.b16 %v1808
    %v1993 = vunpack.c.l.b16 %v1809
    %v1994 = vunpack.c.h.b16 %v1809
    %v1995 = vunpack.c.l.b16 %v1810
    %v1996 = vunpack.c.h.b16 %v1810
    %v1997 = vunpack.c.l.b16 %v1811
    %v1998 = vunpack.c.h.b16 %v1811
    %v1999 = vunpack.c.l.b16 %v1812
    %v2000 = vunpack.c.h.b16 %v1812
    %v2001 = vunpack.c.l.b16 %v1813
    %v2002 = vunpack.c.h.b16 %v1813
    %v2003 = vunpack.c.l.b16 %v1814
    %v2004 = vunpack.c.h.b16 %v1814
    %v2005 = vunpack.c.l.b16 %v1815
    %v2006 = vunpack.c.h.b16 %v1815
    %v2007 = vunpack.c.l.b16 %v1816
    %v2008 = vunpack.c.h.b16 %v1816
    %v2009 = vunpack.c.l.b16 %v1817
    %v2010 = vunpack.c.h.b16 %v1817
    %v2011 = vunpack.c.l.b16 %v1818
    %v2012 = vunpack.c.h.b16 %v1818
    %v2013 = vunpack.c.l.b16 %v1819
    %v2014 = vunpack.c.h.b16 %v1819
    %v2015 = vunpack.c.l.b16 %v1820
    %v2016 = vunpack.c.h.b16 %v1820
    %v2017 = vunpack.c.l.b16 %v1821
    %v2018 = vunpack.c.h.b16 %v1821
    %v2019 = vunpack.c.l.b16 %v1822
    %v2020 = vunpack.c.h.b16 %v1822
    %v2021 = vunpack.c.l.b16 %v1823
    %v2022 = vunpack.c.h.b16 %v1823
    %v2023 = vunpack.c.l.b16 %v1824
    %v2024 = vunpack.c.h.b16 %v1824
    %v2025 = vunpack.c.l.b16 %v1825
    %v2026 = vunpack.c.h.b16 %v1825
    %v2027 = vunpack.c.l.b16 %v1826
    %v2028 = vunpack.c.h.b16 %v1826
    %v2029 = vunpack.c.l.b16 %v1827
    %v2030 = vunpack.c.h.b16 %v1827
    %v2031 = vunpack.c.l.b16 %v1828
    %v2032 = vunpack.c.h.b16 %v1828
    %v2033 = vpack.c.b16 %v1907, %v1905
    %v2034 = vpack.c.b16 %v1908, %v1906
    %v2035 = vpack.c.b16 %v1911, %v1909
    %v2036 = vpack.c.b16 %v1912, %v1910
    %v2037 = vpack.c.b16 %v1915, %v1913
    %v2038 = vpack.c.b16 %v1916, %v1914
    %v2039 = vpack.c.b16 %v1919, %v1917
    %v2040 = vpack.c.b16 %v1920, %v1918
    %v2041 = vpack.c.b16 %v1923, %v1921
    %v2042 = vpack.c.b16 %v1924, %v1922
    %v2043 = vpack.c.b16 %v1927, %v1925
    %v2044 = vpack.c.b16 %v1928, %v1926
    %v2045 = vpack.c.b16 %v1931, %v1929
    %v2046 = vpack.c.b16 %v1932, %v1930
    %v2047 = vpack.c.b16 %v1935, %v1933
    %v2048 = vpack.c.b16 %v1936, %v1934
    %v2049 = vpack.c.b16 %v1939, %v1937
    %v2050 = vpack.c.b16 %v1940, %v1938
    %v2051 = vpack.c.b16 %v1943, %v1941
    %v2052 = vpack.c.b16 %v1944, %v1942
    %v2053 = vpack.c.b16 %v1947, %v1945
    %v2054 = vpack.c.b16 %v1948, %v1946
    %v2055 = vpack.c.b16 %v1951, %v1949
    %v2056 = vpack.c.b16 %v1952, %v1950
    %v2057 = vpack.c.b16 %v1955, %v1953
    %v2058 = vpack.c.b16 %v1956, %v1954
    %v2059 = vpack.c.b16 %v1959, %v1957
    %v2060 = vpack.c.b16 %v1960, %v1958
    %v2061 = vpack.c.b16 %v1963, %v1961
    %v2062 = vpack.c.b16 %v1964, %v1962
    %v2063 = vpack.c.b16 %v1967, %v1965
    %v2064 = vpack.c.b16 %v1968, %v1966
    %v2065 = vpack.c.b16 %v1971, %v1969
    %v2066 = vpack.c.b16 %v1972, %v1970
    %v2067 = vpack.c.b16 %v1975, %v1973
    %v2068 = vpack.c.b16 %v1976, %v1974
    %v2069 = vpack.c.b16 %v1979, %v1977
    %v2070 = vpack.c.b16 %v1980, %v1978
    %v2071 = vpack.c.b16 %v1983, %v1981
    %v2072 = vpack.c.b16 %v1984, %v1982
    %v2073 = vpack.c.b16 %v1987, %v1985
    %v2074 = vpack.c.b16 %v1988, %v1986
    %v2075 = vpack.c.b16 %v1991, %v1989
    %v2076 = vpack.c.b16 %v1992, %v1990
    %v2077 = vpack.c.b16 %v1995, %v1993
    %v2078 = vpack.c.b16 %v1996, %v1994
    %v2079 = vpack.c.b16 %v1999, %v1997
    %v2080 = vpack.c.b16 %v2000, %v1998
    %v2081 = vpack.c.b16 %v2003, %v2001
    %v2082 = vpack.c.b16 %v2004, %v2002
    %v2083 = vpack.c.b16 %v2007, %v2005
    %v2084 = vpack.c.b16 %v2008, %v2006
    %v2085 = vpack.c.b16 %v2011, %v2009
    %v2086 = vpack.c.b16 %v2012, %v2010
    %v2087 = vpack.c.b16 %v2015, %v2013
    %v2088 = vpack.c.b16 %v2016, %v2014
    %v2089 = vpack.c.b16 %v2019, %v2017
    %v2090 = vpack.c.b16 %v2020, %v2018
    %v2091 = vpack.c.b16 %v2023, %v2021
    %v2092 = vpack.c.b16 %v2024, %v2022
    %v2093 = vpack.c.b16 %v2027, %v2025
    %v2094 = vpack.c.b16 %v2028, %v2026
    %v2095 = vpack.c.b16 %v2031, %v2029
    %v2096 = vpack.c.b16 %v2032, %v2030
    %2161 = vmatprep.subr.bf16.mxu0 %v2034
    %2162 = vmatpush1.bf16.msra.mxu0 %v2033
    %2163 = vmatprep.subr.bf16.mxu0 %v2036
    %2164 = vmatpush1.bf16.msra.mxu0 %v2035
    %2165 = vmatprep.subr.bf16.mxu0 %v2038
    %2166 = vmatpush1.bf16.msra.mxu0 %v2037
    %2167 = vmatprep.subr.bf16.mxu0 %v2040
    %2168 = vmatpush1.bf16.msra.mxu0 %v2039
    %2169 = vmatprep.subr.bf16.mxu0 %v2042
    %2170 = vmatpush1.bf16.msra.mxu0 %v2041
    %2171 = vmatprep.subr.bf16.mxu0 %v2044
    %2172 = vmatpush1.bf16.msra.mxu0 %v2043
    %2173 = vmatprep.subr.bf16.mxu0 %v2046
    %2174 = vmatpush1.bf16.msra.mxu0 %v2045
    %2175 = vmatprep.subr.bf16.mxu0 %v2048
    %2176 = vmatpush1.bf16.msra.mxu0 %v2047
    %2177 = vmatprep.subr.bf16.mxu0 %v2050
    %2178 = vmatpush1.bf16.msra.mxu0 %v2049
    %2179 = vmatprep.subr.bf16.mxu0 %v2052
    %2180 = vmatpush1.bf16.msra.mxu0 %v2051
    %2181 = vmatprep.subr.bf16.mxu0 %v2054
    %2182 = vmatpush1.bf16.msra.mxu0 %v2053
    %2183 = vmatprep.subr.bf16.mxu0 %v2056
    %2184 = vmatpush1.bf16.msra.mxu0 %v2055
    %2185 = vmatprep.subr.bf16.mxu0 %v2058
    %2186 = vmatpush1.bf16.msra.mxu0 %v2057
    %2187 = vmatprep.subr.bf16.mxu0 %v2060
    %2188 = vmatpush1.bf16.msra.mxu0 %v2059
    %2189 = vmatprep.subr.bf16.mxu0 %v2062
    %2190 = vmatpush1.bf16.msra.mxu0 %v2061
    %2191 = vmatprep.subr.bf16.mxu0 %v2064
    %2192 = vmatpush1.bf16.msra.mxu0 %v2063
    %2193 = vmatprep.mubr.bf16.mxu0 %v1762
    %2194 = vmatmul.mubr.bf16.gmra.mrb[0].mxu0 %v1761
    %v2195 = vpop.f32.mrb[0].mxu0
    %v2196 = vadd.f32 %v1834, %v2195
    %v2197 = vpop.f32.mrb[0].mxu0
    %v2198 = vadd.f32 %v1838, %v2197
    %v2199 = vpop.f32.mrb[0].mxu0
    %v2200 = vpop.f32.mrb[0].mxu0
    %2201 = vdwg.mxu0
    %2202 = vmatprep.subr.bf16.mxu0 %v2066
    %2203 = vmatpush1.bf16.msra.mxu0 %v2065
    %2204 = vmatprep.subr.bf16.mxu0 %v2068
    %2205 = vmatpush1.bf16.msra.mxu0 %v2067
    %2206 = vmatprep.subr.bf16.mxu0 %v2070
    %2207 = vmatpush1.bf16.msra.mxu0 %v2069
    %2208 = vmatprep.subr.bf16.mxu0 %v2072
    %2209 = vmatpush1.bf16.msra.mxu0 %v2071
    %2210 = vmatprep.subr.bf16.mxu0 %v2074
    %2211 = vmatpush1.bf16.msra.mxu0 %v2073
    %2212 = vmatprep.subr.bf16.mxu0 %v2076
    %2213 = vmatpush1.bf16.msra.mxu0 %v2075
    %2214 = vmatprep.subr.bf16.mxu0 %v2078
    %2215 = vmatpush1.bf16.msra.mxu0 %v2077
    %2216 = vmatprep.subr.bf16.mxu0 %v2080
    %2217 = vmatpush1.bf16.msra.mxu0 %v2079
    %2218 = vmatprep.subr.bf16.mxu0 %v2082
    %2219 = vmatpush1.bf16.msra.mxu0 %v2081
    %2220 = vmatprep.subr.bf16.mxu0 %v2084
    %2221 = vmatpush1.bf16.msra.mxu0 %v2083
    %2222 = vmatprep.subr.bf16.mxu0 %v2086
    %2223 = vmatpush1.bf16.msra.mxu0 %v2085
    %2224 = vmatprep.subr.bf16.mxu0 %v2088
    %2225 = vmatpush1.bf16.msra.mxu0 %v2087
    %2226 = vmatprep.subr.bf16.mxu0 %v2090
    %2227 = vmatpush1.bf16.msra.mxu0 %v2089
    %2228 = vmatprep.subr.bf16.mxu0 %v2092
    %2229 = vmatpush1.bf16.msra.mxu0 %v2091
    %2230 = vmatprep.subr.bf16.mxu0 %v2094
    %2231 = vmatpush1.bf16.msra.mxu0 %v2093
    %2232 = vmatprep.subr.bf16.mxu0 %v2096
    %2233 = vmatpush1.bf16.msra.mxu0 %v2095
    %2234 = vmatprep.mubr.bf16.mxu0 %v1764
    %2235 = vmatmul.mubr.bf16.gmra.mrb[0].mxu0 %v1763
    %v2236 = vpop.f32.mrb[0].mxu0
    %v2237 = vadd.f32 %v2196, %v2236
    %v2238 = vpop.f32.mrb[0].mxu0
    %v2239 = vadd.f32 %v2198, %v2238
    %v2240 = vpop.f32.mrb[0].mxu0
    %v2241 = vpop.f32.mrb[0].mxu0
    %2242 = vdwg.mxu0
    %v2243 = vmax.f32 %v2237, 0.0
    %v2244 = vmax.f32 %v2239, 0.0
    %v2245 = vpack.c.bf16 %v2243, %v2243
    %v2246 = vpack.c.bf16 %v2244, %v2244
    %v2247 = vld [vmem:[%s5] sm:$0xf]
    %v2248 = vld [vmem:[%s5 + $0x4] sm:$0xf]
    %v2249 = vld [vmem:[%s5 + $0x8] sm:$0xf]
    %v2250 = vld [vmem:[%s5 + $0xc] sm:$0xf]
    %v2251 = vld [vmem:[%s5 + $0x10] sm:$0xf]
    %v2252 = vld [vmem:[%s5 + $0x14] sm:$0xf]
    %v2253 = vld [vmem:[%s5 + $0x18] sm:$0xf]
    %v2254 = vld [vmem:[%s5 + $0x1c] sm:$0xf]
    %v2255 = vld [vmem:[%s5 + $0x20] sm:$0xf]
    %v2256 = vld [vmem:[%s5 + $0x24] sm:$0xf]
    %v2257 = vld [vmem:[%s5 + $0x28] sm:$0xf]
    %v2258 = vld [vmem:[%s5 + $0x2c] sm:$0xf]
    %v2259 = vld [vmem:[%s5 + $0x30] sm:$0xf]
    %v2260 = vld [vmem:[%s5 + $0x34] sm:$0xf]
    %v2261 = vld [vmem:[%s5 + $0x38] sm:$0xf]
    %v2262 = vld [vmem:[%s5 + $0x3c] sm:$0xf]
    %v2263 = vld [vmem:[%s5 + $0x40] sm:$0xf]
    %v2264 = vld [vmem:[%s5 + $0x44] sm:$0xf]
    %v2265 = vld [vmem:[%s5 + $0x48] sm:$0xf]
    %v2266 = vld [vmem:[%s5 + $0x4c] sm:$0xf]
    %v2267 = vld [vmem:[%s5 + $0x50] sm:$0xf]
    %v2268 = vld [vmem:[%s5 + $0x54] sm:$0xf]
    %v2269 = vld [vmem:[%s5 + $0x58] sm:$0xf]
    %v2270 = vld [vmem:[%s5 + $0x5c] sm:$0xf]
    %v2271 = vld [vmem:[%s5 + $0x60] sm:$0xf]
    %v2272 = vld [vmem:[%s5 + $0x64] sm:$0xf]
    %v2273 = vld [vmem:[%s5 + $0x68] sm:$0xf]
    %v2274 = vld [vmem:[%s5 + $0x6c] sm:$0xf]
    %v2275 = vld [vmem:[%s5 + $0x70] sm:$0xf]
    %v2276 = vld [vmem:[%s5 + $0x74] sm:$0xf]
    %v2277 = vld [vmem:[%s5 + $0x78] sm:$0xf]
    %v2278 = vld [vmem:[%s5 + $0x7c] sm:$0xf]
    %v2279 = vld [vmem:[%s6] sm:$0x1]
    %v2281 = vlaneseq
    %v2282 = vshrl.u32 %v2281, 7
    %v2283 = vsub.s32 0, %v2282
    %v2284 = vrot.slane %v2279, %v2283
    %v2318 = vunpack.c.l.b16 %v2247
    %v2319 = vunpack.c.l.b16 %v2248
    %v2320 = vunpack.c.l.b16 %v2249
    %v2321 = vunpack.c.l.b16 %v2250
    %v2322 = vunpack.c.l.b16 %v2251
    %v2323 = vunpack.c.l.b16 %v2252
    %v2324 = vunpack.c.l.b16 %v2253
    %v2325 = vunpack.c.l.b16 %v2254
    %v2326 = vunpack.c.l.b16 %v2255
    %v2327 = vunpack.c.l.b16 %v2256
    %v2328 = vunpack.c.l.b16 %v2257
    %v2329 = vunpack.c.l.b16 %v2258
    %v2330 = vunpack.c.l.b16 %v2259
    %v2331 = vunpack.c.l.b16 %v2260
    %v2332 = vunpack.c.l.b16 %v2261
    %v2333 = vunpack.c.l.b16 %v2262
    %v2334 = vunpack.c.l.b16 %v2263
    %v2335 = vunpack.c.l.b16 %v2264
    %v2336 = vunpack.c.l.b16 %v2265
    %v2337 = vunpack.c.l.b16 %v2266
    %v2338 = vunpack.c.l.b16 %v2267
    %v2339 = vunpack.c.l.b16 %v2268
    %v2340 = vunpack.c.l.b16 %v2269
    %v2341 = vunpack.c.l.b16 %v2270
    %v2342 = vunpack.c.l.b16 %v2271
    %v2343 = vunpack.c.l.b16 %v2272
    %v2344 = vunpack.c.l.b16 %v2273
    %v2345 = vunpack.c.l.b16 %v2274
    %v2346 = vunpack.c.l.b16 %v2275
    %v2347 = vunpack.c.l.b16 %v2276
    %v2348 = vunpack.c.l.b16 %v2277
    %v2349 = vunpack.c.l.b16 %v2278
    %v2350 = vpack.c.b16 %v2319, %v2318
    %v2351 = vpack.c.b16 %v2321, %v2320
    %v2352 = vpack.c.b16 %v2323, %v2322
    %v2353 = vpack.c.b16 %v2325, %v2324
    %v2354 = vpack.c.b16 %v2327, %v2326
    %v2355 = vpack.c.b16 %v2329, %v2328
    %v2356 = vpack.c.b16 %v2331, %v2330
    %v2357 = vpack.c.b16 %v2333, %v2332
    %v2358 = vpack.c.b16 %v2335, %v2334
    %v2359 = vpack.c.b16 %v2337, %v2336
    %v2360 = vpack.c.b16 %v2339, %v2338
    %v2361 = vpack.c.b16 %v2341, %v2340
    %v2362 = vpack.c.b16 %v2343, %v2342
    %v2363 = vpack.c.b16 %v2345, %v2344
    %v2364 = vpack.c.b16 %v2347, %v2346
    %v2365 = vpack.c.b16 %v2349, %v2348
    %2382 = vmatprep.subr.bf16.mxu0 0
    %2383 = vmatpush1.bf16.msra.mxu0 %v2350
    %2384 = vmatprep.subr.bf16.mxu0 0
    %2385 = vmatpush1.bf16.msra.mxu0 %v2351
    %2386 = vmatprep.subr.bf16.mxu0 0
    %2387 = vmatpush1.bf16.msra.mxu0 %v2352
    %2388 = vmatprep.subr.bf16.mxu0 0
    %2389 = vmatpush1.bf16.msra.mxu0 %v2353
    %2390 = vmatprep.subr.bf16.mxu0 0
    %2391 = vmatpush1.bf16.msra.mxu0 %v2354
    %2392 = vmatprep.subr.bf16.mxu0 0
    %2393 = vmatpush1.bf16.msra.mxu0 %v2355
    %2394 = vmatprep.subr.bf16.mxu0 0
    %2395 = vmatpush1.bf16.msra.mxu0 %v2356
    %2396 = vmatprep.subr.bf16.mxu0 0
    %2397 = vmatpush1.bf16.msra.mxu0 %v2357
    %2398 = vmatprep.subr.bf16.mxu0 0
    %2399 = vmatpush1.bf16.msra.mxu0 %v2358
    %2400 = vmatprep.subr.bf16.mxu0 0
    %2401 = vmatpush1.bf16.msra.mxu0 %v2359
    %2402 = vmatprep.subr.bf16.mxu0 0
    %2403 = vmatpush1.bf16.msra.mxu0 %v2360
    %2404 = vmatprep.subr.bf16.mxu0 0
    %2405 = vmatpush1.bf16.msra.mxu0 %v2361
    %2406 = vmatprep.subr.bf16.mxu0 0
    %2407 = vmatpush1.bf16.msra.mxu0 %v2362
    %2408 = vmatprep.subr.bf16.mxu0 0
    %2409 = vmatpush1.bf16.msra.mxu0 %v2363
    %2410 = vmatprep.subr.bf16.mxu0 0
    %2411 = vmatpush1.bf16.msra.mxu0 %v2364
    %2412 = vmatprep.subr.bf16.mxu0 0
    %2413 = vmatpush1.bf16.msra.mxu0 %v2365
    %2414 = vmatprep.mubr.bf16.mxu0 %v2246
    %2415 = vmatmul.mubr.bf16.gmra.mrb[0].mxu0 %v2245
    %v2416 = vpop.f32.mrb[0].mxu0
    %v2417 = vadd.f32 %v2284, %v2416
    %v2418 = vpop.f32.mrb[0].mxu0
    %v2419 = vpop.f32.mrb[0].mxu0
    %v2420 = vpop.f32.mrb[0].mxu0
    %2421 = vdwg.mxu0
    %2422 = vst [vmem:[#allocation2] sm:$0xff] %v2417
    %v2423 = vpack.c.bf16 %v2417, %v2417
    %v2424 = vld [vmem:[%s7] sm:$0xff]
    %v2425 = vld [vmem:[%s7 + $0x8] sm:$0xff]
    %v2426 = vld [vmem:[%s7 + $0x10] sm:$0xff]
    %v2427 = vld [vmem:[%s7 + $0x18] sm:$0xff]
    %v2428 = vld [vmem:[%s7 + $0x20] sm:$0xff]
    %v2429 = vld [vmem:[%s7 + $0x28] sm:$0xff]
    %v2430 = vld [vmem:[%s7 + $0x30] sm:$0xff]
    %v2431 = vld [vmem:[%s7 + $0x38] sm:$0xff]
    %v2432 = vld [vmem:[%s7 + $0x40] sm:$0xff]
    %v2433 = vld [vmem:[%s7 + $0x48] sm:$0xff]
    %v2434 = vld [vmem:[%s7 + $0x50] sm:$0xff]
    %v2435 = vld [vmem:[%s7 + $0x58] sm:$0xff]
    %v2436 = vld [vmem:[%s7 + $0x60] sm:$0xff]
    %v2437 = vld [vmem:[%s7 + $0x68] sm:$0xff]
    %v2438 = vld [vmem:[%s7 + $0x70] sm:$0xff]
    %v2439 = vld [vmem:[%s7 + $0x78] sm:$0xff]
    %v2440 = vld [vmem:[%s8] sm:$0x3]
    %v2442 = vlaneseq
    %v2443 = vshrl.u32 %v2442, 7
    %v2444 = vsub.s32 0, %v2443
    %v2445 = vrot.slane %v2440, %v2444
    %v2446 = vlaneseq
    %v2447 = vshrl.u32 %v2446, 7
    %v2448 = vsub.s32 1, %v2447
    %v2449 = vrot.slane %v2440, %v2448
    %v2468 = vunpack.c.l.b16 %v2424
    %v2469 = vunpack.c.h.b16 %v2424
    %v2470 = vunpack.c.l.b16 %v2425
    %v2471 = vunpack.c.h.b16 %v2425
    %v2472 = vunpack.c.l.b16 %v2426
    %v2473 = vunpack.c.h.b16 %v2426
    %v2474 = vunpack.c.l.b16 %v2427
    %v2475 = vunpack.c.h.b16 %v2427
    %v2476 = vunpack.c.l.b16 %v2428
    %v2477 = vunpack.c.h.b16 %v2428
    %v2478 = vunpack.c.l.b16 %v2429
    %v2479 = vunpack.c.h.b16 %v2429
    %v2480 = vunpack.c.l.b16 %v2430
    %v2481 = vunpack.c.h.b16 %v2430
    %v2482 = vunpack.c.l.b16 %v2431
    %v2483 = vunpack.c.h.b16 %v2431
    %v2484 = vunpack.c.l.b16 %v2432
    %v2485 = vunpack.c.h.b16 %v2432
    %v2486 = vunpack.c.l.b16 %v2433
    %v2487 = vunpack.c.h.b16 %v2433
    %v2488 = vunpack.c.l.b16 %v2434
    %v2489 = vunpack.c.h.b16 %v2434
    %v2490 = vunpack.c.l.b16 %v2435
    %v2491 = vunpack.c.h.b16 %v2435
    %v2492 = vunpack.c.l.b16 %v2436
    %v2493 = vunpack.c.h.b16 %v2436
    %v2494 = vunpack.c.l.b16 %v2437
    %v2495 = vunpack.c.h.b16 %v2437
    %v2496 = vunpack.c.l.b16 %v2438
    %v2497 = vunpack.c.h.b16 %v2438
    %v2498 = vunpack.c.l.b16 %v2439
    %v2499 = vunpack.c.h.b16 %v2439
    %v2500 = vpack.c.b16 %v2470, %v2468
    %v2501 = vpack.c.b16 %v2471, %v2469
    %v2502 = vpack.c.b16 %v2474, %v2472
    %v2503 = vpack.c.b16 %v2475, %v2473
    %v2504 = vpack.c.b16 %v2478, %v2476
    %v2505 = vpack.c.b16 %v2479, %v2477
    %v2506 = vpack.c.b16 %v2482, %v2480
    %v2507 = vpack.c.b16 %v2483, %v2481
    %v2508 = vpack.c.b16 %v2486, %v2484
    %v2509 = vpack.c.b16 %v2487, %v2485
    %v2510 = vpack.c.b16 %v2490, %v2488
    %v2511 = vpack.c.b16 %v2491, %v2489
    %v2512 = vpack.c.b16 %v2494, %v2492
    %v2513 = vpack.c.b16 %v2495, %v2493
    %v2514 = vpack.c.b16 %v2498, %v2496
    %v2515 = vpack.c.b16 %v2499, %v2497
    %2532 = vmatprep.subr.bf16.mxu0 %v2501
    %2533 = vmatpush1.bf16.msra.mxu0 %v2500
    %2534 = vmatprep.subr.bf16.mxu0 %v2503
    %2535 = vmatpush1.bf16.msra.mxu0 %v2502
    %2536 = vmatprep.subr.bf16.mxu0 %v2505
    %2537 = vmatpush1.bf16.msra.mxu0 %v2504
    %2538 = vmatprep.subr.bf16.mxu0 %v2507
    %2539 = vmatpush1.bf16.msra.mxu0 %v2506
    %2540 = vmatprep.subr.bf16.mxu0 %v2509
    %2541 = vmatpush1.bf16.msra.mxu0 %v2508
    %2542 = vmatprep.subr.bf16.mxu0 %v2511
    %2543 = vmatpush1.bf16.msra.mxu0 %v2510
    %2544 = vmatprep.subr.bf16.mxu0 %v2513
    %2545 = vmatpush1.bf16.msra.mxu0 %v2512
    %2546 = vmatprep.subr.bf16.mxu0 %v2515
    %2547 = vmatpush1.bf16.msra.mxu0 %v2514
    %2548 = vmatprep.subr.bf16.mxu0 0
    %2549 = vmatpush1.bf16.msra.mxu0 0
    %2550 = vmatprep.subr.bf16.mxu0 0
    %2551 = vmatpush1.bf16.msra.mxu0 0
    %2552 = vmatprep.subr.bf16.mxu0 0
    %2553 = vmatpush1.bf16.msra.mxu0 0
    %2554 = vmatprep.subr.bf16.mxu0 0
    %2555 = vmatpush1.bf16.msra.mxu0 0
    %2556 = vmatprep.subr.bf16.mxu0 0
    %2557 = vmatpush1.bf16.msra.mxu0 0
    %2558 = vmatprep.subr.bf16.mxu0 0
    %2559 = vmatpush1.bf16.msra.mxu0 0
    %2560 = vmatprep.subr.bf16.mxu0 0
    %2561 = vmatpush1.bf16.msra.mxu0 0
    %2562 = vmatprep.subr.bf16.mxu0 0
    %2563 = vmatpush1.bf16.msra.mxu0 0
    %2564 = vmatprep.mubr.bf16.mxu0 0
    %2565 = vmatmul.mubr.bf16.gmra.mrb[0].mxu0 %v2423
    %v2566 = vpop.f32.mrb[0].mxu0
    %v2567 = vadd.f32 %v2445, %v2566
    %v2568 = vpop.f32.mrb[0].mxu0
    %v2569 = vadd.f32 %v2449, %v2568
    %v2570 = vpop.f32.mrb[0].mxu0
    %v2571 = vpop.f32.mrb[0].mxu0
    %2572 = vdwg.mxu0
    %v2573 = vmax.f32 %v2567, 0.0
    %v2574 = vmax.f32 %v2569, 0.0
    %v2575 = vpack.c.bf16 %v2573, %v2573
    %v2576 = vpack.c.bf16 %v2574, %v2574
    %v2577 = vld [vmem:[%s9] sm:$0xff]
    %v2578 = vld [vmem:[%s9 + $0x8] sm:$0xff]
    %v2579 = vld [vmem:[%s9 + $0x10] sm:$0xff]
    %v2580 = vld [vmem:[%s9 + $0x18] sm:$0xff]
    %v2581 = vld [vmem:[%s9 + $0x20] sm:$0xff]
    %v2582 = vld [vmem:[%s9 + $0x28] sm:$0xff]
    %v2583 = vld [vmem:[%s9 + $0x30] sm:$0xff]
    %v2584 = vld [vmem:[%s9 + $0x38] sm:$0xff]
    %v2585 = vld [vmem:[%s9 + $0x40] sm:$0xff]
    %v2586 = vld [vmem:[%s9 + $0x48] sm:$0xff]
    %v2587 = vld [vmem:[%s9 + $0x50] sm:$0xff]
    %v2588 = vld [vmem:[%s9 + $0x58] sm:$0xff]
    %v2589 = vld [vmem:[%s9 + $0x60] sm:$0xff]
    %v2590 = vld [vmem:[%s9 + $0x68] sm:$0xff]
    %v2591 = vld [vmem:[%s9 + $0x70] sm:$0xff]
    %v2592 = vld [vmem:[%s9 + $0x78] sm:$0xff]
    %v2593 = vld [vmem:[%s9 + $0x80] sm:$0xff]
    %v2594 = vld [vmem:[%s9 + $0x88] sm:$0xff]
    %v2595 = vld [vmem:[%s9 + $0x90] sm:$0xff]
    %v2596 = vld [vmem:[%s9 + $0x98] sm:$0xff]
    %v2597 = vld [vmem:[%s9 + $0xa0] sm:$0xff]
    %v2598 = vld [vmem:[%s9 + $0xa8] sm:$0xff]
    %v2599 = vld [vmem:[%s9 + $0xb0] sm:$0xff]
    %v2600 = vld [vmem:[%s9 + $0xb8] sm:$0xff]
    %v2601 = vld [vmem:[%s9 + $0xc0] sm:$0xff]
    %v2602 = vld [vmem:[%s9 + $0xc8] sm:$0xff]
    %v2603 = vld [vmem:[%s9 + $0xd0] sm:$0xff]
    %v2604 = vld [vmem:[%s9 + $0xd8] sm:$0xff]
    %v2605 = vld [vmem:[%s9 + $0xe0] sm:$0xff]
    %v2606 = vld [vmem:[%s9 + $0xe8] sm:$0xff]
    %v2607 = vld [vmem:[%s9 + $0xf0] sm:$0xff]
    %v2608 = vld [vmem:[%s9 + $0xf8] sm:$0xff]
    %v2609 = vld [vmem:[%s9 + $0x100] sm:$0xff]
    %v2610 = vld [vmem:[%s9 + $0x108] sm:$0xff]
    %v2611 = vld [vmem:[%s9 + $0x110] sm:$0xff]
    %v2612 = vld [vmem:[%s9 + $0x118] sm:$0xff]
    %v2613 = vld [vmem:[%s9 + $0x120] sm:$0xff]
    %v2614 = vld [vmem:[%s9 + $0x128] sm:$0xff]
    %v2615 = vld [vmem:[%s9 + $0x130] sm:$0xff]
    %v2616 = vld [vmem:[%s9 + $0x138] sm:$0xff]
    %v2617 = vld [vmem:[%s9 + $0x140] sm:$0xff]
    %v2618 = vld [vmem:[%s9 + $0x148] sm:$0xff]
    %v2619 = vld [vmem:[%s9 + $0x150] sm:$0xff]
    %v2620 = vld [vmem:[%s9 + $0x158] sm:$0xff]
    %v2621 = vld [vmem:[%s9 + $0x160] sm:$0xff]
    %v2622 = vld [vmem:[%s9 + $0x168] sm:$0xff]
    %v2623 = vld [vmem:[%s9 + $0x170] sm:$0xff]
    %v2624 = vld [vmem:[%s9 + $0x178] sm:$0xff]
    %v2625 = vld [vmem:[%s9 + $0x180] sm:$0xff]
    %v2626 = vld [vmem:[%s9 + $0x188] sm:$0xff]
    %v2627 = vld [vmem:[%s9 + $0x190] sm:$0xff]
    %v2628 = vld [vmem:[%s9 + $0x198] sm:$0xff]
    %v2629 = vld [vmem:[%s9 + $0x1a0] sm:$0xff]
    %v2630 = vld [vmem:[%s9 + $0x1a8] sm:$0xff]
    %v2631 = vld [vmem:[%s9 + $0x1b0] sm:$0xff]
    %v2632 = vld [vmem:[%s9 + $0x1b8] sm:$0xff]
    %v2633 = vld [vmem:[%s9 + $0x1c0] sm:$0xff]
    %v2634 = vld [vmem:[%s9 + $0x1c8] sm:$0xff]
    %v2635 = vld [vmem:[%s9 + $0x1d0] sm:$0xff]
    %v2636 = vld [vmem:[%s9 + $0x1d8] sm:$0xff]
    %v2637 = vld [vmem:[%s9 + $0x1e0] sm:$0xff]
    %v2638 = vld [vmem:[%s9 + $0x1e8] sm:$0xff]
    %v2639 = vld [vmem:[%s9 + $0x1f0] sm:$0xff]
    %v2640 = vld [vmem:[%s9 + $0x1f8] sm:$0xff]
    %v2641 = vld [vmem:[%s10] sm:$0xf]
    %v2643 = vlaneseq
    %v2644 = vshrl.u32 %v2643, 7
    %v2645 = vsub.s32 0, %v2644
    %v2646 = vrot.slane %v2641, %v2645
    %v2647 = vlaneseq
    %v2648 = vshrl.u32 %v2647, 7
    %v2649 = vsub.s32 1, %v2648
    %v2650 = vrot.slane %v2641, %v2649
    %v2651 = vlaneseq
    %v2652 = vshrl.u32 %v2651, 7
    %v2653 = vsub.s32 2, %v2652
    %v2654 = vrot.slane %v2641, %v2653
    %v2655 = vlaneseq
    %v2656 = vshrl.u32 %v2655, 7
    %v2657 = vsub.s32 3, %v2656
    %v2658 = vrot.slane %v2641, %v2657
    %v2727 = vunpack.c.l.b16 %v2577
    %v2728 = vunpack.c.h.b16 %v2577
    %v2729 = vunpack.c.l.b16 %v2578
    %v2730 = vunpack.c.h.b16 %v2578
    %v2731 = vunpack.c.l.b16 %v2579
    %v2732 = vunpack.c.h.b16 %v2579
    %v2733 = vunpack.c.l.b16 %v2580
    %v2734 = vunpack.c.h.b16 %v2580
    %v2735 = vunpack.c.l.b16 %v2581
    %v2736 = vunpack.c.h.b16 %v2581
    %v2737 = vunpack.c.l.b16 %v2582
    %v2738 = vunpack.c.h.b16 %v2582
    %v2739 = vunpack.c.l.b16 %v2583
    %v2740 = vunpack.c.h.b16 %v2583
    %v2741 = vunpack.c.l.b16 %v2584
    %v2742 = vunpack.c.h.b16 %v2584
    %v2743 = vunpack.c.l.b16 %v2585
    %v2744 = vunpack.c.h.b16 %v2585
    %v2745 = vunpack.c.l.b16 %v2586
    %v2746 = vunpack.c.h.b16 %v2586
    %v2747 = vunpack.c.l.b16 %v2587
    %v2748 = vunpack.c.h.b16 %v2587
    %v2749 = vunpack.c.l.b16 %v2588
    %v2750 = vunpack.c.h.b16 %v2588
    %v2751 = vunpack.c.l.b16 %v2589
    %v2752 = vunpack.c.h.b16 %v2589
    %v2753 = vunpack.c.l.b16 %v2590
    %v2754 = vunpack.c.h.b16 %v2590
    %v2755 = vunpack.c.l.b16 %v2591
    %v2756 = vunpack.c.h.b16 %v2591
    %v2757 = vunpack.c.l.b16 %v2592
    %v2758 = vunpack.c.h.b16 %v2592
    %v2759 = vunpack.c.l.b16 %v2593
    %v2760 = vunpack.c.h.b16 %v2593
    %v2761 = vunpack.c.l.b16 %v2594
    %v2762 = vunpack.c.h.b16 %v2594
    %v2763 = vunpack.c.l.b16 %v2595
    %v2764 = vunpack.c.h.b16 %v2595
    %v2765 = vunpack.c.l.b16 %v2596
    %v2766 = vunpack.c.h.b16 %v2596
    %v2767 = vunpack.c.l.b16 %v2597
    %v2768 = vunpack.c.h.b16 %v2597
    %v2769 = vunpack.c.l.b16 %v2598
    %v2770 = vunpack.c.h.b16 %v2598
    %v2771 = vunpack.c.l.b16 %v2599
    %v2772 = vunpack.c.h.b16 %v2599
    %v2773 = vunpack.c.l.b16 %v2600
    %v2774 = vunpack.c.h.b16 %v2600
    %v2775 = vunpack.c.l.b16 %v2601
    %v2776 = vunpack.c.h.b16 %v2601
    %v2777 = vunpack.c.l.b16 %v2602
    %v2778 = vunpack.c.h.b16 %v2602
    %v2779 = vunpack.c.l.b16 %v2603
    %v2780 = vunpack.c.h.b16 %v2603
    %v2781 = vunpack.c.l.b16 %v2604
    %v2782 = vunpack.c.h.b16 %v2604
    %v2783 = vunpack.c.l.b16 %v2605
    %v2784 = vunpack.c.h.b16 %v2605
    %v2785 = vunpack.c.l.b16 %v2606
    %v2786 = vunpack.c.h.b16 %v2606
    %v2787 = vunpack.c.l.b16 %v2607
    %v2788 = vunpack.c.h.b16 %v2607
    %v2789 = vunpack.c.l.b16 %v2608
    %v2790 = vunpack.c.h.b16 %v2608
    %v2791 = vunpack.c.l.b16 %v2609
    %v2792 = vunpack.c.h.b16 %v2609
    %v2793 = vunpack.c.l.b16 %v2610
    %v2794 = vunpack.c.h.b16 %v2610
    %v2795 = vunpack.c.l.b16 %v2611
    %v2796 = vunpack.c.h.b16 %v2611
    %v2797 = vunpack.c.l.b16 %v2612
    %v2798 = vunpack.c.h.b16 %v2612
    %v2799 = vunpack.c.l.b16 %v2613
    %v2800 = vunpack.c.h.b16 %v2613
    %v2801 = vunpack.c.l.b16 %v2614
    %v2802 = vunpack.c.h.b16 %v2614
    %v2803 = vunpack.c.l.b16 %v2615
    %v2804 = vunpack.c.h.b16 %v2615
    %v2805 = vunpack.c.l.b16 %v2616
    %v2806 = vunpack.c.h.b16 %v2616
    %v2807 = vunpack.c.l.b16 %v2617
    %v2808 = vunpack.c.h.b16 %v2617
    %v2809 = vunpack.c.l.b16 %v2618
    %v2810 = vunpack.c.h.b16 %v2618
    %v2811 = vunpack.c.l.b16 %v2619
    %v2812 = vunpack.c.h.b16 %v2619
    %v2813 = vunpack.c.l.b16 %v2620
    %v2814 = vunpack.c.h.b16 %v2620
    %v2815 = vunpack.c.l.b16 %v2621
    %v2816 = vunpack.c.h.b16 %v2621
    %v2817 = vunpack.c.l.b16 %v2622
    %v2818 = vunpack.c.h.b16 %v2622
    %v2819 = vunpack.c.l.b16 %v2623
    %v2820 = vunpack.c.h.b16 %v2623
    %v2821 = vunpack.c.l.b16 %v2624
    %v2822 = vunpack.c.h.b16 %v2624
    %v2823 = vunpack.c.l.b16 %v2625
    %v2824 = vunpack.c.h.b16 %v2625
    %v2825 = vunpack.c.l.b16 %v2626
    %v2826 = vunpack.c.h.b16 %v2626
    %v2827 = vunpack.c.l.b16 %v2627
    %v2828 = vunpack.c.h.b16 %v2627
    %v2829 = vunpack.c.l.b16 %v2628
    %v2830 = vunpack.c.h.b16 %v2628
    %v2831 = vunpack.c.l.b16 %v2629
    %v2832 = vunpack.c.h.b16 %v2629
    %v2833 = vunpack.c.l.b16 %v2630
    %v2834 = vunpack.c.h.b16 %v2630
    %v2835 = vunpack.c.l.b16 %v2631
    %v2836 = vunpack.c.h.b16 %v2631
    %v2837 = vunpack.c.l.b16 %v2632
    %v2838 = vunpack.c.h.b16 %v2632
    %v2839 = vunpack.c.l.b16 %v2633
    %v2840 = vunpack.c.h.b16 %v2633
    %v2841 = vunpack.c.l.b16 %v2634
    %v2842 = vunpack.c.h.b16 %v2634
    %v2843 = vunpack.c.l.b16 %v2635
    %v2844 = vunpack.c.h.b16 %v2635
    %v2845 = vunpack.c.l.b16 %v2636
    %v2846 = vunpack.c.h.b16 %v2636
    %v2847 = vunpack.c.l.b16 %v2637
    %v2848 = vunpack.c.h.b16 %v2637
    %v2849 = vunpack.c.l.b16 %v2638
    %v2850 = vunpack.c.h.b16 %v2638
    %v2851 = vunpack.c.l.b16 %v2639
    %v2852 = vunpack.c.h.b16 %v2639
    %v2853 = vunpack.c.l.b16 %v2640
    %v2854 = vunpack.c.h.b16 %v2640
    %v2855 = vpack.c.b16 %v2731, %v2727
    %v2856 = vpack.c.b16 %v2732, %v2728
    %v2857 = vpack.c.b16 %v2733, %v2729
    %v2858 = vpack.c.b16 %v2734, %v2730
    %v2859 = vpack.c.b16 %v2739, %v2735
    %v2860 = vpack.c.b16 %v2740, %v2736
    %v2861 = vpack.c.b16 %v2741, %v2737
    %v2862 = vpack.c.b16 %v2742, %v2738
    %v2863 = vpack.c.b16 %v2747, %v2743
    %v2864 = vpack.c.b16 %v2748, %v2744
    %v2865 = vpack.c.b16 %v2749, %v2745
    %v2866 = vpack.c.b16 %v2750, %v2746
    %v2867 = vpack.c.b16 %v2755, %v2751
    %v2868 = vpack.c.b16 %v2756, %v2752
    %v2869 = vpack.c.b16 %v2757, %v2753
    %v2870 = vpack.c.b16 %v2758, %v2754
    %v2871 = vpack.c.b16 %v2763, %v2759
    %v2872 = vpack.c.b16 %v2764, %v2760
    %v2873 = vpack.c.b16 %v2765, %v2761
    %v2874 = vpack.c.b16 %v2766, %v2762
    %v2875 = vpack.c.b16 %v2771, %v2767
    %v2876 = vpack.c.b16 %v2772, %v2768
    %v2877 = vpack.c.b16 %v2773, %v2769
    %v2878 = vpack.c.b16 %v2774, %v2770
    %v2879 = vpack.c.b16 %v2779, %v2775
    %v2880 = vpack.c.b16 %v2780, %v2776
    %v2881 = vpack.c.b16 %v2781, %v2777
    %v2882 = vpack.c.b16 %v2782, %v2778
    %v2883 = vpack.c.b16 %v2787, %v2783
    %v2884 = vpack.c.b16 %v2788, %v2784
    %v2885 = vpack.c.b16 %v2789, %v2785
    %v2886 = vpack.c.b16 %v2790, %v2786
    %v2887 = vpack.c.b16 %v2795, %v2791
    %v2888 = vpack.c.b16 %v2796, %v2792
    %v2889 = vpack.c.b16 %v2797, %v2793
    %v2890 = vpack.c.b16 %v2798, %v2794
    %v2891 = vpack.c.b16 %v2803, %v2799
    %v2892 = vpack.c.b16 %v2804, %v2800
    %v2893 = vpack.c.b16 %v2805, %v2801
    %v2894 = vpack.c.b16 %v2806, %v2802
    %v2895 = vpack.c.b16 %v2811, %v2807
    %v2896 = vpack.c.b16 %v2812, %v2808
    %v2897 = vpack.c.b16 %v2813, %v2809
    %v2898 = vpack.c.b16 %v2814, %v2810
    %v2899 = vpack.c.b16 %v2819, %v2815
    %v2900 = vpack.c.b16 %v2820, %v2816
    %v2901 = vpack.c.b16 %v2821, %v2817
    %v2902 = vpack.c.b16 %v2822, %v2818
    %v2903 = vpack.c.b16 %v2827, %v2823
    %v2904 = vpack.c.b16 %v2828, %v2824
    %v2905 = vpack.c.b16 %v2829, %v2825
    %v2906 = vpack.c.b16 %v2830, %v2826
    %v2907 = vpack.c.b16 %v2835, %v2831
    %v2908 = vpack.c.b16 %v2836, %v2832
    %v2909 = vpack.c.b16 %v2837, %v2833
    %v2910 = vpack.c.b16 %v2838, %v2834
    %v2911 = vpack.c.b16 %v2843, %v2839
    %v2912 = vpack.c.b16 %v2844, %v2840
    %v2913 = vpack.c.b16 %v2845, %v2841
    %v2914 = vpack.c.b16 %v2846, %v2842
    %v2915 = vpack.c.b16 %v2851, %v2847
    %v2916 = vpack.c.b16 %v2852, %v2848
    %v2917 = vpack.c.b16 %v2853, %v2849
    %v2918 = vpack.c.b16 %v2854, %v2850
    %2983 = vmatprep.subr.bf16.mxu0 %v2856
    %2984 = vmatpush1.bf16.msra.mxu0 %v2855
    %2985 = vmatprep.subr.bf16.mxu0 %v2860
    %2986 = vmatpush1.bf16.msra.mxu0 %v2859
    %2987 = vmatprep.subr.bf16.mxu0 %v2864
    %2988 = vmatpush1.bf16.msra.mxu0 %v2863
    %2989 = vmatprep.subr.bf16.mxu0 %v2868
    %2990 = vmatpush1.bf16.msra.mxu0 %v2867
    %2991 = vmatprep.subr.bf16.mxu0 %v2872
    %2992 = vmatpush1.bf16.msra.mxu0 %v2871
    %2993 = vmatprep.subr.bf16.mxu0 %v2876
    %2994 = vmatpush1.bf16.msra.mxu0 %v2875
    %2995 = vmatprep.subr.bf16.mxu0 %v2880
    %2996 = vmatpush1.bf16.msra.mxu0 %v2879
    %2997 = vmatprep.subr.bf16.mxu0 %v2884
    %2998 = vmatpush1.bf16.msra.mxu0 %v2883
    %2999 = vmatprep.subr.bf16.mxu0 %v2888
    %3000 = vmatpush1.bf16.msra.mxu0 %v2887
    %3001 = vmatprep.subr.bf16.mxu0 %v2892
    %3002 = vmatpush1.bf16.msra.mxu0 %v2891
    %3003 = vmatprep.subr.bf16.mxu0 %v2896
    %3004 = vmatpush1.bf16.msra.mxu0 %v2895
    %3005 = vmatprep.subr.bf16.mxu0 %v2900
    %3006 = vmatpush1.bf16.msra.mxu0 %v2899
    %3007 = vmatprep.subr.bf16.mxu0 %v2904
    %3008 = vmatpush1.bf16.msra.mxu0 %v2903
    %3009 = vmatprep.subr.bf16.mxu0 %v2908
    %3010 = vmatpush1.bf16.msra.mxu0 %v2907
    %3011 = vmatprep.subr.bf16.mxu0 %v2912
    %3012 = vmatpush1.bf16.msra.mxu0 %v2911
    %3013 = vmatprep.subr.bf16.mxu0 %v2916
    %3014 = vmatpush1.bf16.msra.mxu0 %v2915
    %3015 = vmatprep.mubr.bf16.mxu0 %v2576
    %3016 = vmatmul.mubr.bf16.gmra.mrb[0].mxu0 %v2575
    %v3017 = vpop.f32.mrb[0].mxu0
    %v3018 = vadd.f32 %v2646, %v3017
    %v3019 = vpop.f32.mrb[0].mxu0
    %v3020 = vadd.f32 %v2650, %v3019
    %v3021 = vpop.f32.mrb[0].mxu0
    %v3022 = vpop.f32.mrb[0].mxu0
    %3023 = vdwg.mxu0
    %3024 = vmatprep.subr.bf16.mxu0 %v2858
    %3025 = vmatpush1.bf16.msra.mxu0 %v2857
    %3026 = vmatprep.subr.bf16.mxu0 %v2862
    %3027 = vmatpush1.bf16.msra.mxu0 %v2861
    %3028 = vmatprep.subr.bf16.mxu0 %v2866
    %3029 = vmatpush1.bf16.msra.mxu0 %v2865
    %3030 = vmatprep.subr.bf16.mxu0 %v2870
    %3031 = vmatpush1.bf16.msra.mxu0 %v2869
    %3032 = vmatprep.subr.bf16.mxu0 %v2874
    %3033 = vmatpush1.bf16.msra.mxu0 %v2873
    %3034 = vmatprep.subr.bf16.mxu0 %v2878
    %3035 = vmatpush1.bf16.msra.mxu0 %v2877
    %3036 = vmatprep.subr.bf16.mxu0 %v2882
    %3037 = vmatpush1.bf16.msra.mxu0 %v2881
    %3038 = vmatprep.subr.bf16.mxu0 %v2886
    %3039 = vmatpush1.bf16.msra.mxu0 %v2885
    %3040 = vmatprep.subr.bf16.mxu0 %v2890
    %3041 = vmatpush1.bf16.msra.mxu0 %v2889
    %3042 = vmatprep.subr.bf16.mxu0 %v2894
    %3043 = vmatpush1.bf16.msra.mxu0 %v2893
    %3044 = vmatprep.subr.bf16.mxu0 %v2898
    %3045 = vmatpush1.bf16.msra.mxu0 %v2897
    %3046 = vmatprep.subr.bf16.mxu0 %v2902
    %3047 = vmatpush1.bf16.msra.mxu0 %v2901
    %3048 = vmatprep.subr.bf16.mxu0 %v2906
    %3049 = vmatpush1.bf16.msra.mxu0 %v2905
    %3050 = vmatprep.subr.bf16.mxu0 %v2910
    %3051 = vmatpush1.bf16.msra.mxu0 %v2909
    %3052 = vmatprep.subr.bf16.mxu0 %v2914
    %3053 = vmatpush1.bf16.msra.mxu0 %v2913
    %3054 = vmatprep.subr.bf16.mxu0 %v2918
    %3055 = vmatpush1.bf16.msra.mxu0 %v2917
    %3056 = vmatprep.mubr.bf16.mxu0 %v2576
    %3057 = vmatmul.mubr.bf16.gmra.mrb[0].mxu0 %v2575
    %v3058 = vpop.f32.mrb[0].mxu0
    %v3059 = vadd.f32 %v2654, %v3058
    %v3060 = vpop.f32.mrb[0].mxu0
    %v3061 = vadd.f32 %v2658, %v3060
    %v3062 = vpop.f32.mrb[0].mxu0
    %v3063 = vpop.f32.mrb[0].mxu0
    %3064 = vdwg.mxu0
    %v3065 = vmax.f32 %v3018, 0.0
    %v3066 = vmax.f32 %v3020, 0.0
    %v3067 = vmax.f32 %v3059, 0.0
    %v3068 = vmax.f32 %v3061, 0.0
    %v3069 = vpack.c.bf16 %v3065, %v3065
    %v3070 = vpack.c.bf16 %v3066, %v3066
    %v3071 = vpack.c.bf16 %v3067, %v3067
    %v3072 = vpack.c.bf16 %v3068, %v3068
    %v3073 = vld [vmem:[%s11] sm:$0xff]
    %v3074 = vld [vmem:[%s11 + $0x8] sm:$0xff]
    %v3075 = vld [vmem:[%s11 + $0x10] sm:$0xff]
    %v3076 = vld [vmem:[%s11 + $0x18] sm:$0xf]
    %v3077 = vld [vmem:[%s11 + $0x1c] sm:$0xff]
    %v3078 = vld [vmem:[%s11 + $0x24] sm:$0xff]
    %v3079 = vld [vmem:[%s11 + $0x2c] sm:$0xff]
    %v3080 = vld [vmem:[%s11 + $0x34] sm:$0xf]
    %v3081 = vld [vmem:[%s11 + $0x38] sm:$0xff]
    %v3082 = vld [vmem:[%s11 + $0x40] sm:$0xff]
    %v3083 = vld [vmem:[%s11 + $0x48] sm:$0xff]
    %v3084 = vld [vmem:[%s11 + $0x50] sm:$0xf]
    %v3085 = vld [vmem:[%s11 + $0x54] sm:$0xff]
    %v3086 = vld [vmem:[%s11 + $0x5c] sm:$0xff]
    %v3087 = vld [vmem:[%s11 + $0x64] sm:$0xff]
    %v3088 = vld [vmem:[%s11 + $0x6c] sm:$0xf]
    %v3089 = vld [vmem:[%s11 + $0x70] sm:$0xff]
    %v3090 = vld [vmem:[%s11 + $0x78] sm:$0xff]
    %v3091 = vld [vmem:[%s11 + $0x80] sm:$0xff]
    %v3092 = vld [vmem:[%s11 + $0x88] sm:$0xf]
    %v3093 = vld [vmem:[%s11 + $0x8c] sm:$0xff]
    %v3094 = vld [vmem:[%s11 + $0x94] sm:$0xff]
    %v3095 = vld [vmem:[%s11 + $0x9c] sm:$0xff]
    %v3096 = vld [vmem:[%s11 + $0xa4] sm:$0xf]
    %v3097 = vld [vmem:[%s11 + $0xa8] sm:$0xff]
    %v3098 = vld [vmem:[%s11 + $0xb0] sm:$0xff]
    %v3099 = vld [vmem:[%s11 + $0xb8] sm:$0xff]
    %v3100 = vld [vmem:[%s11 + $0xc0] sm:$0xf]
    %v3101 = vld [vmem:[%s11 + $0xc4] sm:$0xff]
    %v3102 = vld [vmem:[%s11 + $0xcc] sm:$0xff]
    %v3103 = vld [vmem:[%s11 + $0xd4] sm:$0xff]
    %v3104 = vld [vmem:[%s11 + $0xdc] sm:$0xf]
    %v3105 = vld [vmem:[%s11 + $0xe0] sm:$0xff]
    %v3106 = vld [vmem:[%s11 + $0xe8] sm:$0xff]
    %v3107 = vld [vmem:[%s11 + $0xf0] sm:$0xff]
    %v3108 = vld [vmem:[%s11 + $0xf8] sm:$0xf]
    %v3109 = vld [vmem:[%s11 + $0xfc] sm:$0xff]
    %v3110 = vld [vmem:[%s11 + $0x104] sm:$0xff]
    %v3111 = vld [vmem:[%s11 + $0x10c] sm:$0xff]
    %v3112 = vld [vmem:[%s11 + $0x114] sm:$0xf]
    %v3113 = vld [vmem:[%s11 + $0x118] sm:$0xff]
    %v3114 = vld [vmem:[%s11 + $0x120] sm:$0xff]
    %v3115 = vld [vmem:[%s11 + $0x128] sm:$0xff]
    %v3116 = vld [vmem:[%s11 + $0x130] sm:$0xf]
    %v3117 = vld [vmem:[%s11 + $0x134] sm:$0xff]
    %v3118 = vld [vmem:[%s11 + $0x13c] sm:$0xff]
    %v3119 = vld [vmem:[%s11 + $0x144] sm:$0xff]
    %v3120 = vld [vmem:[%s11 + $0x14c] sm:$0xf]
    %v3121 = vld [vmem:[%s11 + $0x150] sm:$0xff]
    %v3122 = vld [vmem:[%s11 + $0x158] sm:$0xff]
    %v3123 = vld [vmem:[%s11 + $0x160] sm:$0xff]
    %v3124 = vld [vmem:[%s11 + $0x168] sm:$0xf]
    %v3125 = vld [vmem:[%s11 + $0x16c] sm:$0xff]
    %v3126 = vld [vmem:[%s11 + $0x174] sm:$0xff]
    %v3127 = vld [vmem:[%s11 + $0x17c] sm:$0xff]
    %v3128 = vld [vmem:[%s11 + $0x184] sm:$0xf]
    %v3129 = vld [vmem:[%s11 + $0x188] sm:$0xff]
    %v3130 = vld [vmem:[%s11 + $0x190] sm:$0xff]
    %v3131 = vld [vmem:[%s11 + $0x198] sm:$0xff]
    %v3132 = vld [vmem:[%s11 + $0x1a0] sm:$0xf]
    %v3133 = vld [vmem:[%s11 + $0x1a4] sm:$0xff]
    %v3134 = vld [vmem:[%s11 + $0x1ac] sm:$0xff]
    %v3135 = vld [vmem:[%s11 + $0x1b4] sm:$0xff]
    %v3136 = vld [vmem:[%s11 + $0x1bc] sm:$0xf]
    %v3137 = vld [vmem:[%s11 + $0x1c0] sm:$0xff]
    %v3138 = vld [vmem:[%s11 + $0x1c8] sm:$0xff]
    %v3139 = vld [vmem:[%s11 + $0x1d0] sm:$0xff]
    %v3140 = vld [vmem:[%s11 + $0x1d8] sm:$0xf]
    %v3141 = vld [vmem:[%s11 + $0x1dc] sm:$0xff]
    %v3142 = vld [vmem:[%s11 + $0x1e4] sm:$0xff]
    %v3143 = vld [vmem:[%s11 + $0x1ec] sm:$0xff]
    %v3144 = vld [vmem:[%s11 + $0x1f4] sm:$0xf]
    %v3145 = vld [vmem:[%s11 + $0x1f8] sm:$0xff]
    %v3146 = vld [vmem:[%s11 + $0x200] sm:$0xff]
    %v3147 = vld [vmem:[%s11 + $0x208] sm:$0xff]
    %v3148 = vld [vmem:[%s11 + $0x210] sm:$0xf]
    %v3149 = vld [vmem:[%s11 + $0x214] sm:$0xff]
    %v3150 = vld [vmem:[%s11 + $0x21c] sm:$0xff]
    %v3151 = vld [vmem:[%s11 + $0x224] sm:$0xff]
    %v3152 = vld [vmem:[%s11 + $0x22c] sm:$0xf]
    %v3153 = vld [vmem:[%s11 + $0x230] sm:$0xff]
    %v3154 = vld [vmem:[%s11 + $0x238] sm:$0xff]
    %v3155 = vld [vmem:[%s11 + $0x240] sm:$0xff]
    %v3156 = vld [vmem:[%s11 + $0x248] sm:$0xf]
    %v3157 = vld [vmem:[%s11 + $0x24c] sm:$0xff]
    %v3158 = vld [vmem:[%s11 + $0x254] sm:$0xff]
    %v3159 = vld [vmem:[%s11 + $0x25c] sm:$0xff]
    %v3160 = vld [vmem:[%s11 + $0x264] sm:$0xf]
    %v3161 = vld [vmem:[%s11 + $0x268] sm:$0xff]
    %v3162 = vld [vmem:[%s11 + $0x270] sm:$0xff]
    %v3163 = vld [vmem:[%s11 + $0x278] sm:$0xff]
    %v3164 = vld [vmem:[%s11 + $0x280] sm:$0xf]
    %v3165 = vld [vmem:[%s11 + $0x284] sm:$0xff]
    %v3166 = vld [vmem:[%s11 + $0x28c] sm:$0xff]
    %v3167 = vld [vmem:[%s11 + $0x294] sm:$0xff]
    %v3168 = vld [vmem:[%s11 + $0x29c] sm:$0xf]
    %v3169 = vld [vmem:[%s11 + $0x2a0] sm:$0xff]
    %v3170 = vld [vmem:[%s11 + $0x2a8] sm:$0xff]
    %v3171 = vld [vmem:[%s11 + $0x2b0] sm:$0xff]
    %v3172 = vld [vmem:[%s11 + $0x2b8] sm:$0xf]
    %v3173 = vld [vmem:[%s11 + $0x2bc] sm:$0xff]
    %v3174 = vld [vmem:[%s11 + $0x2c4] sm:$0xff]
    %v3175 = vld [vmem:[%s11 + $0x2cc] sm:$0xff]
    %v3176 = vld [vmem:[%s11 + $0x2d4] sm:$0xf]
    %v3177 = vld [vmem:[%s11 + $0x2d8] sm:$0xff]
    %v3178 = vld [vmem:[%s11 + $0x2e0] sm:$0xff]
    %v3179 = vld [vmem:[%s11 + $0x2e8] sm:$0xff]
    %v3180 = vld [vmem:[%s11 + $0x2f0] sm:$0xf]
    %v3181 = vld [vmem:[%s11 + $0x2f4] sm:$0xff]
    %v3182 = vld [vmem:[%s11 + $0x2fc] sm:$0xff]
    %v3183 = vld [vmem:[%s11 + $0x304] sm:$0xff]
    %v3184 = vld [vmem:[%s11 + $0x30c] sm:$0xf]
    %v3185 = vld [vmem:[%s11 + $0x310] sm:$0xff]
    %v3186 = vld [vmem:[%s11 + $0x318] sm:$0xff]
    %v3187 = vld [vmem:[%s11 + $0x320] sm:$0xff]
    %v3188 = vld [vmem:[%s11 + $0x328] sm:$0xf]
    %v3189 = vld [vmem:[%s11 + $0x32c] sm:$0xff]
    %v3190 = vld [vmem:[%s11 + $0x334] sm:$0xff]
    %v3191 = vld [vmem:[%s11 + $0x33c] sm:$0xff]
    %v3192 = vld [vmem:[%s11 + $0x344] sm:$0xf]
    %v3193 = vld [vmem:[%s11 + $0x348] sm:$0xff]
    %v3194 = vld [vmem:[%s11 + $0x350] sm:$0xff]
    %v3195 = vld [vmem:[%s11 + $0x358] sm:$0xff]
    %v3196 = vld [vmem:[%s11 + $0x360] sm:$0xf]
    %v3197 = vld [vmem:[%s11 + $0x364] sm:$0xff]
    %v3198 = vld [vmem:[%s11 + $0x36c] sm:$0xff]
    %v3199 = vld [vmem:[%s11 + $0x374] sm:$0xff]
    %v3200 = vld [vmem:[%s11 + $0x37c] sm:$0xf]
    %v3201 = vld [vmem:[%s11 + $0x380] sm:$0xff]
    %v3202 = vld [vmem:[%s11 + $0x388] sm:$0xff]
    %v3203 = vld [vmem:[%s11 + $0x390] sm:$0xff]
    %v3204 = vld [vmem:[%s11 + $0x398] sm:$0xf]
    %v3205 = vld [vmem:[%s11 + $0x39c] sm:$0xff]
    %v3206 = vld [vmem:[%s11 + $0x3a4] sm:$0xff]
    %v3207 = vld [vmem:[%s11 + $0x3ac] sm:$0xff]
    %v3208 = vld [vmem:[%s11 + $0x3b4] sm:$0xf]
    %v3209 = vld [vmem:[%s11 + $0x3b8] sm:$0xff]
    %v3210 = vld [vmem:[%s11 + $0x3c0] sm:$0xff]
    %v3211 = vld [vmem:[%s11 + $0x3c8] sm:$0xff]
    %v3212 = vld [vmem:[%s11 + $0x3d0] sm:$0xf]
    %v3213 = vld [vmem:[%s11 + $0x3d4] sm:$0xff]
    %v3214 = vld [vmem:[%s11 + $0x3dc] sm:$0xff]
    %v3215 = vld [vmem:[%s11 + $0x3e4] sm:$0xff]
    %v3216 = vld [vmem:[%s11 + $0x3ec] sm:$0xf]
    %v3217 = vld [vmem:[%s11 + $0x3f0] sm:$0xff]
    %v3218 = vld [vmem:[%s11 + $0x3f8] sm:$0xff]
    %v3219 = vld [vmem:[%s11 + $0x400] sm:$0xff]
    %v3220 = vld [vmem:[%s11 + $0x408] sm:$0xf]
    %v3221 = vld [vmem:[%s11 + $0x40c] sm:$0xff]
    %v3222 = vld [vmem:[%s11 + $0x414] sm:$0xff]
    %v3223 = vld [vmem:[%s11 + $0x41c] sm:$0xff]
    %v3224 = vld [vmem:[%s11 + $0x424] sm:$0xf]
    %v3225 = vld [vmem:[%s11 + $0x428] sm:$0xff]
    %v3226 = vld [vmem:[%s11 + $0x430] sm:$0xff]
    %v3227 = vld [vmem:[%s11 + $0x438] sm:$0xff]
    %v3228 = vld [vmem:[%s11 + $0x440] sm:$0xf]
    %v3229 = vld [vmem:[%s11 + $0x444] sm:$0xff]
    %v3230 = vld [vmem:[%s11 + $0x44c] sm:$0xff]
    %v3231 = vld [vmem:[%s11 + $0x454] sm:$0xff]
    %v3232 = vld [vmem:[%s11 + $0x45c] sm:$0xf]
    %v3233 = vld [vmem:[%s11 + $0x460] sm:$0xff]
    %v3234 = vld [vmem:[%s11 + $0x468] sm:$0xff]
    %v3235 = vld [vmem:[%s11 + $0x470] sm:$0xff]
    %v3236 = vld [vmem:[%s11 + $0x478] sm:$0xf]
    %v3237 = vld [vmem:[%s11 + $0x47c] sm:$0xff]
    %v3238 = vld [vmem:[%s11 + $0x484] sm:$0xff]
    %v3239 = vld [vmem:[%s11 + $0x48c] sm:$0xff]
    %v3240 = vld [vmem:[%s11 + $0x494] sm:$0xf]
    %v3241 = vld [vmem:[%s11 + $0x498] sm:$0xff]
    %v3242 = vld [vmem:[%s11 + $0x4a0] sm:$0xff]
    %v3243 = vld [vmem:[%s11 + $0x4a8] sm:$0xff]
    %v3244 = vld [vmem:[%s11 + $0x4b0] sm:$0xf]
    %v3245 = vld [vmem:[%s11 + $0x4b4] sm:$0xff]
    %v3246 = vld [vmem:[%s11 + $0x4bc] sm:$0xff]
    %v3247 = vld [vmem:[%s11 + $0x4c4] sm:$0xff]
    %v3248 = vld [vmem:[%s11 + $0x4cc] sm:$0xf]
    %v3249 = vld [vmem:[%s11 + $0x4d0] sm:$0xff]
    %v3250 = vld [vmem:[%s11 + $0x4d8] sm:$0xff]
    %v3251 = vld [vmem:[%s11 + $0x4e0] sm:$0xff]
    %v3252 = vld [vmem:[%s11 + $0x4e8] sm:$0xf]
    %v3253 = vld [vmem:[%s11 + $0x4ec] sm:$0xff]
    %v3254 = vld [vmem:[%s11 + $0x4f4] sm:$0xff]
    %v3255 = vld [vmem:[%s11 + $0x4fc] sm:$0xff]
    %v3256 = vld [vmem:[%s11 + $0x504] sm:$0xf]
    %v3257 = vld [vmem:[%s11 + $0x508] sm:$0xff]
    %v3258 = vld [vmem:[%s11 + $0x510] sm:$0xff]
    %v3259 = vld [vmem:[%s11 + $0x518] sm:$0xff]
    %v3260 = vld [vmem:[%s11 + $0x520] sm:$0xf]
    %v3261 = vld [vmem:[%s11 + $0x524] sm:$0xff]
    %v3262 = vld [vmem:[%s11 + $0x52c] sm:$0xff]
    %v3263 = vld [vmem:[%s11 + $0x534] sm:$0xff]
    %v3264 = vld [vmem:[%s11 + $0x53c] sm:$0xf]
    %v3265 = vld [vmem:[%s11 + $0x540] sm:$0xff]
    %v3266 = vld [vmem:[%s11 + $0x548] sm:$0xff]
    %v3267 = vld [vmem:[%s11 + $0x550] sm:$0xff]
    %v3268 = vld [vmem:[%s11 + $0x558] sm:$0xf]
    %v3269 = vld [vmem:[%s11 + $0x55c] sm:$0xff]
    %v3270 = vld [vmem:[%s11 + $0x564] sm:$0xff]
    %v3271 = vld [vmem:[%s11 + $0x56c] sm:$0xff]
    %v3272 = vld [vmem:[%s11 + $0x574] sm:$0xf]
    %v3273 = vld [vmem:[%s11 + $0x578] sm:$0xff]
    %v3274 = vld [vmem:[%s11 + $0x580] sm:$0xff]
    %v3275 = vld [vmem:[%s11 + $0x588] sm:$0xff]
    %v3276 = vld [vmem:[%s11 + $0x590] sm:$0xf]
    %v3277 = vld [vmem:[%s11 + $0x594] sm:$0xff]
    %v3278 = vld [vmem:[%s11 + $0x59c] sm:$0xff]
    %v3279 = vld [vmem:[%s11 + $0x5a4] sm:$0xff]
    %v3280 = vld [vmem:[%s11 + $0x5ac] sm:$0xf]
    %v3281 = vld [vmem:[%s11 + $0x5b0] sm:$0xff]
    %v3282 = vld [vmem:[%s11 + $0x5b8] sm:$0xff]
    %v3283 = vld [vmem:[%s11 + $0x5c0] sm:$0xff]
    %v3284 = vld [vmem:[%s11 + $0x5c8] sm:$0xf]
    %v3285 = vld [vmem:[%s11 + $0x5cc] sm:$0xff]
    %v3286 = vld [vmem:[%s11 + $0x5d4] sm:$0xff]
    %v3287 = vld [vmem:[%s11 + $0x5dc] sm:$0xff]
    %v3288 = vld [vmem:[%s11 + $0x5e4] sm:$0xf]
    %v3289 = vld [vmem:[%s11 + $0x5e8] sm:$0xff]
    %v3290 = vld [vmem:[%s11 + $0x5f0] sm:$0xff]
    %v3291 = vld [vmem:[%s11 + $0x5f8] sm:$0xff]
    %v3292 = vld [vmem:[%s11 + $0x600] sm:$0xf]
    %v3293 = vld [vmem:[%s11 + $0x604] sm:$0xff]
    %v3294 = vld [vmem:[%s11 + $0x60c] sm:$0xff]
    %v3295 = vld [vmem:[%s11 + $0x614] sm:$0xff]
    %v3296 = vld [vmem:[%s11 + $0x61c] sm:$0xf]
    %v3297 = vld [vmem:[%s11 + $0x620] sm:$0xff]
    %v3298 = vld [vmem:[%s11 + $0x628] sm:$0xff]
    %v3299 = vld [vmem:[%s11 + $0x630] sm:$0xff]
    %v3300 = vld [vmem:[%s11 + $0x638] sm:$0xf]
    %v3301 = vld [vmem:[%s11 + $0x63c] sm:$0xff]
    %v3302 = vld [vmem:[%s11 + $0x644] sm:$0xff]
    %v3303 = vld [vmem:[%s11 + $0x64c] sm:$0xff]
    %v3304 = vld [vmem:[%s11 + $0x654] sm:$0xf]
    %v3305 = vld [vmem:[%s11 + $0x658] sm:$0xff]
    %v3306 = vld [vmem:[%s11 + $0x660] sm:$0xff]
    %v3307 = vld [vmem:[%s11 + $0x668] sm:$0xff]
    %v3308 = vld [vmem:[%s11 + $0x670] sm:$0xf]
    %v3309 = vld [vmem:[%s11 + $0x674] sm:$0xff]
    %v3310 = vld [vmem:[%s11 + $0x67c] sm:$0xff]
    %v3311 = vld [vmem:[%s11 + $0x684] sm:$0xff]
    %v3312 = vld [vmem:[%s11 + $0x68c] sm:$0xf]
    %v3313 = vld [vmem:[%s11 + $0x690] sm:$0xff]
    %v3314 = vld [vmem:[%s11 + $0x698] sm:$0xff]
    %v3315 = vld [vmem:[%s11 + $0x6a0] sm:$0xff]
    %v3316 = vld [vmem:[%s11 + $0x6a8] sm:$0xf]
    %v3317 = vld [vmem:[%s11 + $0x6ac] sm:$0xff]
    %v3318 = vld [vmem:[%s11 + $0x6b4] sm:$0xff]
    %v3319 = vld [vmem:[%s11 + $0x6bc] sm:$0xff]
    %v3320 = vld [vmem:[%s11 + $0x6c4] sm:$0xf]
    %v3321 = vld [vmem:[%s11 + $0x6c8] sm:$0xff]
    %v3322 = vld [vmem:[%s11 + $0x6d0] sm:$0xff]
    %v3323 = vld [vmem:[%s11 + $0x6d8] sm:$0xff]
    %v3324 = vld [vmem:[%s11 + $0x6e0] sm:$0xf]
    %v3325 = vld [vmem:[%s11 + $0x6e4] sm:$0xff]
    %v3326 = vld [vmem:[%s11 + $0x6ec] sm:$0xff]
    %v3327 = vld [vmem:[%s11 + $0x6f4] sm:$0xff]
    %v3328 = vld [vmem:[%s11 + $0x6fc] sm:$0xf]
    %v3329 = vld [vmem:[%s12] sm:$0xff]
    %v3331 = vlaneseq
    %v3332 = vshrl.u32 %v3331, 7
    %v3333 = vsub.s32 0, %v3332
    %v3334 = vrot.slane %v3329, %v3333
    %v3335 = vlaneseq
    %v3336 = vshrl.u32 %v3335, 7
    %v3337 = vsub.s32 1, %v3336
    %v3338 = vrot.slane %v3329, %v3337
    %v3339 = vlaneseq
    %v3340 = vshrl.u32 %v3339, 7
    %v3341 = vsub.s32 2, %v3340
    %v3342 = vrot.slane %v3329, %v3341
    %v3343 = vlaneseq
    %v3344 = vshrl.u32 %v3343, 7
    %v3345 = vsub.s32 3, %v3344
    %v3346 = vrot.slane %v3329, %v3345
    %v3347 = vlaneseq
    %v3348 = vshrl.u32 %v3347, 7
    %v3349 = vsub.s32 4, %v3348
    %v3350 = vrot.slane %v3329, %v3349
    %v3351 = vlaneseq
    %v3352 = vshrl.u32 %v3351, 7
    %v3353 = vsub.s32 5, %v3352
    %v3354 = vrot.slane %v3329, %v3353
    %v3355 = vlaneseq
    %v3356 = vshrl.u32 %v3355, 7
    %v3357 = vsub.s32 6, %v3356
    %v3358 = vrot.slane %v3329, %v3357
    %v3622 = vunpack.c.l.b16 %v3073
    %v3623 = vunpack.c.h.b16 %v3073
    %v3624 = vunpack.c.l.b16 %v3074
    %v3625 = vunpack.c.h.b16 %v3074
    %v3626 = vunpack.c.l.b16 %v3075
    %v3627 = vunpack.c.h.b16 %v3075
    %v3628 = vunpack.c.l.b16 %v3076
    %v3629 = vunpack.c.l.b16 %v3077
    %v3630 = vunpack.c.h.b16 %v3077
    %v3631 = vunpack.c.l.b16 %v3078
    %v3632 = vunpack.c.h.b16 %v3078
    %v3633 = vunpack.c.l.b16 %v3079
    %v3634 = vunpack.c.h.b16 %v3079
    %v3635 = vunpack.c.l.b16 %v3080
    %v3636 = vunpack.c.l.b16 %v3081
    %v3637 = vunpack.c.h.b16 %v3081
    %v3638 = vunpack.c.l.b16 %v3082
    %v3639 = vunpack.c.h.b16 %v3082
    %v3640 = vunpack.c.l.b16 %v3083
    %v3641 = vunpack.c.h.b16 %v3083
    %v3642 = vunpack.c.l.b16 %v3084
    %v3643 = vunpack.c.l.b16 %v3085
    %v3644 = vunpack.c.h.b16 %v3085
    %v3645 = vunpack.c.l.b16 %v3086
    %v3646 = vunpack.c.h.b16 %v3086
    %v3647 = vunpack.c.l.b16 %v3087
    %v3648 = vunpack.c.h.b16 %v3087
    %v3649 = vunpack.c.l.b16 %v3088
    %v3650 = vunpack.c.l.b16 %v3089
    %v3651 = vunpack.c.h.b16 %v3089
    %v3652 = vunpack.c.l.b16 %v3090
    %v3653 = vunpack.c.h.b16 %v3090
    %v3654 = vunpack.c.l.b16 %v3091
    %v3655 = vunpack.c.h.b16 %v3091
    %v3656 = vunpack.c.l.b16 %v3092
    %v3657 = vunpack.c.l.b16 %v3093
    %v3658 = vunpack.c.h.b16 %v3093
    %v3659 = vunpack.c.l.b16 %v3094
    %v3660 = vunpack.c.h.b16 %v3094
    %v3661 = vunpack.c.l.b16 %v3095
    %v3662 = vunpack.c.h.b16 %v3095
    %v3663 = vunpack.c.l.b16 %v3096
    %v3664 = vunpack.c.l.b16 %v3097
    %v3665 = vunpack.c.h.b16 %v3097
    %v3666 = vunpack.c.l.b16 %v3098
    %v3667 = vunpack.c.h.b16 %v3098
    %v3668 = vunpack.c.l.b16 %v3099
    %v3669 = vunpack.c.h.b16 %v3099
    %v3670 = vunpack.c.l.b16 %v3100
    %v3671 = vunpack.c.l.b16 %v3101
    %v3672 = vunpack.c.h.b16 %v3101
    %v3673 = vunpack.c.l.b16 %v3102
    %v3674 = vunpack.c.h.b16 %v3102
    %v3675 = vunpack.c.l.b16 %v3103
    %v3676 = vunpack.c.h.b16 %v3103
    %v3677 = vunpack.c.l.b16 %v3104
    %v3678 = vunpack.c.l.b16 %v3105
    %v3679 = vunpack.c.h.b16 %v3105
    %v3680 = vunpack.c.l.b16 %v3106
    %v3681 = vunpack.c.h.b16 %v3106
    %v3682 = vunpack.c.l.b16 %v3107
    %v3683 = vunpack.c.h.b16 %v3107
    %v3684 = vunpack.c.l.b16 %v3108
    %v3685 = vunpack.c.l.b16 %v3109
    %v3686 = vunpack.c.h.b16 %v3109
    %v3687 = vunpack.c.l.b16 %v3110
    %v3688 = vunpack.c.h.b16 %v3110
    %v3689 = vunpack.c.l.b16 %v3111
    %v3690 = vunpack.c.h.b16 %v3111
    %v3691 = vunpack.c.l.b16 %v3112
    %v3692 = vunpack.c.l.b16 %v3113
    %v3693 = vunpack.c.h.b16 %v3113
    %v3694 = vunpack.c.l.b16 %v3114
    %v3695 = vunpack.c.h.b16 %v3114
    %v3696 = vunpack.c.l.b16 %v3115
    %v3697 = vunpack.c.h.b16 %v3115
    %v3698 = vunpack.c.l.b16 %v3116
    %v3699 = vunpack.c.l.b16 %v3117
    %v3700 = vunpack.c.h.b16 %v3117
    %v3701 = vunpack.c.l.b16 %v3118
    %v3702 = vunpack.c.h.b16 %v3118
    %v3703 = vunpack.c.l.b16 %v3119
    %v3704 = vunpack.c.h.b16 %v3119
    %v3705 = vunpack.c.l.b16 %v3120
    %v3706 = vunpack.c.l.b16 %v3121
    %v3707 = vunpack.c.h.b16 %v3121
    %v3708 = vunpack.c.l.b16 %v3122
    %v3709 = vunpack.c.h.b16 %v3122
    %v3710 = vunpack.c.l.b16 %v3123
    %v3711 = vunpack.c.h.b16 %v3123
    %v3712 = vunpack.c.l.b16 %v3124
    %v3713 = vunpack.c.l.b16 %v3125
    %v3714 = vunpack.c.h.b16 %v3125
    %v3715 = vunpack.c.l.b16 %v3126
    %v3716 = vunpack.c.h.b16 %v3126
    %v3717 = vunpack.c.l.b16 %v3127
    %v3718 = vunpack.c.h.b16 %v3127
    %v3719 = vunpack.c.l.b16 %v3128
    %v3720 = vunpack.c.l.b16 %v3129
    %v3721 = vunpack.c.h.b16 %v3129
    %v3722 = vunpack.c.l.b16 %v3130
    %v3723 = vunpack.c.h.b16 %v3130
    %v3724 = vunpack.c.l.b16 %v3131
    %v3725 = vunpack.c.h.b16 %v3131
    %v3726 = vunpack.c.l.b16 %v3132
    %v3727 = vunpack.c.l.b16 %v3133
    %v3728 = vunpack.c.h.b16 %v3133
    %v3729 = vunpack.c.l.b16 %v3134
    %v3730 = vunpack.c.h.b16 %v3134
    %v3731 = vunpack.c.l.b16 %v3135
    %v3732 = vunpack.c.h.b16 %v3135
    %v3733 = vunpack.c.l.b16 %v3136
    %v3734 = vunpack.c.l.b16 %v3137
    %v3735 = vunpack.c.h.b16 %v3137
    %v3736 = vunpack.c.l.b16 %v3138
    %v3737 = vunpack.c.h.b16 %v3138
    %v3738 = vunpack.c.l.b16 %v3139
    %v3739 = vunpack.c.h.b16 %v3139
    %v3740 = vunpack.c.l.b16 %v3140
    %v3741 = vunpack.c.l.b16 %v3141
    %v3742 = vunpack.c.h.b16 %v3141
    %v3743 = vunpack.c.l.b16 %v3142
    %v3744 = vunpack.c.h.b16 %v3142
    %v3745 = vunpack.c.l.b16 %v3143
    %v3746 = vunpack.c.h.b16 %v3143
    %v3747 = vunpack.c.l.b16 %v3144
    %v3748 = vunpack.c.l.b16 %v3145
    %v3749 = vunpack.c.h.b16 %v3145
    %v3750 = vunpack.c.l.b16 %v3146
    %v3751 = vunpack.c.h.b16 %v3146
    %v3752 = vunpack.c.l.b16 %v3147
    %v3753 = vunpack.c.h.b16 %v3147
    %v3754 = vunpack.c.l.b16 %v3148
    %v3755 = vunpack.c.l.b16 %v3149
    %v3756 = vunpack.c.h.b16 %v3149
    %v3757 = vunpack.c.l.b16 %v3150
    %v3758 = vunpack.c.h.b16 %v3150
    %v3759 = vunpack.c.l.b16 %v3151
    %v3760 = vunpack.c.h.b16 %v3151
    %v3761 = vunpack.c.l.b16 %v3152
    %v3762 = vunpack.c.l.b16 %v3153
    %v3763 = vunpack.c.h.b16 %v3153
    %v3764 = vunpack.c.l.b16 %v3154
    %v3765 = vunpack.c.h.b16 %v3154
    %v3766 = vunpack.c.l.b16 %v3155
    %v3767 = vunpack.c.h.b16 %v3155
    %v3768 = vunpack.c.l.b16 %v3156
    %v3769 = vunpack.c.l.b16 %v3157
    %v3770 = vunpack.c.h.b16 %v3157
    %v3771 = vunpack.c.l.b16 %v3158
    %v3772 = vunpack.c.h.b16 %v3158
    %v3773 = vunpack.c.l.b16 %v3159
    %v3774 = vunpack.c.h.b16 %v3159
    %v3775 = vunpack.c.l.b16 %v3160
    %v3776 = vunpack.c.l.b16 %v3161
    %v3777 = vunpack.c.h.b16 %v3161
    %v3778 = vunpack.c.l.b16 %v3162
    %v3779 = vunpack.c.h.b16 %v3162
    %v3780 = vunpack.c.l.b16 %v3163
    %v3781 = vunpack.c.h.b16 %v3163
    %v3782 = vunpack.c.l.b16 %v3164
    %v3783 = vunpack.c.l.b16 %v3165
    %v3784 = vunpack.c.h.b16 %v3165
    %v3785 = vunpack.c.l.b16 %v3166
    %v3786 = vunpack.c.h.b16 %v3166
    %v3787 = vunpack.c.l.b16 %v3167
    %v3788 = vunpack.c.h.b16 %v3167
    %v3789 = vunpack.c.l.b16 %v3168
    %v3790 = vunpack.c.l.b16 %v3169
    %v3791 = vunpack.c.h.b16 %v3169
    %v3792 = vunpack.c.l.b16 %v3170
    %v3793 = vunpack.c.h.b16 %v3170
    %v3794 = vunpack.c.l.b16 %v3171
    %v3795 = vunpack.c.h.b16 %v3171
    %v3796 = vunpack.c.l.b16 %v3172
    %v3797 = vunpack.c.l.b16 %v3173
    %v3798 = vunpack.c.h.b16 %v3173
    %v3799 = vunpack.c.l.b16 %v3174
    %v3800 = vunpack.c.h.b16 %v3174
    %v3801 = vunpack.c.l.b16 %v3175
    %v3802 = vunpack.c.h.b16 %v3175
    %v3803 = vunpack.c.l.b16 %v3176
    %v3804 = vunpack.c.l.b16 %v3177
    %v3805 = vunpack.c.h.b16 %v3177
    %v3806 = vunpack.c.l.b16 %v3178
    %v3807 = vunpack.c.h.b16 %v3178
    %v3808 = vunpack.c.l.b16 %v3179
    %v3809 = vunpack.c.h.b16 %v3179
    %v3810 = vunpack.c.l.b16 %v3180
    %v3811 = vunpack.c.l.b16 %v3181
    %v3812 = vunpack.c.h.b16 %v3181
    %v3813 = vunpack.c.l.b16 %v3182
    %v3814 = vunpack.c.h.b16 %v3182
    %v3815 = vunpack.c.l.b16 %v3183
    %v3816 = vunpack.c.h.b16 %v3183
    %v3817 = vunpack.c.l.b16 %v3184
    %v3818 = vunpack.c.l.b16 %v3185
    %v3819 = vunpack.c.h.b16 %v3185
    %v3820 = vunpack.c.l.b16 %v3186
    %v3821 = vunpack.c.h.b16 %v3186
    %v3822 = vunpack.c.l.b16 %v3187
    %v3823 = vunpack.c.h.b16 %v3187
    %v3824 = vunpack.c.l.b16 %v3188
    %v3825 = vunpack.c.l.b16 %v3189
    %v3826 = vunpack.c.h.b16 %v3189
    %v3827 = vunpack.c.l.b16 %v3190
    %v3828 = vunpack.c.h.b16 %v3190
    %v3829 = vunpack.c.l.b16 %v3191
    %v3830 = vunpack.c.h.b16 %v3191
    %v3831 = vunpack.c.l.b16 %v3192
    %v3832 = vunpack.c.l.b16 %v3193
    %v3833 = vunpack.c.h.b16 %v3193
    %v3834 = vunpack.c.l.b16 %v3194
    %v3835 = vunpack.c.h.b16 %v3194
    %v3836 = vunpack.c.l.b16 %v3195
    %v3837 = vunpack.c.h.b16 %v3195
    %v3838 = vunpack.c.l.b16 %v3196
    %v3839 = vunpack.c.l.b16 %v3197
    %v3840 = vunpack.c.h.b16 %v3197
    %v3841 = vunpack.c.l.b16 %v3198
    %v3842 = vunpack.c.h.b16 %v3198
    %v3843 = vunpack.c.l.b16 %v3199
    %v3844 = vunpack.c.h.b16 %v3199
    %v3845 = vunpack.c.l.b16 %v3200
    %v3846 = vunpack.c.l.b16 %v3201
    %v3847 = vunpack.c.h.b16 %v3201
    %v3848 = vunpack.c.l.b16 %v3202
    %v3849 = vunpack.c.h.b16 %v3202
    %v3850 = vunpack.c.l.b16 %v3203
    %v3851 = vunpack.c.h.b16 %v3203
    %v3852 = vunpack.c.l.b16 %v3204
    %v3853 = vunpack.c.l.b16 %v3205
    %v3854 = vunpack.c.h.b16 %v3205
    %v3855 = vunpack.c.l.b16 %v3206
    %v3856 = vunpack.c.h.b16 %v3206
    %v3857 = vunpack.c.l.b16 %v3207
    %v3858 = vunpack.c.h.b16 %v3207
    %v3859 = vunpack.c.l.b16 %v3208
    %v3860 = vunpack.c.l.b16 %v3209
    %v3861 = vunpack.c.h.b16 %v3209
    %v3862 = vunpack.c.l.b16 %v3210
    %v3863 = vunpack.c.h.b16 %v3210
    %v3864 = vunpack.c.l.b16 %v3211
    %v3865 = vunpack.c.h.b16 %v3211
    %v3866 = vunpack.c.l.b16 %v3212
    %v3867 = vunpack.c.l.b16 %v3213
    %v3868 = vunpack.c.h.b16 %v3213
    %v3869 = vunpack.c.l.b16 %v3214
    %v3870 = vunpack.c.h.b16 %v3214
    %v3871 = vunpack.c.l.b16 %v3215
    %v3872 = vunpack.c.h.b16 %v3215
    %v3873 = vunpack.c.l.b16 %v3216
    %v3874 = vunpack.c.l.b16 %v3217
    %v3875 = vunpack.c.h.b16 %v3217
    %v3876 = vunpack.c.l.b16 %v3218
    %v3877 = vunpack.c.h.b16 %v3218
    %v3878 = vunpack.c.l.b16 %v3219
    %v3879 = vunpack.c.h.b16 %v3219
    %v3880 = vunpack.c.l.b16 %v3220
    %v3881 = vunpack.c.l.b16 %v3221
    %v3882 = vunpack.c.h.b16 %v3221
    %v3883 = vunpack.c.l.b16 %v3222
    %v3884 = vunpack.c.h.b16 %v3222
    %v3885 = vunpack.c.l.b16 %v3223
    %v3886 = vunpack.c.h.b16 %v3223
    %v3887 = vunpack.c.l.b16 %v3224
    %v3888 = vunpack.c.l.b16 %v3225
    %v3889 = vunpack.c.h.b16 %v3225
    %v3890 = vunpack.c.l.b16 %v3226
    %v3891 = vunpack.c.h.b16 %v3226
    %v3892 = vunpack.c.l.b16 %v3227
    %v3893 = vunpack.c.h.b16 %v3227
    %v3894 = vunpack.c.l.b16 %v3228
    %v3895 = vunpack.c.l.b16 %v3229
    %v3896 = vunpack.c.h.b16 %v3229
    %v3897 = vunpack.c.l.b16 %v3230
    %v3898 = vunpack.c.h.b16 %v3230
    %v3899 = vunpack.c.l.b16 %v3231
    %v3900 = vunpack.c.h.b16 %v3231
    %v3901 = vunpack.c.l.b16 %v3232
    %v3902 = vunpack.c.l.b16 %v3233
    %v3903 = vunpack.c.h.b16 %v3233
    %v3904 = vunpack.c.l.b16 %v3234
    %v3905 = vunpack.c.h.b16 %v3234
    %v3906 = vunpack.c.l.b16 %v3235
    %v3907 = vunpack.c.h.b16 %v3235
    %v3908 = vunpack.c.l.b16 %v3236
    %v3909 = vunpack.c.l.b16 %v3237
    %v3910 = vunpack.c.h.b16 %v3237
    %v3911 = vunpack.c.l.b16 %v3238
    %v3912 = vunpack.c.h.b16 %v3238
    %v3913 = vunpack.c.l.b16 %v3239
    %v3914 = vunpack.c.h.b16 %v3239
    %v3915 = vunpack.c.l.b16 %v3240
    %v3916 = vunpack.c.l.b16 %v3241
    %v3917 = vunpack.c.h.b16 %v3241
    %v3918 = vunpack.c.l.b16 %v3242
    %v3919 = vunpack.c.h.b16 %v3242
    %v3920 = vunpack.c.l.b16 %v3243
    %v3921 = vunpack.c.h.b16 %v3243
    %v3922 = vunpack.c.l.b16 %v3244
    %v3923 = vunpack.c.l.b16 %v3245
    %v3924 = vunpack.c.h.b16 %v3245
    %v3925 = vunpack.c.l.b16 %v3246
    %v3926 = vunpack.c.h.b16 %v3246
    %v3927 = vunpack.c.l.b16 %v3247
    %v3928 = vunpack.c.h.b16 %v3247
    %v3929 = vunpack.c.l.b16 %v3248
    %v3930 = vunpack.c.l.b16 %v3249
    %v3931 = vunpack.c.h.b16 %v3249
    %v3932 = vunpack.c.l.b16 %v3250
    %v3933 = vunpack.c.h.b16 %v3250
    %v3934 = vunpack.c.l.b16 %v3251
    %v3935 = vunpack.c.h.b16 %v3251
    %v3936 = vunpack.c.l.b16 %v3252
    %v3937 = vunpack.c.l.b16 %v3253
    %v3938 = vunpack.c.h.b16 %v3253
    %v3939 = vunpack.c.l.b16 %v3254
    %v3940 = vunpack.c.h.b16 %v3254
    %v3941 = vunpack.c.l.b16 %v3255
    %v3942 = vunpack.c.h.b16 %v3255
    %v3943 = vunpack.c.l.b16 %v3256
    %v3944 = vunpack.c.l.b16 %v3257
    %v3945 = vunpack.c.h.b16 %v3257
    %v3946 = vunpack.c.l.b16 %v3258
    %v3947 = vunpack.c.h.b16 %v3258
    %v3948 = vunpack.c.l.b16 %v3259
    %v3949 = vunpack.c.h.b16 %v3259
    %v3950 = vunpack.c.l.b16 %v3260
    %v3951 = vunpack.c.l.b16 %v3261
    %v3952 = vunpack.c.h.b16 %v3261
    %v3953 = vunpack.c.l.b16 %v3262
    %v3954 = vunpack.c.h.b16 %v3262
    %v3955 = vunpack.c.l.b16 %v3263
    %v3956 = vunpack.c.h.b16 %v3263
    %v3957 = vunpack.c.l.b16 %v3264
    %v3958 = vunpack.c.l.b16 %v3265
    %v3959 = vunpack.c.h.b16 %v3265
    %v3960 = vunpack.c.l.b16 %v3266
    %v3961 = vunpack.c.h.b16 %v3266
    %v3962 = vunpack.c.l.b16 %v3267
    %v3963 = vunpack.c.h.b16 %v3267
    %v3964 = vunpack.c.l.b16 %v3268
    %v3965 = vunpack.c.l.b16 %v3269
    %v3966 = vunpack.c.h.b16 %v3269
    %v3967 = vunpack.c.l.b16 %v3270
    %v3968 = vunpack.c.h.b16 %v3270
    %v3969 = vunpack.c.l.b16 %v3271
    %v3970 = vunpack.c.h.b16 %v3271
    %v3971 = vunpack.c.l.b16 %v3272
    %v3972 = vunpack.c.l.b16 %v3273
    %v3973 = vunpack.c.h.b16 %v3273
    %v3974 = vunpack.c.l.b16 %v3274
    %v3975 = vunpack.c.h.b16 %v3274
    %v3976 = vunpack.c.l.b16 %v3275
    %v3977 = vunpack.c.h.b16 %v3275
    %v3978 = vunpack.c.l.b16 %v3276
    %v3979 = vunpack.c.l.b16 %v3277
    %v3980 = vunpack.c.h.b16 %v3277
    %v3981 = vunpack.c.l.b16 %v3278
    %v3982 = vunpack.c.h.b16 %v3278
    %v3983 = vunpack.c.l.b16 %v3279
    %v3984 = vunpack.c.h.b16 %v3279
    %v3985 = vunpack.c.l.b16 %v3280
    %v3986 = vunpack.c.l.b16 %v3281
    %v3987 = vunpack.c.h.b16 %v3281
    %v3988 = vunpack.c.l.b16 %v3282
    %v3989 = vunpack.c.h.b16 %v3282
    %v3990 = vunpack.c.l.b16 %v3283
    %v3991 = vunpack.c.h.b16 %v3283
    %v3992 = vunpack.c.l.b16 %v3284
    %v3993 = vunpack.c.l.b16 %v3285
    %v3994 = vunpack.c.h.b16 %v3285
    %v3995 = vunpack.c.l.b16 %v3286
    %v3996 = vunpack.c.h.b16 %v3286
    %v3997 = vunpack.c.l.b16 %v3287
    %v3998 = vunpack.c.h.b16 %v3287
    %v3999 = vunpack.c.l.b16 %v3288
    %v4000 = vunpack.c.l.b16 %v3289
    %v4001 = vunpack.c.h.b16 %v3289
    %v4002 = vunpack.c.l.b16 %v3290
    %v4003 = vunpack.c.h.b16 %v3290
    %v4004 = vunpack.c.l.b16 %v3291
    %v4005 = vunpack.c.h.b16 %v3291
    %v4006 = vunpack.c.l.b16 %v3292
    %v4007 = vunpack.c.l.b16 %v3293
    %v4008 = vunpack.c.h.b16 %v3293
    %v4009 = vunpack.c.l.b16 %v3294
    %v4010 = vunpack.c.h.b16 %v3294
    %v4011 = vunpack.c.l.b16 %v3295
    %v4012 = vunpack.c.h.b16 %v3295
    %v4013 = vunpack.c.l.b16 %v3296
    %v4014 = vunpack.c.l.b16 %v3297
    %v4015 = vunpack.c.h.b16 %v3297
    %v4016 = vunpack.c.l.b16 %v3298
    %v4017 = vunpack.c.h.b16 %v3298
    %v4018 = vunpack.c.l.b16 %v3299
    %v4019 = vunpack.c.h.b16 %v3299
    %v4020 = vunpack.c.l.b16 %v3300
    %v4021 = vunpack.c.l.b16 %v3301
    %v4022 = vunpack.c.h.b16 %v3301
    %v4023 = vunpack.c.l.b16 %v3302
    %v4024 = vunpack.c.h.b16 %v3302
    %v4025 = vunpack.c.l.b16 %v3303
    %v4026 = vunpack.c.h.b16 %v3303
    %v4027 = vunpack.c.l.b16 %v3304
    %v4028 = vunpack.c.l.b16 %v3305
    %v4029 = vunpack.c.h.b16 %v3305
    %v4030 = vunpack.c.l.b16 %v3306
    %v4031 = vunpack.c.h.b16 %v3306
    %v4032 = vunpack.c.l.b16 %v3307
    %v4033 = vunpack.c.h.b16 %v3307
    %v4034 = vunpack.c.l.b16 %v3308
    %v4035 = vunpack.c.l.b16 %v3309
    %v4036 = vunpack.c.h.b16 %v3309
    %v4037 = vunpack.c.l.b16 %v3310
    %v4038 = vunpack.c.h.b16 %v3310
    %v4039 = vunpack.c.l.b16 %v3311
    %v4040 = vunpack.c.h.b16 %v3311
    %v4041 = vunpack.c.l.b16 %v3312
    %v4042 = vunpack.c.l.b16 %v3313
    %v4043 = vunpack.c.h.b16 %v3313
    %v4044 = vunpack.c.l.b16 %v3314
    %v4045 = vunpack.c.h.b16 %v3314
    %v4046 = vunpack.c.l.b16 %v3315
    %v4047 = vunpack.c.h.b16 %v3315
    %v4048 = vunpack.c.l.b16 %v3316
    %v4049 = vunpack.c.l.b16 %v3317
    %v4050 = vunpack.c.h.b16 %v3317
    %v4051 = vunpack.c.l.b16 %v3318
    %v4052 = vunpack.c.h.b16 %v3318
    %v4053 = vunpack.c.l.b16 %v3319
    %v4054 = vunpack.c.h.b16 %v3319
    %v4055 = vunpack.c.l.b16 %v3320
    %v4056 = vunpack.c.l.b16 %v3321
    %v4057 = vunpack.c.h.b16 %v3321
    %v4058 = vunpack.c.l.b16 %v3322
    %v4059 = vunpack.c.h.b16 %v3322
    %v4060 = vunpack.c.l.b16 %v3323
    %v4061 = vunpack.c.h.b16 %v3323
    %v4062 = vunpack.c.l.b16 %v3324
    %v4063 = vunpack.c.l.b16 %v3325
    %v4064 = vunpack.c.h.b16 %v3325
    %v4065 = vunpack.c.l.b16 %v3326
    %v4066 = vunpack.c.h.b16 %v3326
    %v4067 = vunpack.c.l.b16 %v3327
    %v4068 = vunpack.c.h.b16 %v3327
    %v4069 = vunpack.c.l.b16 %v3328
    %v4070 = vpack.c.b16 %v3629, %v3622
    %v4071 = vpack.c.b16 %v3630, %v3623
    %v4072 = vpack.c.b16 %v3631, %v3624
    %v4073 = vpack.c.b16 %v3632, %v3625
    %v4074 = vpack.c.b16 %v3633, %v3626
    %v4075 = vpack.c.b16 %v3634, %v3627
    %v4076 = vpack.c.b16 %v3635, %v3628
    %v4077 = vpack.c.b16 %v3643, %v3636
    %v4078 = vpack.c.b16 %v3644, %v3637
    %v4079 = vpack.c.b16 %v3645, %v3638
    %v4080 = vpack.c.b16 %v3646, %v3639
    %v4081 = vpack.c.b16 %v3647, %v3640
    %v4082 = vpack.c.b16 %v3648, %v3641
    %v4083 = vpack.c.b16 %v3649, %v3642
    %v4084 = vpack.c.b16 %v3657, %v3650
    %v4085 = vpack.c.b16 %v3658, %v3651
    %v4086 = vpack.c.b16 %v3659, %v3652
    %v4087 = vpack.c.b16 %v3660, %v3653
    %v4088 = vpack.c.b16 %v3661, %v3654
    %v4089 = vpack.c.b16 %v3662, %v3655
    %v4090 = vpack.c.b16 %v3663, %v3656
    %v4091 = vpack.c.b16 %v3671, %v3664
    %v4092 = vpack.c.b16 %v3672, %v3665
    %v4093 = vpack.c.b16 %v3673, %v3666
    %v4094 = vpack.c.b16 %v3674, %v3667
    %v4095 = vpack.c.b16 %v3675, %v3668
    %v4096 = vpack.c.b16 %v3676, %v3669
    %v4097 = vpack.c.b16 %v3677, %v3670
    %v4098 = vpack.c.b16 %v3685, %v3678
    %v4099 = vpack.c.b16 %v3686, %v3679
    %v4100 = vpack.c.b16 %v3687, %v3680
    %v4101 = vpack.c.b16 %v3688, %v3681
    %v4102 = vpack.c.b16 %v3689, %v3682
    %v4103 = vpack.c.b16 %v3690, %v3683
    %v4104 = vpack.c.b16 %v3691, %v3684
    %v4105 = vpack.c.b16 %v3699, %v3692
    %v4106 = vpack.c.b16 %v3700, %v3693
    %v4107 = vpack.c.b16 %v3701, %v3694
    %v4108 = vpack.c.b16 %v3702, %v3695
    %v4109 = vpack.c.b16 %v3703, %v3696
    %v4110 = vpack.c.b16 %v3704, %v3697
    %v4111 = vpack.c.b16 %v3705, %v3698
    %v4112 = vpack.c.b16 %v3713, %v3706
    %v4113 = vpack.c.b16 %v3714, %v3707
    %v4114 = vpack.c.b16 %v3715, %v3708
    %v4115 = vpack.c.b16 %v3716, %v3709
    %v4116 = vpack.c.b16 %v3717, %v3710
    %v4117 = vpack.c.b16 %v3718, %v3711
    %v4118 = vpack.c.b16 %v3719, %v3712
    %v4119 = vpack.c.b16 %v3727, %v3720
    %v4120 = vpack.c.b16 %v3728, %v3721
    %v4121 = vpack.c.b16 %v3729, %v3722
    %v4122 = vpack.c.b16 %v3730, %v3723
    %v4123 = vpack.c.b16 %v3731, %v3724
    %v4124 = vpack.c.b16 %v3732, %v3725
    %v4125 = vpack.c.b16 %v3733, %v3726
    %v4126 = vpack.c.b16 %v3741, %v3734
    %v4127 = vpack.c.b16 %v3742, %v3735
    %v4128 = vpack.c.b16 %v3743, %v3736
    %v4129 = vpack.c.b16 %v3744, %v3737
    %v4130 = vpack.c.b16 %v3745, %v3738
    %v4131 = vpack.c.b16 %v3746, %v3739
    %v4132 = vpack.c.b16 %v3747, %v3740
    %v4133 = vpack.c.b16 %v3755, %v3748
    %v4134 = vpack.c.b16 %v3756, %v3749
    %v4135 = vpack.c.b16 %v3757, %v3750
    %v4136 = vpack.c.b16 %v3758, %v3751
    %v4137 = vpack.c.b16 %v3759, %v3752
    %v4138 = vpack.c.b16 %v3760, %v3753
    %v4139 = vpack.c.b16 %v3761, %v3754
    %v4140 = vpack.c.b16 %v3769, %v3762
    %v4141 = vpack.c.b16 %v3770, %v3763
    %v4142 = vpack.c.b16 %v3771, %v3764
    %v4143 = vpack.c.b16 %v3772, %v3765
    %v4144 = vpack.c.b16 %v3773, %v3766
    %v4145 = vpack.c.b16 %v3774, %v3767
    %v4146 = vpack.c.b16 %v3775, %v3768
    %v4147 = vpack.c.b16 %v3783, %v3776
    %v4148 = vpack.c.b16 %v3784, %v3777
    %v4149 = vpack.c.b16 %v3785, %v3778
    %v4150 = vpack.c.b16 %v3786, %v3779
    %v4151 = vpack.c.b16 %v3787, %v3780
    %v4152 = vpack.c.b16 %v3788, %v3781
    %v4153 = vpack.c.b16 %v3789, %v3782
    %v4154 = vpack.c.b16 %v3797, %v3790
    %v4155 = vpack.c.b16 %v3798, %v3791
    %v4156 = vpack.c.b16 %v3799, %v3792
    %v4157 = vpack.c.b16 %v3800, %v3793
    %v4158 = vpack.c.b16 %v3801, %v3794
    %v4159 = vpack.c.b16 %v3802, %v3795
    %v4160 = vpack.c.b16 %v3803, %v3796
    %v4161 = vpack.c.b16 %v3811, %v3804
    %v4162 = vpack.c.b16 %v3812, %v3805
    %v4163 = vpack.c.b16 %v3813, %v3806
    %v4164 = vpack.c.b16 %v3814, %v3807
    %v4165 = vpack.c.b16 %v3815, %v3808
    %v4166 = vpack.c.b16 %v3816, %v3809
    %v4167 = vpack.c.b16 %v3817, %v3810
    %v4168 = vpack.c.b16 %v3825, %v3818
    %v4169 = vpack.c.b16 %v3826, %v3819
    %v4170 = vpack.c.b16 %v3827, %v3820
    %v4171 = vpack.c.b16 %v3828, %v3821
    %v4172 = vpack.c.b16 %v3829, %v3822
    %v4173 = vpack.c.b16 %v3830, %v3823
    %v4174 = vpack.c.b16 %v3831, %v3824
    %v4175 = vpack.c.b16 %v3839, %v3832
    %v4176 = vpack.c.b16 %v3840, %v3833
    %v4177 = vpack.c.b16 %v3841, %v3834
    %v4178 = vpack.c.b16 %v3842, %v3835
    %v4179 = vpack.c.b16 %v3843, %v3836
    %v4180 = vpack.c.b16 %v3844, %v3837
    %v4181 = vpack.c.b16 %v3845, %v3838
    %v4182 = vpack.c.b16 %v3853, %v3846
    %v4183 = vpack.c.b16 %v3854, %v3847
    %v4184 = vpack.c.b16 %v3855, %v3848
    %v4185 = vpack.c.b16 %v3856, %v3849
    %v4186 = vpack.c.b16 %v3857, %v3850
    %v4187 = vpack.c.b16 %v3858, %v3851
    %v4188 = vpack.c.b16 %v3859, %v3852
    %v4189 = vpack.c.b16 %v3867, %v3860
    %v4190 = vpack.c.b16 %v3868, %v3861
    %v4191 = vpack.c.b16 %v3869, %v3862
    %v4192 = vpack.c.b16 %v3870, %v3863
    %v4193 = vpack.c.b16 %v3871, %v3864
    %v4194 = vpack.c.b16 %v3872, %v3865
    %v4195 = vpack.c.b16 %v3873, %v3866
    %v4196 = vpack.c.b16 %v3881, %v3874
    %v4197 = vpack.c.b16 %v3882, %v3875
    %v4198 = vpack.c.b16 %v3883, %v3876
    %v4199 = vpack.c.b16 %v3884, %v3877
    %v4200 = vpack.c.b16 %v3885, %v3878
    %v4201 = vpack.c.b16 %v3886, %v3879
    %v4202 = vpack.c.b16 %v3887, %v3880
    %v4203 = vpack.c.b16 %v3895, %v3888
    %v4204 = vpack.c.b16 %v3896, %v3889
    %v4205 = vpack.c.b16 %v3897, %v3890
    %v4206 = vpack.c.b16 %v3898, %v3891
    %v4207 = vpack.c.b16 %v3899, %v3892
    %v4208 = vpack.c.b16 %v3900, %v3893
    %v4209 = vpack.c.b16 %v3901, %v3894
    %v4210 = vpack.c.b16 %v3909, %v3902
    %v4211 = vpack.c.b16 %v3910, %v3903
    %v4212 = vpack.c.b16 %v3911, %v3904
    %v4213 = vpack.c.b16 %v3912, %v3905
    %v4214 = vpack.c.b16 %v3913, %v3906
    %v4215 = vpack.c.b16 %v3914, %v3907
    %v4216 = vpack.c.b16 %v3915, %v3908
    %v4217 = vpack.c.b16 %v3923, %v3916
    %v4218 = vpack.c.b16 %v3924, %v3917
    %v4219 = vpack.c.b16 %v3925, %v3918
    %v4220 = vpack.c.b16 %v3926, %v3919
    %v4221 = vpack.c.b16 %v3927, %v3920
    %v4222 = vpack.c.b16 %v3928, %v3921
    %v4223 = vpack.c.b16 %v3929, %v3922
    %v4224 = vpack.c.b16 %v3937, %v3930
    %v4225 = vpack.c.b16 %v3938, %v3931
    %v4226 = vpack.c.b16 %v3939, %v3932
    %v4227 = vpack.c.b16 %v3940, %v3933
    %v4228 = vpack.c.b16 %v3941, %v3934
    %v4229 = vpack.c.b16 %v3942, %v3935
    %v4230 = vpack.c.b16 %v3943, %v3936
    %v4231 = vpack.c.b16 %v3951, %v3944
    %v4232 = vpack.c.b16 %v3952, %v3945
    %v4233 = vpack.c.b16 %v3953, %v3946
    %v4234 = vpack.c.b16 %v3954, %v3947
    %v4235 = vpack.c.b16 %v3955, %v3948
    %v4236 = vpack.c.b16 %v3956, %v3949
    %v4237 = vpack.c.b16 %v3957, %v3950
    %v4238 = vpack.c.b16 %v3965, %v3958
    %v4239 = vpack.c.b16 %v3966, %v3959
    %v4240 = vpack.c.b16 %v3967, %v3960
    %v4241 = vpack.c.b16 %v3968, %v3961
    %v4242 = vpack.c.b16 %v3969, %v3962
    %v4243 = vpack.c.b16 %v3970, %v3963
    %v4244 = vpack.c.b16 %v3971, %v3964
    %v4245 = vpack.c.b16 %v3979, %v3972
    %v4246 = vpack.c.b16 %v3980, %v3973
    %v4247 = vpack.c.b16 %v3981, %v3974
    %v4248 = vpack.c.b16 %v3982, %v3975
    %v4249 = vpack.c.b16 %v3983, %v3976
    %v4250 = vpack.c.b16 %v3984, %v3977
    %v4251 = vpack.c.b16 %v3985, %v3978
    %v4252 = vpack.c.b16 %v3993, %v3986
    %v4253 = vpack.c.b16 %v3994, %v3987
    %v4254 = vpack.c.b16 %v3995, %v3988
    %v4255 = vpack.c.b16 %v3996, %v3989
    %v4256 = vpack.c.b16 %v3997, %v3990
    %v4257 = vpack.c.b16 %v3998, %v3991
    %v4258 = vpack.c.b16 %v3999, %v3992
    %v4259 = vpack.c.b16 %v4007, %v4000
    %v4260 = vpack.c.b16 %v4008, %v4001
    %v4261 = vpack.c.b16 %v4009, %v4002
    %v4262 = vpack.c.b16 %v4010, %v4003
    %v4263 = vpack.c.b16 %v4011, %v4004
    %v4264 = vpack.c.b16 %v4012, %v4005
    %v4265 = vpack.c.b16 %v4013, %v4006
    %v4266 = vpack.c.b16 %v4021, %v4014
    %v4267 = vpack.c.b16 %v4022, %v4015
    %v4268 = vpack.c.b16 %v4023, %v4016
    %v4269 = vpack.c.b16 %v4024, %v4017
    %v4270 = vpack.c.b16 %v4025, %v4018
    %v4271 = vpack.c.b16 %v4026, %v4019
    %v4272 = vpack.c.b16 %v4027, %v4020
    %v4273 = vpack.c.b16 %v4035, %v4028
    %v4274 = vpack.c.b16 %v4036, %v4029
    %v4275 = vpack.c.b16 %v4037, %v4030
    %v4276 = vpack.c.b16 %v4038, %v4031
    %v4277 = vpack.c.b16 %v4039, %v4032
    %v4278 = vpack.c.b16 %v4040, %v4033
    %v4279 = vpack.c.b16 %v4041, %v4034
    %v4280 = vpack.c.b16 %v4049, %v4042
    %v4281 = vpack.c.b16 %v4050, %v4043
    %v4282 = vpack.c.b16 %v4051, %v4044
    %v4283 = vpack.c.b16 %v4052, %v4045
    %v4284 = vpack.c.b16 %v4053, %v4046
    %v4285 = vpack.c.b16 %v4054, %v4047
    %v4286 = vpack.c.b16 %v4055, %v4048
    %v4287 = vpack.c.b16 %v4063, %v4056
    %v4288 = vpack.c.b16 %v4064, %v4057
    %v4289 = vpack.c.b16 %v4065, %v4058
    %v4290 = vpack.c.b16 %v4066, %v4059
    %v4291 = vpack.c.b16 %v4067, %v4060
    %v4292 = vpack.c.b16 %v4068, %v4061
    %v4293 = vpack.c.b16 %v4069, %v4062
    %4518 = vmatprep.subr.bf16.mxu0 %v4071
    %4519 = vmatpush1.bf16.msra.mxu0 %v4070
    %4520 = vmatprep.subr.bf16.mxu0 %v4078
    %4521 = vmatpush1.bf16.msra.mxu0 %v4077
    %4522 = vmatprep.subr.bf16.mxu0 %v4085
    %4523 = vmatpush1.bf16.msra.mxu0 %v4084
    %4524 = vmatprep.subr.bf16.mxu0 %v4092
    %4525 = vmatpush1.bf16.msra.mxu0 %v4091
    %4526 = vmatprep.subr.bf16.mxu0 %v4099
    %4527 = vmatpush1.bf16.msra.mxu0 %v4098
    %4528 = vmatprep.subr.bf16.mxu0 %v4106
    %4529 = vmatpush1.bf16.msra.mxu0 %v4105
    %4530 = vmatprep.subr.bf16.mxu0 %v4113
    %4531 = vmatpush1.bf16.msra.mxu0 %v4112
    %4532 = vmatprep.subr.bf16.mxu0 %v4120
    %4533 = vmatpush1.bf16.msra.mxu0 %v4119
    %4534 = vmatprep.subr.bf16.mxu0 %v4127
    %4535 = vmatpush1.bf16.msra.mxu0 %v4126
    %4536 = vmatprep.subr.bf16.mxu0 %v4134
    %4537 = vmatpush1.bf16.msra.mxu0 %v4133
    %4538 = vmatprep.subr.bf16.mxu0 %v4141
    %4539 = vmatpush1.bf16.msra.mxu0 %v4140
    %4540 = vmatprep.subr.bf16.mxu0 %v4148
    %4541 = vmatpush1.bf16.msra.mxu0 %v4147
    %4542 = vmatprep.subr.bf16.mxu0 %v4155
    %4543 = vmatpush1.bf16.msra.mxu0 %v4154
    %4544 = vmatprep.subr.bf16.mxu0 %v4162
    %4545 = vmatpush1.bf16.msra.mxu0 %v4161
    %4546 = vmatprep.subr.bf16.mxu0 %v4169
    %4547 = vmatpush1.bf16.msra.mxu0 %v4168
    %4548 = vmatprep.subr.bf16.mxu0 %v4176
    %4549 = vmatpush1.bf16.msra.mxu0 %v4175
    %4550 = vmatprep.mubr.bf16.mxu0 %v3070
    %4551 = vmatmul.mubr.bf16.gmra.mrb[0].mxu0 %v3069
    %v4552 = vpop.f32.mrb[0].mxu0
    %v4553 = vadd.f32 %v3334, %v4552
    %v4554 = vpop.f32.mrb[0].mxu0
    %v4555 = vadd.f32 %v3338, %v4554
    %v4556 = vpop.f32.mrb[0].mxu0
    %v4557 = vpop.f32.mrb[0].mxu0
    %4558 = vdwg.mxu0
    %4559 = vmatprep.subr.bf16.mxu0 %v4183
    %4560 = vmatpush1.bf16.msra.mxu0 %v4182
    %4561 = vmatprep.subr.bf16.mxu0 %v4190
    %4562 = vmatpush1.bf16.msra.mxu0 %v4189
    %4563 = vmatprep.subr.bf16.mxu0 %v4197
    %4564 = vmatpush1.bf16.msra.mxu0 %v4196
    %4565 = vmatprep.subr.bf16.mxu0 %v4204
    %4566 = vmatpush1.bf16.msra.mxu0 %v4203
    %4567 = vmatprep.subr.bf16.mxu0 %v4211
    %4568 = vmatpush1.bf16.msra.mxu0 %v4210
    %4569 = vmatprep.subr.bf16.mxu0 %v4218
    %4570 = vmatpush1.bf16.msra.mxu0 %v4217
    %4571 = vmatprep.subr.bf16.mxu0 %v4225
    %4572 = vmatpush1.bf16.msra.mxu0 %v4224
    %4573 = vmatprep.subr.bf16.mxu0 %v4232
    %4574 = vmatpush1.bf16.msra.mxu0 %v4231
    %4575 = vmatprep.subr.bf16.mxu0 %v4239
    %4576 = vmatpush1.bf16.msra.mxu0 %v4238
    %4577 = vmatprep.subr.bf16.mxu0 %v4246
    %4578 = vmatpush1.bf16.msra.mxu0 %v4245
    %4579 = vmatprep.subr.bf16.mxu0 %v4253
    %4580 = vmatpush1.bf16.msra.mxu0 %v4252
    %4581 = vmatprep.subr.bf16.mxu0 %v4260
    %4582 = vmatpush1.bf16.msra.mxu0 %v4259
    %4583 = vmatprep.subr.bf16.mxu0 %v4267
    %4584 = vmatpush1.bf16.msra.mxu0 %v4266
    %4585 = vmatprep.subr.bf16.mxu0 %v4274
    %4586 = vmatpush1.bf16.msra.mxu0 %v4273
    %4587 = vmatprep.subr.bf16.mxu0 %v4281
    %4588 = vmatpush1.bf16.msra.mxu0 %v4280
    %4589 = vmatprep.subr.bf16.mxu0 %v4288
    %4590 = vmatpush1.bf16.msra.mxu0 %v4287
    %4591 = vmatprep.mubr.bf16.mxu0 %v3072
    %4592 = vmatmul.mubr.bf16.gmra.mrb[0].mxu0 %v3071
    %v4593 = vpop.f32.mrb[0].mxu0
    %v4594 = vadd.f32 %v4553, %v4593
    %v4595 = vpop.f32.mrb[0].mxu0
    %v4596 = vadd.f32 %v4555, %v4595
    %v4597 = vpop.f32.mrb[0].mxu0
    %v4598 = vpop.f32.mrb[0].mxu0
    %4599 = vdwg.mxu0
    %4600 = vmatprep.subr.bf16.mxu0 %v4073
    %4601 = vmatpush1.bf16.msra.mxu0 %v4072
    %4602 = vmatprep.subr.bf16.mxu0 %v4080
    %4603 = vmatpush1.bf16.msra.mxu0 %v4079
    %4604 = vmatprep.subr.bf16.mxu0 %v4087
    %4605 = vmatpush1.bf16.msra.mxu0 %v4086
    %4606 = vmatprep.subr.bf16.mxu0 %v4094
    %4607 = vmatpush1.bf16.msra.mxu0 %v4093
    %4608 = vmatprep.subr.bf16.mxu0 %v4101
    %4609 = vmatpush1.bf16.msra.mxu0 %v4100
    %4610 = vmatprep.subr.bf16.mxu0 %v4108
    %4611 = vmatpush1.bf16.msra.mxu0 %v4107
    %4612 = vmatprep.subr.bf16.mxu0 %v4115
    %4613 = vmatpush1.bf16.msra.mxu0 %v4114
    %4614 = vmatprep.subr.bf16.mxu0 %v4122
    %4615 = vmatpush1.bf16.msra.mxu0 %v4121
    %4616 = vmatprep.subr.bf16.mxu0 %v4129
    %4617 = vmatpush1.bf16.msra.mxu0 %v4128
    %4618 = vmatprep.subr.bf16.mxu0 %v4136
    %4619 = vmatpush1.bf16.msra.mxu0 %v4135
    %4620 = vmatprep.subr.bf16.mxu0 %v4143
    %4621 = vmatpush1.bf16.msra.mxu0 %v4142
    %4622 = vmatprep.subr.bf16.mxu0 %v4150
    %4623 = vmatpush1.bf16.msra.mxu0 %v4149
    %4624 = vmatprep.subr.bf16.mxu0 %v4157
    %4625 = vmatpush1.bf16.msra.mxu0 %v4156
    %4626 = vmatprep.subr.bf16.mxu0 %v4164
    %4627 = vmatpush1.bf16.msra.mxu0 %v4163
    %4628 = vmatprep.subr.bf16.mxu0 %v4171
    %4629 = vmatpush1.bf16.msra.mxu0 %v4170
    %4630 = vmatprep.subr.bf16.mxu0 %v4178
    %4631 = vmatpush1.bf16.msra.mxu0 %v4177
    %4632 = vmatprep.mubr.bf16.mxu0 %v3070
    %4633 = vmatmul.mubr.bf16.gmra.mrb[0].mxu0 %v3069
    %v4634 = vpop.f32.mrb[0].mxu0
    %v4635 = vadd.f32 %v3342, %v4634
    %v4636 = vpop.f32.mrb[0].mxu0
    %v4637 = vadd.f32 %v3346, %v4636
    %v4638 = vpop.f32.mrb[0].mxu0
    %v4639 = vpop.f32.mrb[0].mxu0
    %4640 = vdwg.mxu0
    %4641 = vmatprep.subr.bf16.mxu0 %v4185
    %4642 = vmatpush1.bf16.msra.mxu0 %v4184
    %4643 = vmatprep.subr.bf16.mxu0 %v4192
    %4644 = vmatpush1.bf16.msra.mxu0 %v4191
    %4645 = vmatprep.subr.bf16.mxu0 %v4199
    %4646 = vmatpush1.bf16.msra.mxu0 %v4198
    %4647 = vmatprep.subr.bf16.mxu0 %v4206
    %4648 = vmatpush1.bf16.msra.mxu0 %v4205
    %4649 = vmatprep.subr.bf16.mxu0 %v4213
    %4650 = vmatpush1.bf16.msra.mxu0 %v4212
    %4651 = vmatprep.subr.bf16.mxu0 %v4220
    %4652 = vmatpush1.bf16.msra.mxu0 %v4219
    %4653 = vmatprep.subr.bf16.mxu0 %v4227
    %4654 = vmatpush1.bf16.msra.mxu0 %v4226
    %4655 = vmatprep.subr.bf16.mxu0 %v4234
    %4656 = vmatpush1.bf16.msra.mxu0 %v4233
    %4657 = vmatprep.subr.bf16.mxu0 %v4241
    %4658 = vmatpush1.bf16.msra.mxu0 %v4240
    %4659 = vmatprep.subr.bf16.mxu0 %v4248
    %4660 = vmatpush1.bf16.msra.mxu0 %v4247
    %4661 = vmatprep.subr.bf16.mxu0 %v4255
    %4662 = vmatpush1.bf16.msra.mxu0 %v4254
    %4663 = vmatprep.subr.bf16.mxu0 %v4262
    %4664 = vmatpush1.bf16.msra.mxu0 %v4261
    %4665 = vmatprep.subr.bf16.mxu0 %v4269
    %4666 = vmatpush1.bf16.msra.mxu0 %v4268
    %4667 = vmatprep.subr.bf16.mxu0 %v4276
    %4668 = vmatpush1.bf16.msra.mxu0 %v4275
    %4669 = vmatprep.subr.bf16.mxu0 %v4283
    %4670 = vmatpush1.bf16.msra.mxu0 %v4282
    %4671 = vmatprep.subr.bf16.mxu0 %v4290
    %4672 = vmatpush1.bf16.msra.mxu0 %v4289
    %4673 = vmatprep.mubr.bf16.mxu0 %v3072
    %4674 = vmatmul.mubr.bf16.gmra.mrb[0].mxu0 %v3071
    %v4675 = vpop.f32.mrb[0].mxu0
    %v4676 = vadd.f32 %v4635, %v4675
    %v4677 = vpop.f32.mrb[0].mxu0
    %v4678 = vadd.f32 %v4637, %v4677
    %v4679 = vpop.f32.mrb[0].mxu0
    %v4680 = vpop.f32.mrb[0].mxu0
    %4681 = vdwg.mxu0
    %4682 = vmatprep.subr.bf16.mxu0 %v4075
    %4683 = vmatpush1.bf16.msra.mxu0 %v4074
    %4684 = vmatprep.subr.bf16.mxu0 %v4082
    %4685 = vmatpush1.bf16.msra.mxu0 %v4081
    %4686 = vmatprep.subr.bf16.mxu0 %v4089
    %4687 = vmatpush1.bf16.msra.mxu0 %v4088
    %4688 = vmatprep.subr.bf16.mxu0 %v4096
    %4689 = vmatpush1.bf16.msra.mxu0 %v4095
    %4690 = vmatprep.subr.bf16.mxu0 %v4103
    %4691 = vmatpush1.bf16.msra.mxu0 %v4102
    %4692 = vmatprep.subr.bf16.mxu0 %v4110
    %4693 = vmatpush1.bf16.msra.mxu0 %v4109
    %4694 = vmatprep.subr.bf16.mxu0 %v4117
    %4695 = vmatpush1.bf16.msra.mxu0 %v4116
    %4696 = vmatprep.subr.bf16.mxu0 %v4124
    %4697 = vmatpush1.bf16.msra.mxu0 %v4123
    %4698 = vmatprep.subr.bf16.mxu0 %v4131
    %4699 = vmatpush1.bf16.msra.mxu0 %v4130
    %4700 = vmatprep.subr.bf16.mxu0 %v4138
    %4701 = vmatpush1.bf16.msra.mxu0 %v4137
    %4702 = vmatprep.subr.bf16.mxu0 %v4145
    %4703 = vmatpush1.bf16.msra.mxu0 %v4144
    %4704 = vmatprep.subr.bf16.mxu0 %v4152
    %4705 = vmatpush1.bf16.msra.mxu0 %v4151
    %4706 = vmatprep.subr.bf16.mxu0 %v4159
    %4707 = vmatpush1.bf16.msra.mxu0 %v4158
    %4708 = vmatprep.subr.bf16.mxu0 %v4166
    %4709 = vmatpush1.bf16.msra.mxu0 %v4165
    %4710 = vmatprep.subr.bf16.mxu0 %v4173
    %4711 = vmatpush1.bf16.msra.mxu0 %v4172
    %4712 = vmatprep.subr.bf16.mxu0 %v4180
    %4713 = vmatpush1.bf16.msra.mxu0 %v4179
    %4714 = vmatprep.mubr.bf16.mxu0 %v3070
    %4715 = vmatmul.mubr.bf16.gmra.mrb[0].mxu0 %v3069
    %v4716 = vpop.f32.mrb[0].mxu0
    %v4717 = vadd.f32 %v3350, %v4716
    %v4718 = vpop.f32.mrb[0].mxu0
    %v4719 = vadd.f32 %v3354, %v4718
    %v4720 = vpop.f32.mrb[0].mxu0
    %v4721 = vpop.f32.mrb[0].mxu0
    %4722 = vdwg.mxu0
    %4723 = vmatprep.subr.bf16.mxu0 %v4187
    %4724 = vmatpush1.bf16.msra.mxu0 %v4186
    %4725 = vmatprep.subr.bf16.mxu0 %v4194
    %4726 = vmatpush1.bf16.msra.mxu0 %v4193
    %4727 = vmatprep.subr.bf16.mxu0 %v4201
    %4728 = vmatpush1.bf16.msra.mxu0 %v4200
    %4729 = vmatprep.subr.bf16.mxu0 %v4208
    %4730 = vmatpush1.bf16.msra.mxu0 %v4207
    %4731 = vmatprep.subr.bf16.mxu0 %v4215
    %4732 = vmatpush1.bf16.msra.mxu0 %v4214
    %4733 = vmatprep.subr.bf16.mxu0 %v4222
    %4734 = vmatpush1.bf16.msra.mxu0 %v4221
    %4735 = vmatprep.subr.bf16.mxu0 %v4229
    %4736 = vmatpush1.bf16.msra.mxu0 %v4228
    %4737 = vmatprep.subr.bf16.mxu0 %v4236
    %4738 = vmatpush1.bf16.msra.mxu0 %v4235
    %4739 = vmatprep.subr.bf16.mxu0 %v4243
    %4740 = vmatpush1.bf16.msra.mxu0 %v4242
    %4741 = vmatprep.subr.bf16.mxu0 %v4250
    %4742 = vmatpush1.bf16.msra.mxu0 %v4249
    %4743 = vmatprep.subr.bf16.mxu0 %v4257
    %4744 = vmatpush1.bf16.msra.mxu0 %v4256
    %4745 = vmatprep.subr.bf16.mxu0 %v4264
    %4746 = vmatpush1.bf16.msra.mxu0 %v4263
    %4747 = vmatprep.subr.bf16.mxu0 %v4271
    %4748 = vmatpush1.bf16.msra.mxu0 %v4270
    %4749 = vmatprep.subr.bf16.mxu0 %v4278
    %4750 = vmatpush1.bf16.msra.mxu0 %v4277
    %4751 = vmatprep.subr.bf16.mxu0 %v4285
    %4752 = vmatpush1.bf16.msra.mxu0 %v4284
    %4753 = vmatprep.subr.bf16.mxu0 %v4292
    %4754 = vmatpush1.bf16.msra.mxu0 %v4291
    %4755 = vmatprep.mubr.bf16.mxu0 %v3072
    %4756 = vmatmul.mubr.bf16.gmra.mrb[0].mxu0 %v3071
    %v4757 = vpop.f32.mrb[0].mxu0
    %v4758 = vadd.f32 %v4717, %v4757
    %v4759 = vpop.f32.mrb[0].mxu0
    %v4760 = vadd.f32 %v4719, %v4759
    %v4761 = vpop.f32.mrb[0].mxu0
    %v4762 = vpop.f32.mrb[0].mxu0
    %4763 = vdwg.mxu0
    %4764 = vmatprep.subr.bf16.mxu0 0
    %4765 = vmatpush1.bf16.msra.mxu0 %v4076
    %4766 = vmatprep.subr.bf16.mxu0 0
    %4767 = vmatpush1.bf16.msra.mxu0 %v4083
    %4768 = vmatprep.subr.bf16.mxu0 0
    %4769 = vmatpush1.bf16.msra.mxu0 %v4090
    %4770 = vmatprep.subr.bf16.mxu0 0
    %4771 = vmatpush1.bf16.msra.mxu0 %v4097
    %4772 = vmatprep.subr.bf16.mxu0 0
    %4773 = vmatpush1.bf16.msra.mxu0 %v4104
    %4774 = vmatprep.subr.bf16.mxu0 0
    %4775 = vmatpush1.bf16.msra.mxu0 %v4111
    %4776 = vmatprep.subr.bf16.mxu0 0
    %4777 = vmatpush1.bf16.msra.mxu0 %v4118
    %4778 = vmatprep.subr.bf16.mxu0 0
    %4779 = vmatpush1.bf16.msra.mxu0 %v4125
    %4780 = vmatprep.subr.bf16.mxu0 0
    %4781 = vmatpush1.bf16.msra.mxu0 %v4132
    %4782 = vmatprep.subr.bf16.mxu0 0
    %4783 = vmatpush1.bf16.msra.mxu0 %v4139
    %4784 = vmatprep.subr.bf16.mxu0 0
    %4785 = vmatpush1.bf16.msra.mxu0 %v4146
    %4786 = vmatprep.subr.bf16.mxu0 0
    %4787 = vmatpush1.bf16.msra.mxu0 %v4153
    %4788 = vmatprep.subr.bf16.mxu0 0
    %4789 = vmatpush1.bf16.msra.mxu0 %v4160
    %4790 = vmatprep.subr.bf16.mxu0 0
    %4791 = vmatpush1.bf16.msra.mxu0 %v4167
    %4792 = vmatprep.subr.bf16.mxu0 0
    %4793 = vmatpush1.bf16.msra.mxu0 %v4174
    %4794 = vmatprep.subr.bf16.mxu0 0
    %4795 = vmatpush1.bf16.msra.mxu0 %v4181
    %4796 = vmatprep.mubr.bf16.mxu0 %v3070
    %4797 = vmatmul.mubr.bf16.gmra.mrb[0].mxu0 %v3069
    %v4798 = vpop.f32.mrb[0].mxu0
    %v4799 = vadd.f32 %v3358, %v4798
    %v4800 = vpop.f32.mrb[0].mxu0
    %v4801 = vpop.f32.mrb[0].mxu0
    %v4802 = vpop.f32.mrb[0].mxu0
    %4803 = vdwg.mxu0
    %4804 = vmatprep.subr.bf16.mxu0 0
    %4805 = vmatpush1.bf16.msra.mxu0 %v4188
    %4806 = vmatprep.subr.bf16.mxu0 0
    %4807 = vmatpush1.bf16.msra.mxu0 %v4195
    %4808 = vmatprep.subr.bf16.mxu0 0
    %4809 = vmatpush1.bf16.msra.mxu0 %v4202
    %4810 = vmatprep.subr.bf16.mxu0 0
    %4811 = vmatpush1.bf16.msra.mxu0 %v4209
    %4812 = vmatprep.subr.bf16.mxu0 0
    %4813 = vmatpush1.bf16.msra.mxu0 %v4216
    %4814 = vmatprep.subr.bf16.mxu0 0
    %4815 = vmatpush1.bf16.msra.mxu0 %v4223
    %4816 = vmatprep.subr.bf16.mxu0 0
    %4817 = vmatpush1.bf16.msra.mxu0 %v4230
    %4818 = vmatprep.subr.bf16.mxu0 0
    %4819 = vmatpush1.bf16.msra.mxu0 %v4237
    %4820 = vmatprep.subr.bf16.mxu0 0
    %4821 = vmatpush1.bf16.msra.mxu0 %v4244
    %4822 = vmatprep.subr.bf16.mxu0 0
    %4823 = vmatpush1.bf16.msra.mxu0 %v4251
    %4824 = vmatprep.subr.bf16.mxu0 0
    %4825 = vmatpush1.bf16.msra.mxu0 %v4258
    %4826 = vmatprep.subr.bf16.mxu0 0
    %4827 = vmatpush1.bf16.msra.mxu0 %v4265
    %4828 = vmatprep.subr.bf16.mxu0 0
    %4829 = vmatpush1.bf16.msra.mxu0 %v4272
    %4830 = vmatprep.subr.bf16.mxu0 0
    %4831 = vmatpush1.bf16.msra.mxu0 %v4279
    %4832 = vmatprep.subr.bf16.mxu0 0
    %4833 = vmatpush1.bf16.msra.mxu0 %v4286
    %4834 = vmatprep.subr.bf16.mxu0 0
    %4835 = vmatpush1.bf16.msra.mxu0 %v4293
    %4836 = vmatprep.mubr.bf16.mxu0 %v3072
    %4837 = vmatmul.mubr.bf16.gmra.mrb[0].mxu0 %v3071
    %v4838 = vpop.f32.mrb[0].mxu0
    %v4839 = vadd.f32 %v4799, %v4838
    %v4840 = vpop.f32.mrb[0].mxu0
    %v4841 = vpop.f32.mrb[0].mxu0
    %v4842 = vpop.f32.mrb[0].mxu0
    %4843 = vdwg.mxu0
    %4844 = vst [vmem:[#allocation4] sm:$0xff] %v4594
    %4845 = vst [vmem:[#allocation4 + $0x8] sm:$0xff] %v4596
    %4846 = vst [vmem:[#allocation4 + $0x10] sm:$0xff] %v4676
    %4847 = vst [vmem:[#allocation4 + $0x18] sm:$0xff] %v4678
    %4848 = vst [vmem:[#allocation4 + $0x20] sm:$0xff] %v4758
    %4849 = vst [vmem:[#allocation4 + $0x28] sm:$0xff] %v4760
    %4850 = vst [vmem:[#allocation4 + $0x30] sm:$0xff] %v4839
    // Predicated region
    $region54: #{ae_forward.1} parent=1 // pred_check
      _
    $region55: #{ae_forward.1} parent=1 // pred_check_branch
      %4852 = sbr.rel (0) target = $region57
    $region56: #{ae_forward.1} parent=1 // pred_region
      %s4854 = ssub.s32 128, 128
      %4855 = vsyncadd [#allocation3], %s4854
      %s4857 = sshll.u32 [#allocation2], 4
      %s4858 = int_to_ptr.vmem [resolvable:$true] %s4857
      %4860 = dma.vmem_to_hbm [thread:$0]  %s4858, 128, %s13, [#allocation3]
    $region57: #{ae_forward.1} parent=1 // pred_fallthru
      _
    // Predicated region
    $region58: #{ae_forward.1} parent=1 // pred_check
      _
    $region59: #{ae_forward.1} parent=1 // pred_check_branch
      %4862 = sbr.rel (0) target = $region61
    $region60: #{ae_forward.1} parent=1 // pred_region
      %s4864 = ssub.s32 896, 896
      %4865 = vsyncadd [#allocation5], %s4864
      %s4867 = sshll.u32 [#allocation4], 4
      %s4868 = int_to_ptr.vmem [resolvable:$true] %s4867
      %4870 = dma.vmem_to_hbm [thread:$0]  %s4868, 896, %s14, [#allocation5]
    $region61: #{ae_forward.1} parent=1 // pred_fallthru
      _
    // Predicated region
    $region62: #{ae_forward.1} parent=1 // pred_check
      _
    $region63: #{ae_forward.1} parent=1 // pred_check_branch
      %4872 = sbr.rel (0) target = $region65
    $region64: #{ae_forward.1} parent=1 // pred_region
      %4873 = dma.done [#allocation3], 128
    $region65: #{ae_forward.1} parent=1 // pred_fallthru
      _
    // Predicated region
    $region66: #{ae_forward.1} parent=1 // pred_check
      _
    $region67: #{ae_forward.1} parent=1 // pred_check_branch
      %4875 = sbr.rel (0) target = $region69
    $region68: #{ae_forward.1} parent=1 // pred_region
      %4876 = dma.done [#allocation5], 896
    $region69: #{ae_forward.1} parent=1 // pred_fallthru
      _
    %4877 = vsyncpa [#allocation3], 1
    %4878 = vsyncpa [#allocation5], 1

</llo_original>
